<compile_context>
chip_gen: v7x
topology: tpu7x:2x2x1
jax: 0.10.0
libtpu: 0.0.40
codegen_flags: <defaults>
</compile_context>

<pallas_src>
import functools

import jax
import jax.numpy as jnp
from jax.experimental import pallas as pl
from jax.experimental.pallas import tpu as pltpu


# ----------------------------- kernel ---------------------------------------


def gat_flash_kernel(fq_ref, fkt_ref, h_ref, o_ref, m_ref, l_ref, acc_ref,
                     *, alpha, n_heads, n_hid):
    """One grid step: all heads, one query block x one key block.

    fq_ref:  (Bq, H)     query-side scores  h_i . a_q   (f32, precomputed)
    fkt_ref: (H, Bk)     key-side scores    h_j . a_k   (f32, pre-transposed)
    h_ref:   (Bk, H*D)   projected keys/values, bf16 (pre-cast once)
    o_ref:   (Bq, H*D)   concatenated per-head outputs (written at last k)
    m_ref:   (Bq, H)     running row max      (f32 scratch)
    l_ref:   (Bq, H)     running softmax denom (f32 scratch)
    acc_ref: (Bq, H*D)   running weighted sum  (f32 scratch)
    """
    D = n_hid
    k_idx = pl.program_id(1)
    n_k = pl.num_programs(1)

    @pl.when(k_idx == 0)
    def _init():
        m_ref[...] = jnp.full(m_ref.shape, -jnp.inf, m_ref.dtype)
        l_ref[...] = jnp.zeros(l_ref.shape, l_ref.dtype)
        acc_ref[...] = jnp.zeros(acc_ref.shape, acc_ref.dtype)

    hk = h_ref[...]          # (Bk, H*D) bf16 — cast done once in the wrapper
    fq = fq_ref[...]         # (Bq, H)   f32
    fkt = fkt_ref[...]       # (H, Bk)   f32

    for hd in range(n_heads):                         # static, fully unrolled
        # e[i, j] = leaky_relu(h_i.a_q + h_j.a_k)  — pure broadcast add,
        # no in-kernel transpose (key scores arrive pre-transposed).
        e = fq[:, hd:hd + 1] + fkt[hd:hd + 1, :]      # (Bq, Bk)
        e = jnp.where(e > 0, e, alpha * e)

        # Online softmax statistics (f32).
        m_prev = m_ref[:, hd:hd + 1]                  # (Bq, 1)
        m_new = jnp.maximum(m_prev, jnp.max(e, axis=1, keepdims=True))
        corr = jnp.exp(m_prev - m_new)                # (Bq, 1)
        p = jnp.exp(e - m_new)                        # (Bq, Bk) f32

        l_ref[:, hd:hd + 1] = (corr * l_ref[:, hd:hd + 1]
                               + jnp.sum(p, axis=1, keepdims=True))

        # Weighted value accumulation on the MXU (bf16 operands, f32 acc).
        pv = jnp.dot(p.astype(jnp.bfloat16), hk[:, hd * D:(hd + 1) * D],
                     preferred_element_type=jnp.float32)          # (Bq, D)
        acc_ref[:, hd * D:(hd + 1) * D] = (
            corr * acc_ref[:, hd * D:(hd + 1) * D] + pv)
        m_ref[:, hd:hd + 1] = m_new

    @pl.when(k_idx == n_k - 1)
    def _finalize():
        outs = []
        for hd in range(n_heads):
            inv_l = pl.reciprocal(l_ref[:, hd:hd + 1], approx=True)  # EUP
            hp = acc_ref[:, hd * D:(hd + 1) * D] * inv_l             # (Bq, D)
            # ELU with inf-safe negative branch: exp(min(hp, 0)) - 1.
            outs.append(jnp.where(hp > 0, hp,
                                  jnp.exp(jnp.minimum(hp, 0.0)) - 1.0))
        # Single lane-dense store of all concatenated heads.
        o_ref[...] = jnp.concatenate(outs, axis=1).astype(o_ref.dtype)


# --------------------------- tiling helpers ----------------------------------


def _tpu_vmem_capacity():
    try:
        info = pltpu.get_tpu_info()
        for attr in ("vmem_capacity_bytes", "vmem_size_bytes", "vmem_bytes"):
            v = getattr(info, attr, None)
            if v:
                return int(v)
    except Exception:
        pass
    return 128 * 1024 * 1024


def _pad2d(shape, itemsize):
    """Bytes of a VMEM-resident array with (8,128) tile padding."""
    *lead, r, c = shape
    r = -(-r // 8) * 8
    c = -(-c // 128) * 128
    n = r * c * itemsize
    for s in lead:
        n *= s
    return n


def _footprint(block_q, block_k, N, H, D):
    """Estimated VMEM footprint of one grid step (double-buffered IO + temps)."""
    HD = H * D
    io = 2 * (_pad2d((block_q, H), 4)        # fq        (f32)
              + _pad2d((H, block_k), 4)      # fk^T      (f32)
              + _pad2d((block_k, HD), 2)     # h keys    (bf16)
              + _pad2d((block_q, HD), 4))    # out       (f32)
    scratch = 2 * _pad2d((block_q, H), 4) + _pad2d((block_q, HD), 4)  # m, l, acc
    temps = 3 * _pad2d((block_q, block_k), 4) + _pad2d((block_q, block_k), 2)
    return int(1.4 * (io + scratch + temps))   # headroom for compiler temps


def _choose_blocks(N, H, D, budget):
    """Pick (block_q, block_k): large query tiles, keys resident if they fit."""
    q_cands = [c for c in (1024, 512, 256, 128, 64, 32, 16, 8)
               if c <= N and N % c == 0] or [N]
    # Key blocks sit on the lane axis of fk^T -> must be 128-aligned or full N.
    k_cands = [N] + [c for c in (2048, 1024, 512, 256, 128)
                     if c < N and N % c == 0]
    for bq in q_cands:               # prefer big query tiles (amortize per-step cost)
        for bk in k_cands:           # prefer fully-resident keys, then stream
            if _footprint(bq, bk, N, H, D) <= budget:
                return bq, bk
    return q_cands[-1], k_cands[-1]


# ------------------------------ wrapper --------------------------------------


def gat_forward(x, W, a, *, alpha, block_q=None, block_k=None):
    """x: [N, F] f32, W: [H, F, D], a: [H, 2D] -> [N, H*D] (heads concatenated)."""
    N, F = x.shape
    H, _, D = W.shape
    HD = H * D
    hi = jax.lax.Precision.HIGHEST

    # --- grid-invariant precompute, hoisted out of the kernel ----------------
    w_all = jnp.transpose(W, (1, 0, 2)).reshape(F, HD)                  # [F, H*D]
    h_all = jnp.dot(x, w_all, precision=hi)                             # [N, H*D] f32
    h3 = h_all.reshape(N, H, D)
    fq = jnp.einsum('nhd,hd->nh', h3, a[:, :D], precision=hi)           # [N, H]
    fkT = jnp.einsum('nhd,hd->hn', h3, a[:, D:], precision=hi)          # [H, N]
    h_bf16 = h_all.astype(jnp.bfloat16)                                 # cast once

    # --- generation-aware tile / VMEM selection ------------------------------
    cap = _tpu_vmem_capacity()
    budget = 52 * 2**20 if cap <= 64 * 2**20 else 100 * 2**20
    budget = min(budget, max(cap - 8 * 2**20, 16 * 2**20))
    if block_q is None or block_k is None:
        bq, bk = _choose_blocks(N, H, D, budget)
        block_q = bq if block_q is None else block_q
        block_k = bk if block_k is None else block_k
    assert N % block_q == 0 and N % block_k == 0, "blocks must divide N"
    assert block_q == N or block_q % 8 == 0, "query block must be sublane-aligned"
    assert block_k == N or block_k % 128 == 0, "key block must be lane-aligned"

    fp = _footprint(block_q, block_k, N, H, D)
    limit = min(max(fp, 32 * 2**20), budget)
    limit = max(limit, fp)                       # never request below the footprint
    limit = int(min(limit, cap - 4 * 2**20))     # never exceed physical

    kernel = functools.partial(gat_flash_kernel, alpha=alpha,
                               n_heads=H, n_hid=D)
    return pl.pallas_call(
        kernel,
        out_shape=jax.ShapeDtypeStruct((N, HD), jnp.float32),
        grid=(N // block_q, N // block_k),
        in_specs=[
            pl.BlockSpec((block_q, H), lambda i, k: (i, 0)),     # query scores
            pl.BlockSpec((H, block_k), lambda i, k: (0, k)),     # key scores (T)
            pl.BlockSpec((block_k, HD), lambda i, k: (k, 0)),    # keys/values bf16
        ],
        out_specs=pl.BlockSpec((block_q, HD), lambda i, k: (i, 0)),
        scratch_shapes=[
            pltpu.VMEM((block_q, H), jnp.float32),    # running max m
            pltpu.VMEM((block_q, H), jnp.float32),    # running denom l
            pltpu.VMEM((block_q, HD), jnp.float32),   # running acc
        ],
        compiler_params=pltpu.CompilerParams(
            dimension_semantics=("parallel", "arbitrary"),
            vmem_limit_bytes=limit),
    )(fq, fkT, h_bf16)


# ----------------------------- reference -------------------------------------


def gat_reference(x, W, a, *, alpha):
    """Pure-JAX f32 reference matching the PyTorch forward (eval mode)."""
    hi = jax.lax.Precision.HIGHEST
    heads = []
    H, _, D = W.shape
    for hh in range(H):
        h = jnp.dot(x, W[hh], precision=hi)
        f1 = jnp.dot(h, a[hh, :D], precision=hi)
        f2 = jnp.dot(h, a[hh, D:], precision=hi)
        e = f1[:, None] + f2[None, :]
        e = jnp.where(e > 0, e, alpha * e)
        att = jax.nn.softmax(e, axis=1)
        hp = jnp.dot(att, h, precision=hi)
        heads.append(jnp.where(hp > 0, hp, jnp.exp(jnp.minimum(hp, 0.0)) - 1.0))
    return jnp.concatenate(heads, axis=1)


def xavier_uniform(key, shape, gain, dtype=jnp.float32):
    fan_in, fan_out = shape[-2], shape[-1]
    bound = gain * jnp.sqrt(6.0 / (fan_in + fan_out))
    return jax.random.uniform(key, shape, dtype, minval=-bound, maxval=bound)


if __name__ == "__main__":
    # Small deterministic config: N nodes (regions), n_feat, n_hid, n_heads.
    N, n_feat, n_hid, n_heads = 256, 8, 32, 2
    alpha = 0.2            # leaky-relu slope; dropout is identity at inference

    key = jax.random.PRNGKey(0)
    kx, kw, ka = jax.random.split(key, 3)

    x = jax.random.normal(kx, (N, n_feat), dtype=jnp.float32)
    W = jnp.stack([xavier_uniform(k, (n_feat, n_hid), gain=1.414)
                   for k in jax.random.split(kw, n_heads)])           # [H, F, D]
    a = jnp.stack([xavier_uniform(k, (2 * n_hid, 1), gain=1.414)[:, 0]
                   for k in jax.random.split(ka, n_heads)])           # [H, 2D]

    ref = gat_reference(x, W, a, alpha=alpha)

    # 1) auto tiling: keys fully resident (single key step).
    out_auto = jax.block_until_ready(gat_forward(x, W, a, alpha=alpha))
    # 2) forced key streaming: exercises the online-softmax accumulator path.
    out_stream = jax.block_until_ready(
        gat_forward(x, W, a, alpha=alpha, block_q=128, block_k=128))

    for out in (out_auto, out_stream):
        assert out.shape == (N, n_heads * n_hid)
        # Error budget: bf16 MXU operands in att @ h (f32 accumulation) and the
        # approx EUP reciprocal; projection and scores are full f32.
        assert jnp.allclose(out, ref, atol=3e-2, rtol=3e-2), "mismatch vs reference"

    print("KERNEL_OK")
</pallas_src>

<mosaic_0001>
module attributes {stable_mosaic.version = 11 : i64} {
  func.func @gat_flash_kernel(%arg0: i32, %arg1: i32, %arg2: memref<256x2xf32, #tpu.memory_space<vmem>>, %arg3: memref<2x256xf32, #tpu.memory_space<vmem>>, %arg4: memref<256x64xbf16, #tpu.memory_space<vmem>>, %arg5: memref<256x64xf32, #tpu.memory_space<vmem>>, %arg6: memref<256x2xf32, #tpu.memory_space<vmem>>, %arg7: memref<256x2xf32, #tpu.memory_space<vmem>>, %arg8: memref<256x64xf32, #tpu.memory_space<vmem>>) attributes {dimension_semantics = [#tpu.dimension_semantics<parallel>, #tpu.dimension_semantics<arbitrary>], iteration_bounds = array<i64: 1, 1>, scalar_prefetch = 0 : i64, scratch_operands = 3 : i64, tpu.core_type = #tpu.core_type<tc>, window_params = [{transform_indices = @transform_0, window_bounds = array<i64: 256, 2>}, {transform_indices = @transform_1, window_bounds = array<i64: 2, 256>}, {transform_indices = @transform_2, window_bounds = array<i64: 256, 64>}, {transform_indices = @transform_3, window_bounds = array<i64: 256, 64>}]} {
    %c0_i32 = arith.constant 0 : i32
    %0 = arith.cmpi eq, %arg1, %c0_i32 : i32
    %1 = arith.extui %0 : i1 to i32
    %c0_i32_0 = arith.constant 0 : i32
    %2 = arith.cmpi ne, %1, %c0_i32_0 : i32
    scf.if %2 {
      %cst_39 = arith.constant 0xFF800000 : f32
      %77 = vector.broadcast %cst_39 : f32 to vector<256x2xf32>
      %c0_40 = arith.constant 0 : index
      %c0_41 = arith.constant 0 : index
      %78 = vector.load %arg6[%c0_40, %c0_41] : memref<256x2xf32, #tpu.memory_space<vmem>>, vector<256x2xf32>
      tpu.vector_store %arg6[%c0_40, %c0_41], %77 {strides = array<i32>} : memref<256x2xf32, #tpu.memory_space<vmem>>, vector<256x2xf32>,
      %cst_42 = arith.constant 0.000000e+00 : f32
      %79 = vector.broadcast %cst_42 : f32 to vector<256x2xf32>
      %c0_43 = arith.constant 0 : index
      %c0_44 = arith.constant 0 : index
      %80 = vector.load %arg7[%c0_43, %c0_44] : memref<256x2xf32, #tpu.memory_space<vmem>>, vector<256x2xf32>
      tpu.vector_store %arg7[%c0_43, %c0_44], %79 {strides = array<i32>} : memref<256x2xf32, #tpu.memory_space<vmem>>, vector<256x2xf32>,
      %cst_45 = arith.constant 0.000000e+00 : f32
      %81 = vector.broadcast %cst_45 : f32 to vector<256x64xf32>
      %c0_46 = arith.constant 0 : index
      %c0_47 = arith.constant 0 : index
      %82 = vector.load %arg8[%c0_46, %c0_47] : memref<256x64xf32, #tpu.memory_space<vmem>>, vector<256x64xf32>
      tpu.vector_store %arg8[%c0_46, %c0_47], %81 {strides = array<i32>} : memref<256x64xf32, #tpu.memory_space<vmem>>, vector<256x64xf32>,
    } else {
    }
    %c0 = arith.constant 0 : index
    %c0_1 = arith.constant 0 : index
    %3 = vector.load %arg4[%c0, %c0_1] : memref<256x64xbf16, #tpu.memory_space<vmem>>, vector<256x64xbf16>
    %c0_2 = arith.constant 0 : index
    %c0_3 = arith.constant 0 : index
    %4 = vector.load %arg2[%c0_2, %c0_3] : memref<256x2xf32, #tpu.memory_space<vmem>>, vector<256x2xf32>
    %c0_4 = arith.constant 0 : index
    %c0_5 = arith.constant 0 : index
    %5 = vector.load %arg3[%c0_4, %c0_5] : memref<2x256xf32, #tpu.memory_space<vmem>>, vector<2x256xf32>
    %6 = vector.extract_strided_slice %4 {offsets = [0, 0], sizes = [256, 1], strides = [1, 1]} : vector<256x2xf32> to vector<256x1xf32>
    %7 = vector.extract_strided_slice %5 {offsets = [0, 0], sizes = [1, 256], strides = [1, 1]} : vector<2x256xf32> to vector<1x256xf32>
    %8 = vector.broadcast %6 : vector<256x1xf32> to vector<256x256xf32>
    %9 = vector.broadcast %7 : vector<1x256xf32> to vector<256x256xf32>
    %10 = arith.addf %8, %9 : vector<256x256xf32>
    %cst = arith.constant 0.000000e+00 : f32
    %11 = vector.broadcast %cst : f32 to vector<256x256xf32>
    %12 = arith.cmpf ogt, %10, %11 : vector<256x256xf32>
    %cst_6 = arith.constant 2.000000e-01 : f32
    %13 = vector.broadcast %cst_6 : f32 to vector<256x256xf32>
    %14 = arith.mulf %13, %10 : vector<256x256xf32>
    %15 = arith.select %12, %10, %14 : vector<256x256xi1>, vector<256x256xf32>
    %c0_7 = arith.constant 0 : index
    %c0_8 = arith.constant 0 : index
    %16 = vector.load %arg6[%c0_7, %c0_8] : memref<256x2xf32, #tpu.memory_space<vmem>>, vector<256x1xf32>
    %cst_9 = arith.constant dense<0xFF800000> : vector<256xf32>
    %17 = vector.multi_reduction <maximumf>, %15, %cst_9 [1] : vector<256x256xf32> to vector<256xf32>
    %18 = vector.shape_cast %17 : vector<256xf32> to vector<256x1xf32>
    %19 = arith.maximumf %16, %18 : vector<256x1xf32>
    %20 = arith.subf %16, %19 : vector<256x1xf32>
    %21 = math.exp %20 : vector<256x1xf32>
    %22 = vector.broadcast %19 : vector<256x1xf32> to vector<256x256xf32>
    %23 = arith.subf %15, %22 : vector<256x256xf32>
    %24 = math.exp %23 : vector<256x256xf32>
    %c0_10 = arith.constant 0 : index
    %c0_11 = arith.constant 0 : index
    %25 = vector.load %arg7[%c0_10, %c0_11] : memref<256x2xf32, #tpu.memory_space<vmem>>, vector<256x1xf32>
    %26 = arith.mulf %21, %25 : vector<256x1xf32>
    %cst_12 = arith.constant dense<0.000000e+00> : vector<256xf32>
    %27 = vector.multi_reduction <add>, %24, %cst_12 [1] : vector<256x256xf32> to vector<256xf32>
    %28 = vector.shape_cast %27 : vector<256xf32> to vector<256x1xf32>
    %29 = arith.addf %26, %28 : vector<256x1xf32>
    %c0_13 = arith.constant 0 : index
    %c0_14 = arith.constant 0 : index
    %30 = vector.load %arg7[%c0_13, %c0_14] : memref<256x2xf32, #tpu.memory_space<vmem>>, vector<256x1xf32>
    tpu.vector_store %arg7[%c0_13, %c0_14], %29 {strides = array<i32>} : memref<256x2xf32, #tpu.memory_space<vmem>>, vector<256x1xf32>,
    %31 = arith.truncf %24 : vector<256x256xf32> to vector<256x256xbf16>
    %32 = vector.extract_strided_slice %3 {offsets = [0, 0], sizes = [256, 32], strides = [1, 1]} : vector<256x64xbf16> to vector<256x32xbf16>
    %cst_15 = arith.constant dense<0.000000e+00> : vector<256x32xf32>
    %33 = tpu.matmul %31, %32, %cst_15 {dimension_numbers = #tpu.dot_dimension_numbers<[1], [0], [0], [1], [0, 0, 1, 1], [], []>} : vector<256x256xbf16>, vector<256x32xbf16>, vector<256x32xf32> -> vector<256x32xf32>
    %c0_16 = arith.constant 0 : index
    %c0_17 = arith.constant 0 : index
    %34 = vector.load %arg8[%c0_16, %c0_17] : memref<256x64xf32, #tpu.memory_space<vmem>>, vector<256x32xf32>
    %35 = vector.broadcast %21 : vector<256x1xf32> to vector<256x32xf32>
    %36 = arith.mulf %35, %34 : vector<256x32xf32>
    %37 = arith.addf %36, %33 : vector<256x32xf32>
    %c0_18 = arith.constant 0 : index
    %c0_19 = arith.constant 0 : index
    %38 = vector.load %arg8[%c0_18, %c0_19] : memref<256x64xf32, #tpu.memory_space<vmem>>, vector<256x32xf32>
    tpu.vector_store %arg8[%c0_18, %c0_19], %37 {strides = array<i32>} : memref<256x64xf32, #tpu.memory_space<vmem>>, vector<256x32xf32>,
    %c0_20 = arith.constant 0 : index
    %c0_21 = arith.constant 0 : index
    %39 = vector.load %arg6[%c0_20, %c0_21] : memref<256x2xf32, #tpu.memory_space<vmem>>, vector<256x1xf32>
    tpu.vector_store %arg6[%c0_20, %c0_21], %19 {strides = array<i32>} : memref<256x2xf32, #tpu.memory_space<vmem>>, vector<256x1xf32>,
    %40 = vector.extract_strided_slice %4 {offsets = [0, 1], sizes = [256, 1], strides = [1, 1]} : vector<256x2xf32> to vector<256x1xf32>
    %41 = vector.extract_strided_slice %5 {offsets = [1, 0], sizes = [1, 256], strides = [1, 1]} : vector<2x256xf32> to vector<1x256xf32>
    %42 = vector.broadcast %40 : vector<256x1xf32> to vector<256x256xf32>
    %43 = vector.broadcast %41 : vector<1x256xf32> to vector<256x256xf32>
    %44 = arith.addf %42, %43 : vector<256x256xf32>
    %cst_22 = arith.constant 0.000000e+00 : f32
    %45 = vector.broadcast %cst_22 : f32 to vector<256x256xf32>
    %46 = arith.cmpf ogt, %44, %45 : vector<256x256xf32>
    %cst_23 = arith.constant 2.000000e-01 : f32
    %47 = vector.broadcast %cst_23 : f32 to vector<256x256xf32>
    %48 = arith.mulf %47, %44 : vector<256x256xf32>
    %49 = arith.select %46, %44, %48 : vector<256x256xi1>, vector<256x256xf32>
    %c0_24 = arith.constant 0 : index
    %c1 = arith.constant 1 : index
    %50 = vector.load %arg6[%c0_24, %c1] : memref<256x2xf32, #tpu.memory_space<vmem>>, vector<256x1xf32>
    %cst_25 = arith.constant dense<0xFF800000> : vector<256xf32>
    %51 = vector.multi_reduction <maximumf>, %49, %cst_25 [1] : vector<256x256xf32> to vector<256xf32>
    %52 = vector.shape_cast %51 : vector<256xf32> to vector<256x1xf32>
    %53 = arith.maximumf %50, %52 : vector<256x1xf32>
    %54 = arith.subf %50, %53 : vector<256x1xf32>
    %55 = math.exp %54 : vector<256x1xf32>
    %56 = vector.broadcast %53 : vector<256x1xf32> to vector<256x256xf32>
    %57 = arith.subf %49, %56 : vector<256x256xf32>
    %58 = math.exp %57 : vector<256x256xf32>
    %c0_26 = arith.constant 0 : index
    %c1_27 = arith.constant 1 : index
    %59 = vector.load %arg7[%c0_26, %c1_27] : memref<256x2xf32, #tpu.memory_space<vmem>>, vector<256x1xf32>
    %60 = arith.mulf %55, %59 : vector<256x1xf32>
    %cst_28 = arith.constant dense<0.000000e+00> : vector<256xf32>
    %61 = vector.multi_reduction <add>, %58, %cst_28 [1] : vector<256x256xf32> to vector<256xf32>
    %62 = vector.shape_cast %61 : vector<256xf32> to vector<256x1xf32>
    %63 = arith.addf %60, %62 : vector<256x1xf32>
    %c0_29 = arith.constant 0 : index
    %c1_30 = arith.constant 1 : index
    %64 = vector.load %arg7[%c0_29, %c1_30] : memref<256x2xf32, #tpu.memory_space<vmem>>, vector<256x1xf32>
    tpu.vector_store %arg7[%c0_29, %c1_30], %63 {strides = array<i32>} : memref<256x2xf32, #tpu.memory_space<vmem>>, vector<256x1xf32>,
    %65 = arith.truncf %58 : vector<256x256xf32> to vector<256x256xbf16>
    %66 = vector.extract_strided_slice %3 {offsets = [0, 32], sizes = [256, 32], strides = [1, 1]} : vector<256x64xbf16> to vector<256x32xbf16>
    %cst_31 = arith.constant dense<0.000000e+00> : vector<256x32xf32>
    %67 = tpu.matmul %65, %66, %cst_31 {dimension_numbers = #tpu.dot_dimension_numbers<[1], [0], [0], [1], [0, 0, 1, 1], [], []>} : vector<256x256xbf16>, vector<256x32xbf16>, vector<256x32xf32> -> vector<256x32xf32>
    %c0_32 = arith.constant 0 : index
    %c32 = arith.constant 32 : index
    %68 = vector.load %arg8[%c0_32, %c32] : memref<256x64xf32, #tpu.memory_space<vmem>>, vector<256x32xf32>
    %69 = vector.broadcast %55 : vector<256x1xf32> to vector<256x32xf32>
    %70 = arith.mulf %69, %68 : vector<256x32xf32>
    %71 = arith.addf %70, %67 : vector<256x32xf32>
    %c0_33 = arith.constant 0 : index
    %c32_34 = arith.constant 32 : index
    %72 = vector.load %arg8[%c0_33, %c32_34] : memref<256x64xf32, #tpu.memory_space<vmem>>, vector<256x32xf32>
    tpu.vector_store %arg8[%c0_33, %c32_34], %71 {strides = array<i32>} : memref<256x64xf32, #tpu.memory_space<vmem>>, vector<256x32xf32>,
    %c0_35 = arith.constant 0 : index
    %c1_36 = arith.constant 1 : index
    %73 = vector.load %arg6[%c0_35, %c1_36] : memref<256x2xf32, #tpu.memory_space<vmem>>, vector<256x1xf32>
    tpu.vector_store %arg6[%c0_35, %c1_36], %53 {strides = array<i32>} : memref<256x2xf32, #tpu.memory_space<vmem>>, vector<256x1xf32>,
    %c0_i32_37 = arith.constant 0 : i32
    %74 = arith.cmpi eq, %arg1, %c0_i32_37 : i32
    %75 = arith.extui %74 : i1 to i32
    %c0_i32_38 = arith.constant 0 : i32
    %76 = arith.cmpi ne, %75, %c0_i32_38 : i32
    scf.if %76 {
      %c0_39 = arith.constant 0 : index
      %c0_40 = arith.constant 0 : index
      %77 = vector.load %arg7[%c0_39, %c0_40] : memref<256x2xf32, #tpu.memory_space<vmem>>, vector<256x1xf32>
      %78 = tpu.reciprocal %77 {approx = true} : vector<256x1xf32> -> vector<256x1xf32>
      %c0_41 = arith.constant 0 : index
      %c0_42 = arith.constant 0 : index
      %79 = vector.load %arg8[%c0_41, %c0_42] : memref<256x64xf32, #tpu.memory_space<vmem>>, vector<256x32xf32>
      %80 = vector.broadcast %78 : vector<256x1xf32> to vector<256x32xf32>
      %81 = arith.mulf %79, %80 : vector<256x32xf32>
      %cst_43 = arith.constant 0.000000e+00 : f32
      %82 = vector.broadcast %cst_43 : f32 to vector<256x32xf32>
      %83 = arith.cmpf ogt, %81, %82 : vector<256x32xf32>
      %cst_44 = arith.constant 0.000000e+00 : f32
      %84 = vector.broadcast %cst_44 : f32 to vector<256x32xf32>
      %85 = arith.minimumf %81, %84 : vector<256x32xf32>
      %86 = math.exp %85 : vector<256x32xf32>
      %cst_45 = arith.constant 1.000000e+00 : f32
      %87 = vector.broadcast %cst_45 : f32 to vector<256x32xf32>
      %88 = arith.subf %86, %87 : vector<256x32xf32>
      %89 = arith.select %83, %81, %88 : vector<256x32xi1>, vector<256x32xf32>
      %c0_46 = arith.constant 0 : index
      %c1_47 = arith.constant 1 : index
      %90 = vector.load %arg7[%c0_46, %c1_47] : memref<256x2xf32, #tpu.memory_space<vmem>>, vector<256x1xf32>
      %91 = tpu.reciprocal %90 {approx = true} : vector<256x1xf32> -> vector<256x1xf32>
      %c0_48 = arith.constant 0 : index
      %c32_49 = arith.constant 32 : index
      %92 = vector.load %arg8[%c0_48, %c32_49] : memref<256x64xf32, #tpu.memory_space<vmem>>, vector<256x32xf32>
      %93 = vector.broadcast %91 : vector<256x1xf32> to vector<256x32xf32>
      %94 = arith.mulf %92, %93 : vector<256x32xf32>
      %cst_50 = arith.constant 0.000000e+00 : f32
      %95 = vector.broadcast %cst_50 : f32 to vector<256x32xf32>
      %96 = arith.cmpf ogt, %94, %95 : vector<256x32xf32>
      %cst_51 = arith.constant 0.000000e+00 : f32
      %97 = vector.broadcast %cst_51 : f32 to vector<256x32xf32>
      %98 = arith.minimumf %94, %97 : vector<256x32xf32>
      %99 = math.exp %98 : vector<256x32xf32>
      %cst_52 = arith.constant 1.000000e+00 : f32
      %100 = vector.broadcast %cst_52 : f32 to vector<256x32xf32>
      %101 = arith.subf %99, %100 : vector<256x32xf32>
      %102 = arith.select %96, %94, %101 : vector<256x32xi1>, vector<256x32xf32>
      %103 = tpu.concatenate %89, %102 in 1 : vector<256x32xf32>, vector<256x32xf32> -> vector<256x64xf32>
      %c0_53 = arith.constant 0 : index
      %c0_54 = arith.constant 0 : index
      %104 = vector.load %arg5[%c0_53, %c0_54] : memref<256x64xf32, #tpu.memory_space<vmem>>, vector<256x64xf32>
      tpu.vector_store %arg5[%c0_53, %c0_54], %103 {strides = array<i32>} : memref<256x64xf32, #tpu.memory_space<vmem>>, vector<256x64xf32>,
    } else {
    }
    return
  }
  func.func @transform_0(%arg0: i32, %arg1: i32) -> (i32, i32) {
    %c0_i32 = arith.constant 0 : i32
    %c0_i32_0 = arith.constant 0 : i32
    return %arg0, %c0_i32 : i32, i32
  }
  func.func @transform_1(%arg0: i32, %arg1: i32) -> (i32, i32) {
    %c0_i32 = arith.constant 0 : i32
    %c0_i32_0 = arith.constant 0 : i32
    return %c0_i32, %arg1 : i32, i32
  }
  func.func @transform_2(%arg0: i32, %arg1: i32) -> (i32, i32) {
    %c0_i32 = arith.constant 0 : i32
    %c0_i32_0 = arith.constant 0 : i32
    return %arg1, %c0_i32 : i32, i32
  }
  func.func @transform_3(%arg0: i32, %arg1: i32) -> (i32, i32) {
    %c0_i32 = arith.constant 0 : i32
    %c0_i32_0 = arith.constant 0 : i32
    return %arg0, %c0_i32 : i32, i32
  }
}

</mosaic_0001>

<llo_original>
// kernel: tpu_custom_call.1
$region0: #{tpu_custom_call.1}
  #allocation0 [shape = 'u32[]', space=smem, size = 0x4, offset = 0x4, fixed_abs, tag = 'smem constant byte address 0x4 - core index']
  #allocation1 [shape = 'u32[144,128]{1,0:T(1,128)}', space=vmem, size = 0x12000, scoped, tag = 'internal scratch']
  #allocation2 [shape = 'f32[256,2]{1,0:T(8,128)}', space=vmem, size = 0x20000, scoped, tag = 'scratch operand']
  #allocation3 [shape = 'f32[256,2]{1,0:T(8,128)}', space=vmem, size = 0x20000, scoped, tag = 'scratch operand']
  #allocation4 [shape = 'f32[256,64]{1,0:T(8,128)}', space=vmem, size = 0x20000, scoped, tag = 'scratch operand']
  %s0 = inlined_call_operand.vmem [shape: f32[256,2], index: 0, kind: input, shape index: {}]
  %s1 = inlined_call_operand.vmem [shape: f32[2,256], index: 1, kind: input, shape index: {}]
  %s2 = inlined_call_operand.vmem [shape: bf16[256,64], index: 2, kind: input, shape index: {}]
  %s3 = inlined_call_operand.vmem [shape: f32[256,64], index: 3, kind: output, shape index: {}]
  %s4 = sld [smem:[#allocation0]]
  $region30: #{tpu_custom_call.1} parent=0
    _
  %s6 = ssub.s32 1, %s4
  %s7 = scalar_select 0, %s6, %s4
  // Predicated region
  $region2: #{tpu_custom_call.1} parent=0 // pred_check
    _
  $region3: #{tpu_custom_call.1} parent=0 // pred_check_branch
    %9 = sbr.rel (0) target = $region5
  $region4: #{tpu_custom_call.1} parent=0 // pred_region
    _
  $region5: #{tpu_custom_call.1} parent=0 // pred_fallthru
    _
  // Predicated region
  $region6: #{tpu_custom_call.1} parent=0 // pred_check
    _
  $region7: #{tpu_custom_call.1} parent=0 // pred_check_branch
    %11 = sbr.rel (0) target = $region9
  $region8: #{tpu_custom_call.1} parent=0 // pred_region
    _
  $region9: #{tpu_custom_call.1} parent=0 // pred_fallthru
    _
  // Predicated region
  $region10: #{tpu_custom_call.1} parent=0 // pred_check
    _
  $region11: #{tpu_custom_call.1} parent=0 // pred_check_branch
    %13 = sbr.rel (0) target = $region13
  $region12: #{tpu_custom_call.1} parent=0 // pred_region
    _
  $region13: #{tpu_custom_call.1} parent=0 // pred_fallthru
    _
  %p15 = scmp.eq.s32.totalorder 0, 0
  // Predicated region
  $region14: #{tpu_custom_call.1} parent=0 // pred_check
    %p16 = pneg %p15
  $region15: #{tpu_custom_call.1} parent=0 // pred_check_branch
    %18 = sbr.rel (%p16) target = $region17
  $region16: #{tpu_custom_call.1} parent=0 // pred_region
    %vm19 = vcmask 15360
    %20 = vst.msk [vmem:[#allocation2] sm:$0xff] %vm19, -inf
    %21 = vst.msk [vmem:[#allocation2 + $0x8] sm:$0xff] %vm19, -inf
    %22 = vst.msk [vmem:[#allocation2 + $0x10] sm:$0xff] %vm19, -inf
    %23 = vst.msk [vmem:[#allocation2 + $0x18] sm:$0xff] %vm19, -inf
    %24 = vst.msk [vmem:[#allocation2 + $0x20] sm:$0xff] %vm19, -inf
    %25 = vst.msk [vmem:[#allocation2 + $0x28] sm:$0xff] %vm19, -inf
    %26 = vst.msk [vmem:[#allocation2 + $0x30] sm:$0xff] %vm19, -inf
    %27 = vst.msk [vmem:[#allocation2 + $0x38] sm:$0xff] %vm19, -inf
    %28 = vst.msk [vmem:[#allocation2 + $0x40] sm:$0xff] %vm19, -inf
    %29 = vst.msk [vmem:[#allocation2 + $0x48] sm:$0xff] %vm19, -inf
    %30 = vst.msk [vmem:[#allocation2 + $0x50] sm:$0xff] %vm19, -inf
    %31 = vst.msk [vmem:[#allocation2 + $0x58] sm:$0xff] %vm19, -inf
    %32 = vst.msk [vmem:[#allocation2 + $0x60] sm:$0xff] %vm19, -inf
    %33 = vst.msk [vmem:[#allocation2 + $0x68] sm:$0xff] %vm19, -inf
    %34 = vst.msk [vmem:[#allocation2 + $0x70] sm:$0xff] %vm19, -inf
    %35 = vst.msk [vmem:[#allocation2 + $0x78] sm:$0xff] %vm19, -inf
    %36 = vst.msk [vmem:[#allocation2 + $0x80] sm:$0xff] %vm19, -inf
    %37 = vst.msk [vmem:[#allocation2 + $0x88] sm:$0xff] %vm19, -inf
    %38 = vst.msk [vmem:[#allocation2 + $0x90] sm:$0xff] %vm19, -inf
    %39 = vst.msk [vmem:[#allocation2 + $0x98] sm:$0xff] %vm19, -inf
    %40 = vst.msk [vmem:[#allocation2 + $0xa0] sm:$0xff] %vm19, -inf
    %41 = vst.msk [vmem:[#allocation2 + $0xa8] sm:$0xff] %vm19, -inf
    %42 = vst.msk [vmem:[#allocation2 + $0xb0] sm:$0xff] %vm19, -inf
    %43 = vst.msk [vmem:[#allocation2 + $0xb8] sm:$0xff] %vm19, -inf
    %44 = vst.msk [vmem:[#allocation2 + $0xc0] sm:$0xff] %vm19, -inf
    %45 = vst.msk [vmem:[#allocation2 + $0xc8] sm:$0xff] %vm19, -inf
    %46 = vst.msk [vmem:[#allocation2 + $0xd0] sm:$0xff] %vm19, -inf
    %47 = vst.msk [vmem:[#allocation2 + $0xd8] sm:$0xff] %vm19, -inf
    %48 = vst.msk [vmem:[#allocation2 + $0xe0] sm:$0xff] %vm19, -inf
    %49 = vst.msk [vmem:[#allocation2 + $0xe8] sm:$0xff] %vm19, -inf
    %50 = vst.msk [vmem:[#allocation2 + $0xf0] sm:$0xff] %vm19, -inf
    %51 = vst.msk [vmem:[#allocation2 + $0xf8] sm:$0xff] %vm19, -inf
    %52 = vst.msk [vmem:[#allocation3] sm:$0xff] %vm19, 0.0
    %53 = vst.msk [vmem:[#allocation3 + $0x8] sm:$0xff] %vm19, 0.0
    %54 = vst.msk [vmem:[#allocation3 + $0x10] sm:$0xff] %vm19, 0.0
    %55 = vst.msk [vmem:[#allocation3 + $0x18] sm:$0xff] %vm19, 0.0
    %56 = vst.msk [vmem:[#allocation3 + $0x20] sm:$0xff] %vm19, 0.0
    %57 = vst.msk [vmem:[#allocation3 + $0x28] sm:$0xff] %vm19, 0.0
    %58 = vst.msk [vmem:[#allocation3 + $0x30] sm:$0xff] %vm19, 0.0
    %59 = vst.msk [vmem:[#allocation3 + $0x38] sm:$0xff] %vm19, 0.0
    %60 = vst.msk [vmem:[#allocation3 + $0x40] sm:$0xff] %vm19, 0.0
    %61 = vst.msk [vmem:[#allocation3 + $0x48] sm:$0xff] %vm19, 0.0
    %62 = vst.msk [vmem:[#allocation3 + $0x50] sm:$0xff] %vm19, 0.0
    %63 = vst.msk [vmem:[#allocation3 + $0x58] sm:$0xff] %vm19, 0.0
    %64 = vst.msk [vmem:[#allocation3 + $0x60] sm:$0xff] %vm19, 0.0
    %65 = vst.msk [vmem:[#allocation3 + $0x68] sm:$0xff] %vm19, 0.0
    %66 = vst.msk [vmem:[#allocation3 + $0x70] sm:$0xff] %vm19, 0.0
    %67 = vst.msk [vmem:[#allocation3 + $0x78] sm:$0xff] %vm19, 0.0
    %68 = vst.msk [vmem:[#allocation3 + $0x80] sm:$0xff] %vm19, 0.0
    %69 = vst.msk [vmem:[#allocation3 + $0x88] sm:$0xff] %vm19, 0.0
    %70 = vst.msk [vmem:[#allocation3 + $0x90] sm:$0xff] %vm19, 0.0
    %71 = vst.msk [vmem:[#allocation3 + $0x98] sm:$0xff] %vm19, 0.0
    %72 = vst.msk [vmem:[#allocation3 + $0xa0] sm:$0xff] %vm19, 0.0
    %73 = vst.msk [vmem:[#allocation3 + $0xa8] sm:$0xff] %vm19, 0.0
    %74 = vst.msk [vmem:[#allocation3 + $0xb0] sm:$0xff] %vm19, 0.0
    %75 = vst.msk [vmem:[#allocation3 + $0xb8] sm:$0xff] %vm19, 0.0
    %76 = vst.msk [vmem:[#allocation3 + $0xc0] sm:$0xff] %vm19, 0.0
    %77 = vst.msk [vmem:[#allocation3 + $0xc8] sm:$0xff] %vm19, 0.0
    %78 = vst.msk [vmem:[#allocation3 + $0xd0] sm:$0xff] %vm19, 0.0
    %79 = vst.msk [vmem:[#allocation3 + $0xd8] sm:$0xff] %vm19, 0.0
    %80 = vst.msk [vmem:[#allocation3 + $0xe0] sm:$0xff] %vm19, 0.0
    %81 = vst.msk [vmem:[#allocation3 + $0xe8] sm:$0xff] %vm19, 0.0
    %82 = vst.msk [vmem:[#allocation3 + $0xf0] sm:$0xff] %vm19, 0.0
    %83 = vst.msk [vmem:[#allocation3 + $0xf8] sm:$0xff] %vm19, 0.0
    %vm84 = vcmask 523264
    %85 = vst.msk [vmem:[#allocation4] sm:$0xff] %vm84, 0.0
    %86 = vst.msk [vmem:[#allocation4 + $0x8] sm:$0xff] %vm84, 0.0
    %87 = vst.msk [vmem:[#allocation4 + $0x10] sm:$0xff] %vm84, 0.0
    %88 = vst.msk [vmem:[#allocation4 + $0x18] sm:$0xff] %vm84, 0.0
    %89 = vst.msk [vmem:[#allocation4 + $0x20] sm:$0xff] %vm84, 0.0
    %90 = vst.msk [vmem:[#allocation4 + $0x28] sm:$0xff] %vm84, 0.0
    %91 = vst.msk [vmem:[#allocation4 + $0x30] sm:$0xff] %vm84, 0.0
    %92 = vst.msk [vmem:[#allocation4 + $0x38] sm:$0xff] %vm84, 0.0
    %93 = vst.msk [vmem:[#allocation4 + $0x40] sm:$0xff] %vm84, 0.0
    %94 = vst.msk [vmem:[#allocation4 + $0x48] sm:$0xff] %vm84, 0.0
    %95 = vst.msk [vmem:[#allocation4 + $0x50] sm:$0xff] %vm84, 0.0
    %96 = vst.msk [vmem:[#allocation4 + $0x58] sm:$0xff] %vm84, 0.0
    %97 = vst.msk [vmem:[#allocation4 + $0x60] sm:$0xff] %vm84, 0.0
    %98 = vst.msk [vmem:[#allocation4 + $0x68] sm:$0xff] %vm84, 0.0
    %99 = vst.msk [vmem:[#allocation4 + $0x70] sm:$0xff] %vm84, 0.0
    %100 = vst.msk [vmem:[#allocation4 + $0x78] sm:$0xff] %vm84, 0.0
    %101 = vst.msk [vmem:[#allocation4 + $0x80] sm:$0xff] %vm84, 0.0
    %102 = vst.msk [vmem:[#allocation4 + $0x88] sm:$0xff] %vm84, 0.0
    %103 = vst.msk [vmem:[#allocation4 + $0x90] sm:$0xff] %vm84, 0.0
    %104 = vst.msk [vmem:[#allocation4 + $0x98] sm:$0xff] %vm84, 0.0
    %105 = vst.msk [vmem:[#allocation4 + $0xa0] sm:$0xff] %vm84, 0.0
    %106 = vst.msk [vmem:[#allocation4 + $0xa8] sm:$0xff] %vm84, 0.0
    %107 = vst.msk [vmem:[#allocation4 + $0xb0] sm:$0xff] %vm84, 0.0
    %108 = vst.msk [vmem:[#allocation4 + $0xb8] sm:$0xff] %vm84, 0.0
    %109 = vst.msk [vmem:[#allocation4 + $0xc0] sm:$0xff] %vm84, 0.0
    %110 = vst.msk [vmem:[#allocation4 + $0xc8] sm:$0xff] %vm84, 0.0
    %111 = vst.msk [vmem:[#allocation4 + $0xd0] sm:$0xff] %vm84, 0.0
    %112 = vst.msk [vmem:[#allocation4 + $0xd8] sm:$0xff] %vm84, 0.0
    %113 = vst.msk [vmem:[#allocation4 + $0xe0] sm:$0xff] %vm84, 0.0
    %114 = vst.msk [vmem:[#allocation4 + $0xe8] sm:$0xff] %vm84, 0.0
    %115 = vst.msk [vmem:[#allocation4 + $0xf0] sm:$0xff] %vm84, 0.0
    %116 = vst.msk [vmem:[#allocation4 + $0xf8] sm:$0xff] %vm84, 0.0
  $region17: #{tpu_custom_call.1} parent=0 // pred_fallthru
    _
  %v117 = vld [vmem:[%s2] sm:$0xf]
  %v118 = vld [vmem:[%s2 + $0x4] sm:$0xf]
  %v119 = vld [vmem:[%s2 + $0x8] sm:$0xf]
  %v120 = vld [vmem:[%s2 + $0xc] sm:$0xf]
  %v121 = vld [vmem:[%s2 + $0x10] sm:$0xf]
  %v122 = vld [vmem:[%s2 + $0x14] sm:$0xf]
  %v123 = vld [vmem:[%s2 + $0x18] sm:$0xf]
  %v124 = vld [vmem:[%s2 + $0x1c] sm:$0xf]
  %v125 = vld [vmem:[%s2 + $0x20] sm:$0xf]
  %v126 = vld [vmem:[%s2 + $0x24] sm:$0xf]
  %v127 = vld [vmem:[%s2 + $0x28] sm:$0xf]
  %v128 = vld [vmem:[%s2 + $0x2c] sm:$0xf]
  %v129 = vld [vmem:[%s2 + $0x30] sm:$0xf]
  %v130 = vld [vmem:[%s2 + $0x34] sm:$0xf]
  %v131 = vld [vmem:[%s2 + $0x38] sm:$0xf]
  %v132 = vld [vmem:[%s2 + $0x3c] sm:$0xf]
  %v133 = vld [vmem:[%s2 + $0x40] sm:$0xf]
  %v134 = vld [vmem:[%s2 + $0x44] sm:$0xf]
  %v135 = vld [vmem:[%s2 + $0x48] sm:$0xf]
  %v136 = vld [vmem:[%s2 + $0x4c] sm:$0xf]
  %v137 = vld [vmem:[%s2 + $0x50] sm:$0xf]
  %v138 = vld [vmem:[%s2 + $0x54] sm:$0xf]
  %v139 = vld [vmem:[%s2 + $0x58] sm:$0xf]
  %v140 = vld [vmem:[%s2 + $0x5c] sm:$0xf]
  %v141 = vld [vmem:[%s2 + $0x60] sm:$0xf]
  %v142 = vld [vmem:[%s2 + $0x64] sm:$0xf]
  %v143 = vld [vmem:[%s2 + $0x68] sm:$0xf]
  %v144 = vld [vmem:[%s2 + $0x6c] sm:$0xf]
  %v145 = vld [vmem:[%s2 + $0x70] sm:$0xf]
  %v146 = vld [vmem:[%s2 + $0x74] sm:$0xf]
  %v147 = vld [vmem:[%s2 + $0x78] sm:$0xf]
  %v148 = vld [vmem:[%s2 + $0x7c] sm:$0xf]
  %v149 = vld [vmem:[%s0] sm:$0xff]
  %v150 = vld [vmem:[%s0 + $0x8] sm:$0xff]
  %v151 = vld [vmem:[%s0 + $0x10] sm:$0xff]
  %v152 = vld [vmem:[%s0 + $0x18] sm:$0xff]
  %v153 = vld [vmem:[%s0 + $0x20] sm:$0xff]
  %v154 = vld [vmem:[%s0 + $0x28] sm:$0xff]
  %v155 = vld [vmem:[%s0 + $0x30] sm:$0xff]
  %v156 = vld [vmem:[%s0 + $0x38] sm:$0xff]
  %v157 = vld [vmem:[%s0 + $0x40] sm:$0xff]
  %v158 = vld [vmem:[%s0 + $0x48] sm:$0xff]
  %v159 = vld [vmem:[%s0 + $0x50] sm:$0xff]
  %v160 = vld [vmem:[%s0 + $0x58] sm:$0xff]
  %v161 = vld [vmem:[%s0 + $0x60] sm:$0xff]
  %v162 = vld [vmem:[%s0 + $0x68] sm:$0xff]
  %v163 = vld [vmem:[%s0 + $0x70] sm:$0xff]
  %v164 = vld [vmem:[%s0 + $0x78] sm:$0xff]
  %v165 = vld [vmem:[%s0 + $0x80] sm:$0xff]
  %v166 = vld [vmem:[%s0 + $0x88] sm:$0xff]
  %v167 = vld [vmem:[%s0 + $0x90] sm:$0xff]
  %v168 = vld [vmem:[%s0 + $0x98] sm:$0xff]
  %v169 = vld [vmem:[%s0 + $0xa0] sm:$0xff]
  %v170 = vld [vmem:[%s0 + $0xa8] sm:$0xff]
  %v171 = vld [vmem:[%s0 + $0xb0] sm:$0xff]
  %v172 = vld [vmem:[%s0 + $0xb8] sm:$0xff]
  %v173 = vld [vmem:[%s0 + $0xc0] sm:$0xff]
  %v174 = vld [vmem:[%s0 + $0xc8] sm:$0xff]
  %v175 = vld [vmem:[%s0 + $0xd0] sm:$0xff]
  %v176 = vld [vmem:[%s0 + $0xd8] sm:$0xff]
  %v177 = vld [vmem:[%s0 + $0xe0] sm:$0xff]
  %v178 = vld [vmem:[%s0 + $0xe8] sm:$0xff]
  %v179 = vld [vmem:[%s0 + $0xf0] sm:$0xff]
  %v180 = vld [vmem:[%s0 + $0xf8] sm:$0xff]
  %v181 = vld [vmem:[%s1] sm:$0xf]
  %183 = vset.pattern.permute.xlu0 0
  %184 = vperm.xlu0 %183, %v149
  %v185 = vpop.permute.xlu0 %184
  %188 = vset.pattern.permute.xlu0 0
  %189 = vperm.xlu0 %188, %v150
  %v190 = vpop.permute.xlu0 %189
  %193 = vset.pattern.permute.xlu0 0
  %194 = vperm.xlu0 %193, %v151
  %v195 = vpop.permute.xlu0 %194
  %198 = vset.pattern.permute.xlu0 0
  %199 = vperm.xlu0 %198, %v152
  %v200 = vpop.permute.xlu0 %199
  %203 = vset.pattern.permute.xlu0 0
  %204 = vperm.xlu0 %203, %v153
  %v205 = vpop.permute.xlu0 %204
  %208 = vset.pattern.permute.xlu0 0
  %209 = vperm.xlu0 %208, %v154
  %v210 = vpop.permute.xlu0 %209
  %213 = vset.pattern.permute.xlu0 0
  %214 = vperm.xlu0 %213, %v155
  %v215 = vpop.permute.xlu0 %214
  %218 = vset.pattern.permute.xlu0 0
  %219 = vperm.xlu0 %218, %v156
  %v220 = vpop.permute.xlu0 %219
  %223 = vset.pattern.permute.xlu0 0
  %224 = vperm.xlu0 %223, %v157
  %v225 = vpop.permute.xlu0 %224
  %228 = vset.pattern.permute.xlu0 0
  %229 = vperm.xlu0 %228, %v158
  %v230 = vpop.permute.xlu0 %229
  %233 = vset.pattern.permute.xlu0 0
  %234 = vperm.xlu0 %233, %v159
  %v235 = vpop.permute.xlu0 %234
  %238 = vset.pattern.permute.xlu0 0
  %239 = vperm.xlu0 %238, %v160
  %v240 = vpop.permute.xlu0 %239
  %243 = vset.pattern.permute.xlu0 0
  %244 = vperm.xlu0 %243, %v161
  %v245 = vpop.permute.xlu0 %244
  %248 = vset.pattern.permute.xlu0 0
  %249 = vperm.xlu0 %248, %v162
  %v250 = vpop.permute.xlu0 %249
  %253 = vset.pattern.permute.xlu0 0
  %254 = vperm.xlu0 %253, %v163
  %v255 = vpop.permute.xlu0 %254
  %258 = vset.pattern.permute.xlu0 0
  %259 = vperm.xlu0 %258, %v164
  %v260 = vpop.permute.xlu0 %259
  %263 = vset.pattern.permute.xlu0 0
  %264 = vperm.xlu0 %263, %v165
  %v265 = vpop.permute.xlu0 %264
  %268 = vset.pattern.permute.xlu0 0
  %269 = vperm.xlu0 %268, %v166
  %v270 = vpop.permute.xlu0 %269
  %273 = vset.pattern.permute.xlu0 0
  %274 = vperm.xlu0 %273, %v167
  %v275 = vpop.permute.xlu0 %274
  %278 = vset.pattern.permute.xlu0 0
  %279 = vperm.xlu0 %278, %v168
  %v280 = vpop.permute.xlu0 %279
  %283 = vset.pattern.permute.xlu0 0
  %284 = vperm.xlu0 %283, %v169
  %v285 = vpop.permute.xlu0 %284
  %288 = vset.pattern.permute.xlu0 0
  %289 = vperm.xlu0 %288, %v170
  %v290 = vpop.permute.xlu0 %289
  %293 = vset.pattern.permute.xlu0 0
  %294 = vperm.xlu0 %293, %v171
  %v295 = vpop.permute.xlu0 %294
  %298 = vset.pattern.permute.xlu0 0
  %299 = vperm.xlu0 %298, %v172
  %v300 = vpop.permute.xlu0 %299
  %303 = vset.pattern.permute.xlu0 0
  %304 = vperm.xlu0 %303, %v173
  %v305 = vpop.permute.xlu0 %304
  %308 = vset.pattern.permute.xlu0 0
  %309 = vperm.xlu0 %308, %v174
  %v310 = vpop.permute.xlu0 %309
  %313 = vset.pattern.permute.xlu0 0
  %314 = vperm.xlu0 %313, %v175
  %v315 = vpop.permute.xlu0 %314
  %318 = vset.pattern.permute.xlu0 0
  %319 = vperm.xlu0 %318, %v176
  %v320 = vpop.permute.xlu0 %319
  %323 = vset.pattern.permute.xlu0 0
  %324 = vperm.xlu0 %323, %v177
  %v325 = vpop.permute.xlu0 %324
  %328 = vset.pattern.permute.xlu0 0
  %329 = vperm.xlu0 %328, %v178
  %v330 = vpop.permute.xlu0 %329
  %333 = vset.pattern.permute.xlu0 0
  %334 = vperm.xlu0 %333, %v179
  %v335 = vpop.permute.xlu0 %334
  %338 = vset.pattern.permute.xlu0 0
  %339 = vperm.xlu0 %338, %v180
  %v340 = vpop.permute.xlu0 %339
  %v343 = vlaneseq
  %v344 = vshrl.u32 %v343, 7
  %v345 = vsub.s32 0, %v344
  %v346 = vrot.slane %v181, %v345
  %v347 = vlaneseq
  %v348 = vshrl.u32 %v347, 7
  %v349 = vsub.s32 2, %v348
  %v350 = vrot.slane %v181, %v349
  %v353 = vlaneseq
  %v354 = vshrl.u32 %v353, 7
  %v355 = vsub.s32 0, %v354
  %v356 = vrot.slane %v346, %v355
  %v357 = vlaneseq
  %v358 = vshrl.u32 %v357, 7
  %v359 = vsub.s32 0, %v358
  %v360 = vrot.slane %v350, %v359
  %v361 = vadd.f32 %v185, %v356
  %v362 = vadd.f32 %v185, %v360
  %v363 = vadd.f32 %v190, %v356
  %v364 = vadd.f32 %v190, %v360
  %v365 = vadd.f32 %v195, %v356
  %v366 = vadd.f32 %v195, %v360
  %v367 = vadd.f32 %v200, %v356
  %v368 = vadd.f32 %v200, %v360
  %v369 = vadd.f32 %v205, %v356
  %v370 = vadd.f32 %v205, %v360
  %v371 = vadd.f32 %v210, %v356
  %v372 = vadd.f32 %v210, %v360
  %v373 = vadd.f32 %v215, %v356
  %v374 = vadd.f32 %v215, %v360
  %v375 = vadd.f32 %v220, %v356
  %v376 = vadd.f32 %v220, %v360
  %v377 = vadd.f32 %v225, %v356
  %v378 = vadd.f32 %v225, %v360
  %v379 = vadd.f32 %v230, %v356
  %v380 = vadd.f32 %v230, %v360
  %v381 = vadd.f32 %v235, %v356
  %v382 = vadd.f32 %v235, %v360
  %v383 = vadd.f32 %v240, %v356
  %v384 = vadd.f32 %v240, %v360
  %v385 = vadd.f32 %v245, %v356
  %v386 = vadd.f32 %v245, %v360
  %v387 = vadd.f32 %v250, %v356
  %v388 = vadd.f32 %v250, %v360
  %v389 = vadd.f32 %v255, %v356
  %v390 = vadd.f32 %v255, %v360
  %v391 = vadd.f32 %v260, %v356
  %v392 = vadd.f32 %v260, %v360
  %v393 = vadd.f32 %v265, %v356
  %v394 = vadd.f32 %v265, %v360
  %v395 = vadd.f32 %v270, %v356
  %v396 = vadd.f32 %v270, %v360
  %v397 = vadd.f32 %v275, %v356
  %v398 = vadd.f32 %v275, %v360
  %v399 = vadd.f32 %v280, %v356
  %v400 = vadd.f32 %v280, %v360
  %v401 = vadd.f32 %v285, %v356
  %v402 = vadd.f32 %v285, %v360
  %v403 = vadd.f32 %v290, %v356
  %v404 = vadd.f32 %v290, %v360
  %v405 = vadd.f32 %v295, %v356
  %v406 = vadd.f32 %v295, %v360
  %v407 = vadd.f32 %v300, %v356
  %v408 = vadd.f32 %v300, %v360
  %v409 = vadd.f32 %v305, %v356
  %v410 = vadd.f32 %v305, %v360
  %v411 = vadd.f32 %v310, %v356
  %v412 = vadd.f32 %v310, %v360
  %v413 = vadd.f32 %v315, %v356
  %v414 = vadd.f32 %v315, %v360
  %v415 = vadd.f32 %v320, %v356
  %v416 = vadd.f32 %v320, %v360
  %v417 = vadd.f32 %v325, %v356
  %v418 = vadd.f32 %v325, %v360
  %v419 = vadd.f32 %v330, %v356
  %v420 = vadd.f32 %v330, %v360
  %v421 = vadd.f32 %v335, %v356
  %v422 = vadd.f32 %v335, %v360
  %v423 = vadd.f32 %v340, %v356
  %v424 = vadd.f32 %v340, %v360
  %vm425 = vcmp.gt.f32.partialorder %v361, 0.0
  %vm426 = vcmp.gt.f32.partialorder %v362, 0.0
  %vm427 = vcmp.gt.f32.partialorder %v363, 0.0
  %vm428 = vcmp.gt.f32.partialorder %v364, 0.0
  %vm429 = vcmp.gt.f32.partialorder %v365, 0.0
  %vm430 = vcmp.gt.f32.partialorder %v366, 0.0
  %vm431 = vcmp.gt.f32.partialorder %v367, 0.0
  %vm432 = vcmp.gt.f32.partialorder %v368, 0.0
  %vm433 = vcmp.gt.f32.partialorder %v369, 0.0
  %vm434 = vcmp.gt.f32.partialorder %v370, 0.0
  %vm435 = vcmp.gt.f32.partialorder %v371, 0.0
  %vm436 = vcmp.gt.f32.partialorder %v372, 0.0
  %vm437 = vcmp.gt.f32.partialorder %v373, 0.0
  %vm438 = vcmp.gt.f32.partialorder %v374, 0.0
  %vm439 = vcmp.gt.f32.partialorder %v375, 0.0
  %vm440 = vcmp.gt.f32.partialorder %v376, 0.0
  %vm441 = vcmp.gt.f32.partialorder %v377, 0.0
  %vm442 = vcmp.gt.f32.partialorder %v378, 0.0
  %vm443 = vcmp.gt.f32.partialorder %v379, 0.0
  %vm444 = vcmp.gt.f32.partialorder %v380, 0.0
  %vm445 = vcmp.gt.f32.partialorder %v381, 0.0
  %vm446 = vcmp.gt.f32.partialorder %v382, 0.0
  %vm447 = vcmp.gt.f32.partialorder %v383, 0.0
  %vm448 = vcmp.gt.f32.partialorder %v384, 0.0
  %vm449 = vcmp.gt.f32.partialorder %v385, 0.0
  %vm450 = vcmp.gt.f32.partialorder %v386, 0.0
  %vm451 = vcmp.gt.f32.partialorder %v387, 0.0
  %vm452 = vcmp.gt.f32.partialorder %v388, 0.0
  %vm453 = vcmp.gt.f32.partialorder %v389, 0.0
  %vm454 = vcmp.gt.f32.partialorder %v390, 0.0
  %vm455 = vcmp.gt.f32.partialorder %v391, 0.0
  %vm456 = vcmp.gt.f32.partialorder %v392, 0.0
  %vm457 = vcmp.gt.f32.partialorder %v393, 0.0
  %vm458 = vcmp.gt.f32.partialorder %v394, 0.0
  %vm459 = vcmp.gt.f32.partialorder %v395, 0.0
  %vm460 = vcmp.gt.f32.partialorder %v396, 0.0
  %vm461 = vcmp.gt.f32.partialorder %v397, 0.0
  %vm462 = vcmp.gt.f32.partialorder %v398, 0.0
  %vm463 = vcmp.gt.f32.partialorder %v399, 0.0
  %vm464 = vcmp.gt.f32.partialorder %v400, 0.0
  %vm465 = vcmp.gt.f32.partialorder %v401, 0.0
  %vm466 = vcmp.gt.f32.partialorder %v402, 0.0
  %vm467 = vcmp.gt.f32.partialorder %v403, 0.0
  %vm468 = vcmp.gt.f32.partialorder %v404, 0.0
  %vm469 = vcmp.gt.f32.partialorder %v405, 0.0
  %vm470 = vcmp.gt.f32.partialorder %v406, 0.0
  %vm471 = vcmp.gt.f32.partialorder %v407, 0.0
  %vm472 = vcmp.gt.f32.partialorder %v408, 0.0
  %vm473 = vcmp.gt.f32.partialorder %v409, 0.0
  %vm474 = vcmp.gt.f32.partialorder %v410, 0.0
  %vm475 = vcmp.gt.f32.partialorder %v411, 0.0
  %vm476 = vcmp.gt.f32.partialorder %v412, 0.0
  %vm477 = vcmp.gt.f32.partialorder %v413, 0.0
  %vm478 = vcmp.gt.f32.partialorder %v414, 0.0
  %vm479 = vcmp.gt.f32.partialorder %v415, 0.0
  %vm480 = vcmp.gt.f32.partialorder %v416, 0.0
  %vm481 = vcmp.gt.f32.partialorder %v417, 0.0
  %vm482 = vcmp.gt.f32.partialorder %v418, 0.0
  %vm483 = vcmp.gt.f32.partialorder %v419, 0.0
  %vm484 = vcmp.gt.f32.partialorder %v420, 0.0
  %vm485 = vcmp.gt.f32.partialorder %v421, 0.0
  %vm486 = vcmp.gt.f32.partialorder %v422, 0.0
  %vm487 = vcmp.gt.f32.partialorder %v423, 0.0
  %vm488 = vcmp.gt.f32.partialorder %v424, 0.0
  %v489 = vmul.f32 %v361, 0.2
  %v490 = vmul.f32 %v362, 0.2
  %v491 = vmul.f32 %v363, 0.2
  %v492 = vmul.f32 %v364, 0.2
  %v493 = vmul.f32 %v365, 0.2
  %v494 = vmul.f32 %v366, 0.2
  %v495 = vmul.f32 %v367, 0.2
  %v496 = vmul.f32 %v368, 0.2
  %v497 = vmul.f32 %v369, 0.2
  %v498 = vmul.f32 %v370, 0.2
  %v499 = vmul.f32 %v371, 0.2
  %v500 = vmul.f32 %v372, 0.2
  %v501 = vmul.f32 %v373, 0.2
  %v502 = vmul.f32 %v374, 0.2
  %v503 = vmul.f32 %v375, 0.2
  %v504 = vmul.f32 %v376, 0.2
  %v505 = vmul.f32 %v377, 0.2
  %v506 = vmul.f32 %v378, 0.2
  %v507 = vmul.f32 %v379, 0.2
  %v508 = vmul.f32 %v380, 0.2
  %v509 = vmul.f32 %v381, 0.2
  %v510 = vmul.f32 %v382, 0.2
  %v511 = vmul.f32 %v383, 0.2
  %v512 = vmul.f32 %v384, 0.2
  %v513 = vmul.f32 %v385, 0.2
  %v514 = vmul.f32 %v386, 0.2
  %v515 = vmul.f32 %v387, 0.2
  %v516 = vmul.f32 %v388, 0.2
  %v517 = vmul.f32 %v389, 0.2
  %v518 = vmul.f32 %v390, 0.2
  %v519 = vmul.f32 %v391, 0.2
  %v520 = vmul.f32 %v392, 0.2
  %v521 = vmul.f32 %v393, 0.2
  %v522 = vmul.f32 %v394, 0.2
  %v523 = vmul.f32 %v395, 0.2
  %v524 = vmul.f32 %v396, 0.2
  %v525 = vmul.f32 %v397, 0.2
  %v526 = vmul.f32 %v398, 0.2
  %v527 = vmul.f32 %v399, 0.2
  %v528 = vmul.f32 %v400, 0.2
  %v529 = vmul.f32 %v401, 0.2
  %v530 = vmul.f32 %v402, 0.2
  %v531 = vmul.f32 %v403, 0.2
  %v532 = vmul.f32 %v404, 0.2
  %v533 = vmul.f32 %v405, 0.2
  %v534 = vmul.f32 %v406, 0.2
  %v535 = vmul.f32 %v407, 0.2
  %v536 = vmul.f32 %v408, 0.2
  %v537 = vmul.f32 %v409, 0.2
  %v538 = vmul.f32 %v410, 0.2
  %v539 = vmul.f32 %v411, 0.2
  %v540 = vmul.f32 %v412, 0.2
  %v541 = vmul.f32 %v413, 0.2
  %v542 = vmul.f32 %v414, 0.2
  %v543 = vmul.f32 %v415, 0.2
  %v544 = vmul.f32 %v416, 0.2
  %v545 = vmul.f32 %v417, 0.2
  %v546 = vmul.f32 %v418, 0.2
  %v547 = vmul.f32 %v419, 0.2
  %v548 = vmul.f32 %v420, 0.2
  %v549 = vmul.f32 %v421, 0.2
  %v550 = vmul.f32 %v422, 0.2
  %v551 = vmul.f32 %v423, 0.2
  %v552 = vmul.f32 %v424, 0.2
  %v553 = vsel %vm425, %v361, %v489
  %v554 = vsel %vm426, %v362, %v490
  %v555 = vsel %vm427, %v363, %v491
  %v556 = vsel %vm428, %v364, %v492
  %v557 = vsel %vm429, %v365, %v493
  %v558 = vsel %vm430, %v366, %v494
  %v559 = vsel %vm431, %v367, %v495
  %v560 = vsel %vm432, %v368, %v496
  %v561 = vsel %vm433, %v369, %v497
  %v562 = vsel %vm434, %v370, %v498
  %v563 = vsel %vm435, %v371, %v499
  %v564 = vsel %vm436, %v372, %v500
  %v565 = vsel %vm437, %v373, %v501
  %v566 = vsel %vm438, %v374, %v502
  %v567 = vsel %vm439, %v375, %v503
  %v568 = vsel %vm440, %v376, %v504
  %v569 = vsel %vm441, %v377, %v505
  %v570 = vsel %vm442, %v378, %v506
  %v571 = vsel %vm443, %v379, %v507
  %v572 = vsel %vm444, %v380, %v508
  %v573 = vsel %vm445, %v381, %v509
  %v574 = vsel %vm446, %v382, %v510
  %v575 = vsel %vm447, %v383, %v511
  %v576 = vsel %vm448, %v384, %v512
  %v577 = vsel %vm449, %v385, %v513
  %v578 = vsel %vm450, %v386, %v514
  %v579 = vsel %vm451, %v387, %v515
  %v580 = vsel %vm452, %v388, %v516
  %v581 = vsel %vm453, %v389, %v517
  %v582 = vsel %vm454, %v390, %v518
  %v583 = vsel %vm455, %v391, %v519
  %v584 = vsel %vm456, %v392, %v520
  %v585 = vsel %vm457, %v393, %v521
  %v586 = vsel %vm458, %v394, %v522
  %v587 = vsel %vm459, %v395, %v523
  %v588 = vsel %vm460, %v396, %v524
  %v589 = vsel %vm461, %v397, %v525
  %v590 = vsel %vm462, %v398, %v526
  %v591 = vsel %vm463, %v399, %v527
  %v592 = vsel %vm464, %v400, %v528
  %v593 = vsel %vm465, %v401, %v529
  %v594 = vsel %vm466, %v402, %v530
  %v595 = vsel %vm467, %v403, %v531
  %v596 = vsel %vm468, %v404, %v532
  %v597 = vsel %vm469, %v405, %v533
  %v598 = vsel %vm470, %v406, %v534
  %v599 = vsel %vm471, %v407, %v535
  %v600 = vsel %vm472, %v408, %v536
  %v601 = vsel %vm473, %v409, %v537
  %v602 = vsel %vm474, %v410, %v538
  %v603 = vsel %vm475, %v411, %v539
  %v604 = vsel %vm476, %v412, %v540
  %v605 = vsel %vm477, %v413, %v541
  %v606 = vsel %vm478, %v414, %v542
  %v607 = vsel %vm479, %v415, %v543
  %v608 = vsel %vm480, %v416, %v544
  %v609 = vsel %vm481, %v417, %v545
  %v610 = vsel %vm482, %v418, %v546
  %v611 = vsel %vm483, %v419, %v547
  %v612 = vsel %vm484, %v420, %v548
  %v613 = vsel %vm485, %v421, %v549
  %v614 = vsel %vm486, %v422, %v550
  %v615 = vsel %vm487, %v423, %v551
  %v616 = vsel %vm488, %v424, %v552
  %v617 = vld [vmem:[#allocation2] sm:$0xff]
  %v618 = vld [vmem:[#allocation2 + $0x8] sm:$0xff]
  %v619 = vld [vmem:[#allocation2 + $0x10] sm:$0xff]
  %v620 = vld [vmem:[#allocation2 + $0x18] sm:$0xff]
  %v621 = vld [vmem:[#allocation2 + $0x20] sm:$0xff]
  %v622 = vld [vmem:[#allocation2 + $0x28] sm:$0xff]
  %v623 = vld [vmem:[#allocation2 + $0x30] sm:$0xff]
  %v624 = vld [vmem:[#allocation2 + $0x38] sm:$0xff]
  %v625 = vld [vmem:[#allocation2 + $0x40] sm:$0xff]
  %v626 = vld [vmem:[#allocation2 + $0x48] sm:$0xff]
  %v627 = vld [vmem:[#allocation2 + $0x50] sm:$0xff]
  %v628 = vld [vmem:[#allocation2 + $0x58] sm:$0xff]
  %v629 = vld [vmem:[#allocation2 + $0x60] sm:$0xff]
  %v630 = vld [vmem:[#allocation2 + $0x68] sm:$0xff]
  %v631 = vld [vmem:[#allocation2 + $0x70] sm:$0xff]
  %v632 = vld [vmem:[#allocation2 + $0x78] sm:$0xff]
  %v633 = vld [vmem:[#allocation2 + $0x80] sm:$0xff]
  %v634 = vld [vmem:[#allocation2 + $0x88] sm:$0xff]
  %v635 = vld [vmem:[#allocation2 + $0x90] sm:$0xff]
  %v636 = vld [vmem:[#allocation2 + $0x98] sm:$0xff]
  %v637 = vld [vmem:[#allocation2 + $0xa0] sm:$0xff]
  %v638 = vld [vmem:[#allocation2 + $0xa8] sm:$0xff]
  %v639 = vld [vmem:[#allocation2 + $0xb0] sm:$0xff]
  %v640 = vld [vmem:[#allocation2 + $0xb8] sm:$0xff]
  %v641 = vld [vmem:[#allocation2 + $0xc0] sm:$0xff]
  %v642 = vld [vmem:[#allocation2 + $0xc8] sm:$0xff]
  %v643 = vld [vmem:[#allocation2 + $0xd0] sm:$0xff]
  %v644 = vld [vmem:[#allocation2 + $0xd8] sm:$0xff]
  %v645 = vld [vmem:[#allocation2 + $0xe0] sm:$0xff]
  %v646 = vld [vmem:[#allocation2 + $0xe8] sm:$0xff]
  %v647 = vld [vmem:[#allocation2 + $0xf0] sm:$0xff]
  %v648 = vld [vmem:[#allocation2 + $0xf8] sm:$0xff]
  %v649 = vmax.f32 %v553, %v554
  %650 = vmax.xlane.f32.xlu0 %v649
  %v651 = vpop.xlane.xlu0 %650
  %v652 = vmax.f32 %v555, %v556
  %653 = vmax.xlane.f32.xlu0 %v652
  %v654 = vpop.xlane.xlu0 %653
  %v655 = vmax.f32 %v557, %v558
  %656 = vmax.xlane.f32.xlu0 %v655
  %v657 = vpop.xlane.xlu0 %656
  %v658 = vmax.f32 %v559, %v560
  %659 = vmax.xlane.f32.xlu0 %v658
  %v660 = vpop.xlane.xlu0 %659
  %v661 = vmax.f32 %v561, %v562
  %662 = vmax.xlane.f32.xlu0 %v661
  %v663 = vpop.xlane.xlu0 %662
  %v664 = vmax.f32 %v563, %v564
  %665 = vmax.xlane.f32.xlu0 %v664
  %v666 = vpop.xlane.xlu0 %665
  %v667 = vmax.f32 %v565, %v566
  %668 = vmax.xlane.f32.xlu0 %v667
  %v669 = vpop.xlane.xlu0 %668
  %v670 = vmax.f32 %v567, %v568
  %671 = vmax.xlane.f32.xlu0 %v670
  %v672 = vpop.xlane.xlu0 %671
  %v673 = vmax.f32 %v569, %v570
  %674 = vmax.xlane.f32.xlu0 %v673
  %v675 = vpop.xlane.xlu0 %674
  %v676 = vmax.f32 %v571, %v572
  %677 = vmax.xlane.f32.xlu0 %v676
  %v678 = vpop.xlane.xlu0 %677
  %v679 = vmax.f32 %v573, %v574
  %680 = vmax.xlane.f32.xlu0 %v679
  %v681 = vpop.xlane.xlu0 %680
  %v682 = vmax.f32 %v575, %v576
  %683 = vmax.xlane.f32.xlu0 %v682
  %v684 = vpop.xlane.xlu0 %683
  %v685 = vmax.f32 %v577, %v578
  %686 = vmax.xlane.f32.xlu0 %v685
  %v687 = vpop.xlane.xlu0 %686
  %v688 = vmax.f32 %v579, %v580
  %689 = vmax.xlane.f32.xlu0 %v688
  %v690 = vpop.xlane.xlu0 %689
  %v691 = vmax.f32 %v581, %v582
  %692 = vmax.xlane.f32.xlu0 %v691
  %v693 = vpop.xlane.xlu0 %692
  %v694 = vmax.f32 %v583, %v584
  %695 = vmax.xlane.f32.xlu0 %v694
  %v696 = vpop.xlane.xlu0 %695
  %v697 = vmax.f32 %v585, %v586
  %698 = vmax.xlane.f32.xlu0 %v697
  %v699 = vpop.xlane.xlu0 %698
  %v700 = vmax.f32 %v587, %v588
  %701 = vmax.xlane.f32.xlu0 %v700
  %v702 = vpop.xlane.xlu0 %701
  %v703 = vmax.f32 %v589, %v590
  %704 = vmax.xlane.f32.xlu0 %v703
  %v705 = vpop.xlane.xlu0 %704
  %v706 = vmax.f32 %v591, %v592
  %707 = vmax.xlane.f32.xlu0 %v706
  %v708 = vpop.xlane.xlu0 %707
  %v709 = vmax.f32 %v593, %v594
  %710 = vmax.xlane.f32.xlu0 %v709
  %v711 = vpop.xlane.xlu0 %710
  %v712 = vmax.f32 %v595, %v596
  %713 = vmax.xlane.f32.xlu0 %v712
  %v714 = vpop.xlane.xlu0 %713
  %v715 = vmax.f32 %v597, %v598
  %716 = vmax.xlane.f32.xlu0 %v715
  %v717 = vpop.xlane.xlu0 %716
  %v718 = vmax.f32 %v599, %v600
  %719 = vmax.xlane.f32.xlu0 %v718
  %v720 = vpop.xlane.xlu0 %719
  %v721 = vmax.f32 %v601, %v602
  %722 = vmax.xlane.f32.xlu0 %v721
  %v723 = vpop.xlane.xlu0 %722
  %v724 = vmax.f32 %v603, %v604
  %725 = vmax.xlane.f32.xlu0 %v724
  %v726 = vpop.xlane.xlu0 %725
  %v727 = vmax.f32 %v605, %v606
  %728 = vmax.xlane.f32.xlu0 %v727
  %v729 = vpop.xlane.xlu0 %728
  %v730 = vmax.f32 %v607, %v608
  %731 = vmax.xlane.f32.xlu0 %v730
  %v732 = vpop.xlane.xlu0 %731
  %v733 = vmax.f32 %v609, %v610
  %734 = vmax.xlane.f32.xlu0 %v733
  %v735 = vpop.xlane.xlu0 %734
  %v736 = vmax.f32 %v611, %v612
  %737 = vmax.xlane.f32.xlu0 %v736
  %v738 = vpop.xlane.xlu0 %737
  %v739 = vmax.f32 %v613, %v614
  %740 = vmax.xlane.f32.xlu0 %v739
  %v741 = vpop.xlane.xlu0 %740
  %v742 = vmax.f32 %v615, %v616
  %743 = vmax.xlane.f32.xlu0 %v742
  %v744 = vpop.xlane.xlu0 %743
  %v745 = vmax.f32 %v617, %v651
  %v746 = vmax.f32 %v618, %v654
  %v747 = vmax.f32 %v619, %v657
  %v748 = vmax.f32 %v620, %v660
  %v749 = vmax.f32 %v621, %v663
  %v750 = vmax.f32 %v622, %v666
  %v751 = vmax.f32 %v623, %v669
  %v752 = vmax.f32 %v624, %v672
  %v753 = vmax.f32 %v625, %v675
  %v754 = vmax.f32 %v626, %v678
  %v755 = vmax.f32 %v627, %v681
  %v756 = vmax.f32 %v628, %v684
  %v757 = vmax.f32 %v629, %v687
  %v758 = vmax.f32 %v630, %v690
  %v759 = vmax.f32 %v631, %v693
  %v760 = vmax.f32 %v632, %v696
  %v761 = vmax.f32 %v633, %v699
  %v762 = vmax.f32 %v634, %v702
  %v763 = vmax.f32 %v635, %v705
  %v764 = vmax.f32 %v636, %v708
  %v765 = vmax.f32 %v637, %v711
  %v766 = vmax.f32 %v638, %v714
  %v767 = vmax.f32 %v639, %v717
  %v768 = vmax.f32 %v640, %v720
  %v769 = vmax.f32 %v641, %v723
  %v770 = vmax.f32 %v642, %v726
  %v771 = vmax.f32 %v643, %v729
  %v772 = vmax.f32 %v644, %v732
  %v773 = vmax.f32 %v645, %v735
  %v774 = vmax.f32 %v646, %v738
  %v775 = vmax.f32 %v647, %v741
  %v776 = vmax.f32 %v648, %v744
  %v777 = vsub.f32 %v617, %v745
  %v778 = vsub.f32 %v618, %v746
  %v779 = vsub.f32 %v619, %v747
  %v780 = vsub.f32 %v620, %v748
  %v781 = vsub.f32 %v621, %v749
  %v782 = vsub.f32 %v622, %v750
  %v783 = vsub.f32 %v623, %v751
  %v784 = vsub.f32 %v624, %v752
  %v785 = vsub.f32 %v625, %v753
  %v786 = vsub.f32 %v626, %v754
  %v787 = vsub.f32 %v627, %v755
  %v788 = vsub.f32 %v628, %v756
  %v789 = vsub.f32 %v629, %v757
  %v790 = vsub.f32 %v630, %v758
  %v791 = vsub.f32 %v631, %v759
  %v792 = vsub.f32 %v632, %v760
  %v793 = vsub.f32 %v633, %v761
  %v794 = vsub.f32 %v634, %v762
  %v795 = vsub.f32 %v635, %v763
  %v796 = vsub.f32 %v636, %v764
  %v797 = vsub.f32 %v637, %v765
  %v798 = vsub.f32 %v638, %v766
  %v799 = vsub.f32 %v639, %v767
  %v800 = vsub.f32 %v640, %v768
  %v801 = vsub.f32 %v641, %v769
  %v802 = vsub.f32 %v642, %v770
  %v803 = vsub.f32 %v643, %v771
  %v804 = vsub.f32 %v644, %v772
  %v805 = vsub.f32 %v645, %v773
  %v806 = vsub.f32 %v646, %v774
  %v807 = vsub.f32 %v647, %v775
  %v808 = vsub.f32 %v648, %v776
  %v809 = vmul.f32 %v777, 1.442695
  %v810 = vpow.pop %v809
  %v811 = vmul.f32 %v778, 1.442695
  %v812 = vpow.pop %v811
  %v813 = vmul.f32 %v779, 1.442695
  %v814 = vpow.pop %v813
  %v815 = vmul.f32 %v780, 1.442695
  %v816 = vpow.pop %v815
  %v817 = vmul.f32 %v781, 1.442695
  %v818 = vpow.pop %v817
  %v819 = vmul.f32 %v782, 1.442695
  %v820 = vpow.pop %v819
  %v821 = vmul.f32 %v783, 1.442695
  %v822 = vpow.pop %v821
  %v823 = vmul.f32 %v784, 1.442695
  %v824 = vpow.pop %v823
  %v825 = vmul.f32 %v785, 1.442695
  %v826 = vpow.pop %v825
  %v827 = vmul.f32 %v786, 1.442695
  %v828 = vpow.pop %v827
  %v829 = vmul.f32 %v787, 1.442695
  %v830 = vpow.pop %v829
  %v831 = vmul.f32 %v788, 1.442695
  %v832 = vpow.pop %v831
  %v833 = vmul.f32 %v789, 1.442695
  %v834 = vpow.pop %v833
  %v835 = vmul.f32 %v790, 1.442695
  %v836 = vpow.pop %v835
  %v837 = vmul.f32 %v791, 1.442695
  %v838 = vpow.pop %v837
  %v839 = vmul.f32 %v792, 1.442695
  %v840 = vpow.pop %v839
  %v841 = vmul.f32 %v793, 1.442695
  %v842 = vpow.pop %v841
  %v843 = vmul.f32 %v794, 1.442695
  %v844 = vpow.pop %v843
  %v845 = vmul.f32 %v795, 1.442695
  %v846 = vpow.pop %v845
  %v847 = vmul.f32 %v796, 1.442695
  %v848 = vpow.pop %v847
  %v849 = vmul.f32 %v797, 1.442695
  %v850 = vpow.pop %v849
  %v851 = vmul.f32 %v798, 1.442695
  %v852 = vpow.pop %v851
  %v853 = vmul.f32 %v799, 1.442695
  %v854 = vpow.pop %v853
  %v855 = vmul.f32 %v800, 1.442695
  %v856 = vpow.pop %v855
  %v857 = vmul.f32 %v801, 1.442695
  %v858 = vpow.pop %v857
  %v859 = vmul.f32 %v802, 1.442695
  %v860 = vpow.pop %v859
  %v861 = vmul.f32 %v803, 1.442695
  %v862 = vpow.pop %v861
  %v863 = vmul.f32 %v804, 1.442695
  %v864 = vpow.pop %v863
  %v865 = vmul.f32 %v805, 1.442695
  %v866 = vpow.pop %v865
  %v867 = vmul.f32 %v806, 1.442695
  %v868 = vpow.pop %v867
  %v869 = vmul.f32 %v807, 1.442695
  %v870 = vpow.pop %v869
  %v871 = vmul.f32 %v808, 1.442695
  %v872 = vpow.pop %v871
  %874 = vset.pattern.permute.xlu0 0
  %875 = vperm.xlu0 %874, %v745
  %v876 = vpop.permute.xlu0 %875
  %879 = vset.pattern.permute.xlu0 0
  %880 = vperm.xlu0 %879, %v746
  %v881 = vpop.permute.xlu0 %880
  %884 = vset.pattern.permute.xlu0 0
  %885 = vperm.xlu0 %884, %v747
  %v886 = vpop.permute.xlu0 %885
  %889 = vset.pattern.permute.xlu0 0
  %890 = vperm.xlu0 %889, %v748
  %v891 = vpop.permute.xlu0 %890
  %894 = vset.pattern.permute.xlu0 0
  %895 = vperm.xlu0 %894, %v749
  %v896 = vpop.permute.xlu0 %895
  %899 = vset.pattern.permute.xlu0 0
  %900 = vperm.xlu0 %899, %v750
  %v901 = vpop.permute.xlu0 %900
  %904 = vset.pattern.permute.xlu0 0
  %905 = vperm.xlu0 %904, %v751
  %v906 = vpop.permute.xlu0 %905
  %909 = vset.pattern.permute.xlu0 0
  %910 = vperm.xlu0 %909, %v752
  %v911 = vpop.permute.xlu0 %910
  %914 = vset.pattern.permute.xlu0 0
  %915 = vperm.xlu0 %914, %v753
  %v916 = vpop.permute.xlu0 %915
  %919 = vset.pattern.permute.xlu0 0
  %920 = vperm.xlu0 %919, %v754
  %v921 = vpop.permute.xlu0 %920
  %924 = vset.pattern.permute.xlu0 0
  %925 = vperm.xlu0 %924, %v755
  %v926 = vpop.permute.xlu0 %925
  %929 = vset.pattern.permute.xlu0 0
  %930 = vperm.xlu0 %929, %v756
  %v931 = vpop.permute.xlu0 %930
  %934 = vset.pattern.permute.xlu0 0
  %935 = vperm.xlu0 %934, %v757
  %v936 = vpop.permute.xlu0 %935
  %939 = vset.pattern.permute.xlu0 0
  %940 = vperm.xlu0 %939, %v758
  %v941 = vpop.permute.xlu0 %940
  %944 = vset.pattern.permute.xlu0 0
  %945 = vperm.xlu0 %944, %v759
  %v946 = vpop.permute.xlu0 %945
  %949 = vset.pattern.permute.xlu0 0
  %950 = vperm.xlu0 %949, %v760
  %v951 = vpop.permute.xlu0 %950
  %954 = vset.pattern.permute.xlu0 0
  %955 = vperm.xlu0 %954, %v761
  %v956 = vpop.permute.xlu0 %955
  %959 = vset.pattern.permute.xlu0 0
  %960 = vperm.xlu0 %959, %v762
  %v961 = vpop.permute.xlu0 %960
  %964 = vset.pattern.permute.xlu0 0
  %965 = vperm.xlu0 %964, %v763
  %v966 = vpop.permute.xlu0 %965
  %969 = vset.pattern.permute.xlu0 0
  %970 = vperm.xlu0 %969, %v764
  %v971 = vpop.permute.xlu0 %970
  %974 = vset.pattern.permute.xlu0 0
  %975 = vperm.xlu0 %974, %v765
  %v976 = vpop.permute.xlu0 %975
  %979 = vset.pattern.permute.xlu0 0
  %980 = vperm.xlu0 %979, %v766
  %v981 = vpop.permute.xlu0 %980
  %984 = vset.pattern.permute.xlu0 0
  %985 = vperm.xlu0 %984, %v767
  %v986 = vpop.permute.xlu0 %985
  %989 = vset.pattern.permute.xlu0 0
  %990 = vperm.xlu0 %989, %v768
  %v991 = vpop.permute.xlu0 %990
  %994 = vset.pattern.permute.xlu0 0
  %995 = vperm.xlu0 %994, %v769
  %v996 = vpop.permute.xlu0 %995
  %999 = vset.pattern.permute.xlu0 0
  %1000 = vperm.xlu0 %999, %v770
  %v1001 = vpop.permute.xlu0 %1000
  %1004 = vset.pattern.permute.xlu0 0
  %1005 = vperm.xlu0 %1004, %v771
  %v1006 = vpop.permute.xlu0 %1005
  %1009 = vset.pattern.permute.xlu0 0
  %1010 = vperm.xlu0 %1009, %v772
  %v1011 = vpop.permute.xlu0 %1010
  %1014 = vset.pattern.permute.xlu0 0
  %1015 = vperm.xlu0 %1014, %v773
  %v1016 = vpop.permute.xlu0 %1015
  %1019 = vset.pattern.permute.xlu0 0
  %1020 = vperm.xlu0 %1019, %v774
  %v1021 = vpop.permute.xlu0 %1020
  %1024 = vset.pattern.permute.xlu0 0
  %1025 = vperm.xlu0 %1024, %v775
  %v1026 = vpop.permute.xlu0 %1025
  %1029 = vset.pattern.permute.xlu0 0
  %1030 = vperm.xlu0 %1029, %v776
  %v1031 = vpop.permute.xlu0 %1030
  %v1033 = vsub.f32 %v553, %v876
  %v1034 = vsub.f32 %v554, %v876
  %v1035 = vsub.f32 %v555, %v881
  %v1036 = vsub.f32 %v556, %v881
  %v1037 = vsub.f32 %v557, %v886
  %v1038 = vsub.f32 %v558, %v886
  %v1039 = vsub.f32 %v559, %v891
  %v1040 = vsub.f32 %v560, %v891
  %v1041 = vsub.f32 %v561, %v896
  %v1042 = vsub.f32 %v562, %v896
  %v1043 = vsub.f32 %v563, %v901
  %v1044 = vsub.f32 %v564, %v901
  %v1045 = vsub.f32 %v565, %v906
  %v1046 = vsub.f32 %v566, %v906
  %v1047 = vsub.f32 %v567, %v911
  %v1048 = vsub.f32 %v568, %v911
  %v1049 = vsub.f32 %v569, %v916
  %v1050 = vsub.f32 %v570, %v916
  %v1051 = vsub.f32 %v571, %v921
  %v1052 = vsub.f32 %v572, %v921
  %v1053 = vsub.f32 %v573, %v926
  %v1054 = vsub.f32 %v574, %v926
  %v1055 = vsub.f32 %v575, %v931
  %v1056 = vsub.f32 %v576, %v931
  %v1057 = vsub.f32 %v577, %v936
  %v1058 = vsub.f32 %v578, %v936
  %v1059 = vsub.f32 %v579, %v941
  %v1060 = vsub.f32 %v580, %v941
  %v1061 = vsub.f32 %v581, %v946
  %v1062 = vsub.f32 %v582, %v946
  %v1063 = vsub.f32 %v583, %v951
  %v1064 = vsub.f32 %v584, %v951
  %v1065 = vsub.f32 %v585, %v956
  %v1066 = vsub.f32 %v586, %v956
  %v1067 = vsub.f32 %v587, %v961
  %v1068 = vsub.f32 %v588, %v961
  %v1069 = vsub.f32 %v589, %v966
  %v1070 = vsub.f32 %v590, %v966
  %v1071 = vsub.f32 %v591, %v971
  %v1072 = vsub.f32 %v592, %v971
  %v1073 = vsub.f32 %v593, %v976
  %v1074 = vsub.f32 %v594, %v976
  %v1075 = vsub.f32 %v595, %v981
  %v1076 = vsub.f32 %v596, %v981
  %v1077 = vsub.f32 %v597, %v986
  %v1078 = vsub.f32 %v598, %v986
  %v1079 = vsub.f32 %v599, %v991
  %v1080 = vsub.f32 %v600, %v991
  %v1081 = vsub.f32 %v601, %v996
  %v1082 = vsub.f32 %v602, %v996
  %v1083 = vsub.f32 %v603, %v1001
  %v1084 = vsub.f32 %v604, %v1001
  %v1085 = vsub.f32 %v605, %v1006
  %v1086 = vsub.f32 %v606, %v1006
  %v1087 = vsub.f32 %v607, %v1011
  %v1088 = vsub.f32 %v608, %v1011
  %v1089 = vsub.f32 %v609, %v1016
  %v1090 = vsub.f32 %v610, %v1016
  %v1091 = vsub.f32 %v611, %v1021
  %v1092 = vsub.f32 %v612, %v1021
  %v1093 = vsub.f32 %v613, %v1026
  %v1094 = vsub.f32 %v614, %v1026
  %v1095 = vsub.f32 %v615, %v1031
  %v1096 = vsub.f32 %v616, %v1031
  %v1097 = vmul.f32 %v1033, 1.442695
  %v1098 = vpow.pop %v1097
  %v1099 = vmul.f32 %v1034, 1.442695
  %v1100 = vpow.pop %v1099
  %v1101 = vmul.f32 %v1035, 1.442695
  %v1102 = vpow.pop %v1101
  %v1103 = vmul.f32 %v1036, 1.442695
  %v1104 = vpow.pop %v1103
  %v1105 = vmul.f32 %v1037, 1.442695
  %v1106 = vpow.pop %v1105
  %v1107 = vmul.f32 %v1038, 1.442695
  %v1108 = vpow.pop %v1107
  %v1109 = vmul.f32 %v1039, 1.442695
  %v1110 = vpow.pop %v1109
  %v1111 = vmul.f32 %v1040, 1.442695
  %v1112 = vpow.pop %v1111
  %v1113 = vmul.f32 %v1041, 1.442695
  %v1114 = vpow.pop %v1113
  %v1115 = vmul.f32 %v1042, 1.442695
  %v1116 = vpow.pop %v1115
  %v1117 = vmul.f32 %v1043, 1.442695
  %v1118 = vpow.pop %v1117
  %v1119 = vmul.f32 %v1044, 1.442695
  %v1120 = vpow.pop %v1119
  %v1121 = vmul.f32 %v1045, 1.442695
  %v1122 = vpow.pop %v1121
  %v1123 = vmul.f32 %v1046, 1.442695
  %v1124 = vpow.pop %v1123
  %v1125 = vmul.f32 %v1047, 1.442695
  %v1126 = vpow.pop %v1125
  %v1127 = vmul.f32 %v1048, 1.442695
  %v1128 = vpow.pop %v1127
  %v1129 = vmul.f32 %v1049, 1.442695
  %v1130 = vpow.pop %v1129
  %v1131 = vmul.f32 %v1050, 1.442695
  %v1132 = vpow.pop %v1131
  %v1133 = vmul.f32 %v1051, 1.442695
  %v1134 = vpow.pop %v1133
  %v1135 = vmul.f32 %v1052, 1.442695
  %v1136 = vpow.pop %v1135
  %v1137 = vmul.f32 %v1053, 1.442695
  %v1138 = vpow.pop %v1137
  %v1139 = vmul.f32 %v1054, 1.442695
  %v1140 = vpow.pop %v1139
  %v1141 = vmul.f32 %v1055, 1.442695
  %v1142 = vpow.pop %v1141
  %v1143 = vmul.f32 %v1056, 1.442695
  %v1144 = vpow.pop %v1143
  %v1145 = vmul.f32 %v1057, 1.442695
  %v1146 = vpow.pop %v1145
  %v1147 = vmul.f32 %v1058, 1.442695
  %v1148 = vpow.pop %v1147
  %v1149 = vmul.f32 %v1059, 1.442695
  %v1150 = vpow.pop %v1149
  %v1151 = vmul.f32 %v1060, 1.442695
  %v1152 = vpow.pop %v1151
  %v1153 = vmul.f32 %v1061, 1.442695
  %v1154 = vpow.pop %v1153
  %v1155 = vmul.f32 %v1062, 1.442695
  %v1156 = vpow.pop %v1155
  %v1157 = vmul.f32 %v1063, 1.442695
  %v1158 = vpow.pop %v1157
  %v1159 = vmul.f32 %v1064, 1.442695
  %v1160 = vpow.pop %v1159
  %v1161 = vmul.f32 %v1065, 1.442695
  %v1162 = vpow.pop %v1161
  %v1163 = vmul.f32 %v1066, 1.442695
  %v1164 = vpow.pop %v1163
  %v1165 = vmul.f32 %v1067, 1.442695
  %v1166 = vpow.pop %v1165
  %v1167 = vmul.f32 %v1068, 1.442695
  %v1168 = vpow.pop %v1167
  %v1169 = vmul.f32 %v1069, 1.442695
  %v1170 = vpow.pop %v1169
  %v1171 = vmul.f32 %v1070, 1.442695
  %v1172 = vpow.pop %v1171
  %v1173 = vmul.f32 %v1071, 1.442695
  %v1174 = vpow.pop %v1173
  %v1175 = vmul.f32 %v1072, 1.442695
  %v1176 = vpow.pop %v1175
  %v1177 = vmul.f32 %v1073, 1.442695
  %v1178 = vpow.pop %v1177
  %v1179 = vmul.f32 %v1074, 1.442695
  %v1180 = vpow.pop %v1179
  %v1181 = vmul.f32 %v1075, 1.442695
  %v1182 = vpow.pop %v1181
  %v1183 = vmul.f32 %v1076, 1.442695
  %v1184 = vpow.pop %v1183
  %v1185 = vmul.f32 %v1077, 1.442695
  %v1186 = vpow.pop %v1185
  %v1187 = vmul.f32 %v1078, 1.442695
  %v1188 = vpow.pop %v1187
  %v1189 = vmul.f32 %v1079, 1.442695
  %v1190 = vpow.pop %v1189
  %v1191 = vmul.f32 %v1080, 1.442695
  %v1192 = vpow.pop %v1191
  %v1193 = vmul.f32 %v1081, 1.442695
  %v1194 = vpow.pop %v1193
  %v1195 = vmul.f32 %v1082, 1.442695
  %v1196 = vpow.pop %v1195
  %v1197 = vmul.f32 %v1083, 1.442695
  %v1198 = vpow.pop %v1197
  %v1199 = vmul.f32 %v1084, 1.442695
  %v1200 = vpow.pop %v1199
  %v1201 = vmul.f32 %v1085, 1.442695
  %v1202 = vpow.pop %v1201
  %v1203 = vmul.f32 %v1086, 1.442695
  %v1204 = vpow.pop %v1203
  %v1205 = vmul.f32 %v1087, 1.442695
  %v1206 = vpow.pop %v1205
  %v1207 = vmul.f32 %v1088, 1.442695
  %v1208 = vpow.pop %v1207
  %v1209 = vmul.f32 %v1089, 1.442695
  %v1210 = vpow.pop %v1209
  %v1211 = vmul.f32 %v1090, 1.442695
  %v1212 = vpow.pop %v1211
  %v1213 = vmul.f32 %v1091, 1.442695
  %v1214 = vpow.pop %v1213
  %v1215 = vmul.f32 %v1092, 1.442695
  %v1216 = vpow.pop %v1215
  %v1217 = vmul.f32 %v1093, 1.442695
  %v1218 = vpow.pop %v1217
  %v1219 = vmul.f32 %v1094, 1.442695
  %v1220 = vpow.pop %v1219
  %v1221 = vmul.f32 %v1095, 1.442695
  %v1222 = vpow.pop %v1221
  %v1223 = vmul.f32 %v1096, 1.442695
  %v1224 = vpow.pop %v1223
  %v1225 = vld [vmem:[#allocation3] sm:$0xff]
  %v1226 = vld [vmem:[#allocation3 + $0x8] sm:$0xff]
  %v1227 = vld [vmem:[#allocation3 + $0x10] sm:$0xff]
  %v1228 = vld [vmem:[#allocation3 + $0x18] sm:$0xff]
  %v1229 = vld [vmem:[#allocation3 + $0x20] sm:$0xff]
  %v1230 = vld [vmem:[#allocation3 + $0x28] sm:$0xff]
  %v1231 = vld [vmem:[#allocation3 + $0x30] sm:$0xff]
  %v1232 = vld [vmem:[#allocation3 + $0x38] sm:$0xff]
  %v1233 = vld [vmem:[#allocation3 + $0x40] sm:$0xff]
  %v1234 = vld [vmem:[#allocation3 + $0x48] sm:$0xff]
  %v1235 = vld [vmem:[#allocation3 + $0x50] sm:$0xff]
  %v1236 = vld [vmem:[#allocation3 + $0x58] sm:$0xff]
  %v1237 = vld [vmem:[#allocation3 + $0x60] sm:$0xff]
  %v1238 = vld [vmem:[#allocation3 + $0x68] sm:$0xff]
  %v1239 = vld [vmem:[#allocation3 + $0x70] sm:$0xff]
  %v1240 = vld [vmem:[#allocation3 + $0x78] sm:$0xff]
  %v1241 = vld [vmem:[#allocation3 + $0x80] sm:$0xff]
  %v1242 = vld [vmem:[#allocation3 + $0x88] sm:$0xff]
  %v1243 = vld [vmem:[#allocation3 + $0x90] sm:$0xff]
  %v1244 = vld [vmem:[#allocation3 + $0x98] sm:$0xff]
  %v1245 = vld [vmem:[#allocation3 + $0xa0] sm:$0xff]
  %v1246 = vld [vmem:[#allocation3 + $0xa8] sm:$0xff]
  %v1247 = vld [vmem:[#allocation3 + $0xb0] sm:$0xff]
  %v1248 = vld [vmem:[#allocation3 + $0xb8] sm:$0xff]
  %v1249 = vld [vmem:[#allocation3 + $0xc0] sm:$0xff]
  %v1250 = vld [vmem:[#allocation3 + $0xc8] sm:$0xff]
  %v1251 = vld [vmem:[#allocation3 + $0xd0] sm:$0xff]
  %v1252 = vld [vmem:[#allocation3 + $0xd8] sm:$0xff]
  %v1253 = vld [vmem:[#allocation3 + $0xe0] sm:$0xff]
  %v1254 = vld [vmem:[#allocation3 + $0xe8] sm:$0xff]
  %v1255 = vld [vmem:[#allocation3 + $0xf0] sm:$0xff]
  %v1256 = vld [vmem:[#allocation3 + $0xf8] sm:$0xff]
  %v1257 = vmul.f32 %v810, %v1225
  %v1258 = vmul.f32 %v812, %v1226
  %v1259 = vmul.f32 %v814, %v1227
  %v1260 = vmul.f32 %v816, %v1228
  %v1261 = vmul.f32 %v818, %v1229
  %v1262 = vmul.f32 %v820, %v1230
  %v1263 = vmul.f32 %v822, %v1231
  %v1264 = vmul.f32 %v824, %v1232
  %v1265 = vmul.f32 %v826, %v1233
  %v1266 = vmul.f32 %v828, %v1234
  %v1267 = vmul.f32 %v830, %v1235
  %v1268 = vmul.f32 %v832, %v1236
  %v1269 = vmul.f32 %v834, %v1237
  %v1270 = vmul.f32 %v836, %v1238
  %v1271 = vmul.f32 %v838, %v1239
  %v1272 = vmul.f32 %v840, %v1240
  %v1273 = vmul.f32 %v842, %v1241
  %v1274 = vmul.f32 %v844, %v1242
  %v1275 = vmul.f32 %v846, %v1243
  %v1276 = vmul.f32 %v848, %v1244
  %v1277 = vmul.f32 %v850, %v1245
  %v1278 = vmul.f32 %v852, %v1246
  %v1279 = vmul.f32 %v854, %v1247
  %v1280 = vmul.f32 %v856, %v1248
  %v1281 = vmul.f32 %v858, %v1249
  %v1282 = vmul.f32 %v860, %v1250
  %v1283 = vmul.f32 %v862, %v1251
  %v1284 = vmul.f32 %v864, %v1252
  %v1285 = vmul.f32 %v866, %v1253
  %v1286 = vmul.f32 %v868, %v1254
  %v1287 = vmul.f32 %v870, %v1255
  %v1288 = vmul.f32 %v872, %v1256
  %v1289 = vadd.f32 %v1098, %v1100
  %1290 = vadd.xlane.f32.xlu0 %v1289
  %v1291 = vpop.xlane.xlu0 %1290
  %v1292 = vadd.f32 %v1102, %v1104
  %1293 = vadd.xlane.f32.xlu0 %v1292
  %v1294 = vpop.xlane.xlu0 %1293
  %v1295 = vadd.f32 %v1106, %v1108
  %1296 = vadd.xlane.f32.xlu0 %v1295
  %v1297 = vpop.xlane.xlu0 %1296
  %v1298 = vadd.f32 %v1110, %v1112
  %1299 = vadd.xlane.f32.xlu0 %v1298
  %v1300 = vpop.xlane.xlu0 %1299
  %v1301 = vadd.f32 %v1114, %v1116
  %1302 = vadd.xlane.f32.xlu0 %v1301
  %v1303 = vpop.xlane.xlu0 %1302
  %v1304 = vadd.f32 %v1118, %v1120
  %1305 = vadd.xlane.f32.xlu0 %v1304
  %v1306 = vpop.xlane.xlu0 %1305
  %v1307 = vadd.f32 %v1122, %v1124
  %1308 = vadd.xlane.f32.xlu0 %v1307
  %v1309 = vpop.xlane.xlu0 %1308
  %v1310 = vadd.f32 %v1126, %v1128
  %1311 = vadd.xlane.f32.xlu0 %v1310
  %v1312 = vpop.xlane.xlu0 %1311
  %v1313 = vadd.f32 %v1130, %v1132
  %1314 = vadd.xlane.f32.xlu0 %v1313
  %v1315 = vpop.xlane.xlu0 %1314
  %v1316 = vadd.f32 %v1134, %v1136
  %1317 = vadd.xlane.f32.xlu0 %v1316
  %v1318 = vpop.xlane.xlu0 %1317
  %v1319 = vadd.f32 %v1138, %v1140
  %1320 = vadd.xlane.f32.xlu0 %v1319
  %v1321 = vpop.xlane.xlu0 %1320
  %v1322 = vadd.f32 %v1142, %v1144
  %1323 = vadd.xlane.f32.xlu0 %v1322
  %v1324 = vpop.xlane.xlu0 %1323
  %v1325 = vadd.f32 %v1146, %v1148
  %1326 = vadd.xlane.f32.xlu0 %v1325
  %v1327 = vpop.xlane.xlu0 %1326
  %v1328 = vadd.f32 %v1150, %v1152
  %1329 = vadd.xlane.f32.xlu0 %v1328
  %v1330 = vpop.xlane.xlu0 %1329
  %v1331 = vadd.f32 %v1154, %v1156
  %1332 = vadd.xlane.f32.xlu0 %v1331
  %v1333 = vpop.xlane.xlu0 %1332
  %v1334 = vadd.f32 %v1158, %v1160
  %1335 = vadd.xlane.f32.xlu0 %v1334
  %v1336 = vpop.xlane.xlu0 %1335
  %v1337 = vadd.f32 %v1162, %v1164
  %1338 = vadd.xlane.f32.xlu0 %v1337
  %v1339 = vpop.xlane.xlu0 %1338
  %v1340 = vadd.f32 %v1166, %v1168
  %1341 = vadd.xlane.f32.xlu0 %v1340
  %v1342 = vpop.xlane.xlu0 %1341
  %v1343 = vadd.f32 %v1170, %v1172
  %1344 = vadd.xlane.f32.xlu0 %v1343
  %v1345 = vpop.xlane.xlu0 %1344
  %v1346 = vadd.f32 %v1174, %v1176
  %1347 = vadd.xlane.f32.xlu0 %v1346
  %v1348 = vpop.xlane.xlu0 %1347
  %v1349 = vadd.f32 %v1178, %v1180
  %1350 = vadd.xlane.f32.xlu0 %v1349
  %v1351 = vpop.xlane.xlu0 %1350
  %v1352 = vadd.f32 %v1182, %v1184
  %1353 = vadd.xlane.f32.xlu0 %v1352
  %v1354 = vpop.xlane.xlu0 %1353
  %v1355 = vadd.f32 %v1186, %v1188
  %1356 = vadd.xlane.f32.xlu0 %v1355
  %v1357 = vpop.xlane.xlu0 %1356
  %v1358 = vadd.f32 %v1190, %v1192
  %1359 = vadd.xlane.f32.xlu0 %v1358
  %v1360 = vpop.xlane.xlu0 %1359
  %v1361 = vadd.f32 %v1194, %v1196
  %1362 = vadd.xlane.f32.xlu0 %v1361
  %v1363 = vpop.xlane.xlu0 %1362
  %v1364 = vadd.f32 %v1198, %v1200
  %1365 = vadd.xlane.f32.xlu0 %v1364
  %v1366 = vpop.xlane.xlu0 %1365
  %v1367 = vadd.f32 %v1202, %v1204
  %1368 = vadd.xlane.f32.xlu0 %v1367
  %v1369 = vpop.xlane.xlu0 %1368
  %v1370 = vadd.f32 %v1206, %v1208
  %1371 = vadd.xlane.f32.xlu0 %v1370
  %v1372 = vpop.xlane.xlu0 %1371
  %v1373 = vadd.f32 %v1210, %v1212
  %1374 = vadd.xlane.f32.xlu0 %v1373
  %v1375 = vpop.xlane.xlu0 %1374
  %v1376 = vadd.f32 %v1214, %v1216
  %1377 = vadd.xlane.f32.xlu0 %v1376
  %v1378 = vpop.xlane.xlu0 %1377
  %v1379 = vadd.f32 %v1218, %v1220
  %1380 = vadd.xlane.f32.xlu0 %v1379
  %v1381 = vpop.xlane.xlu0 %1380
  %v1382 = vadd.f32 %v1222, %v1224
  %1383 = vadd.xlane.f32.xlu0 %v1382
  %v1384 = vpop.xlane.xlu0 %1383
  %v1385 = vadd.f32 %v1257, %v1291
  %v1386 = vadd.f32 %v1258, %v1294
  %v1387 = vadd.f32 %v1259, %v1297
  %v1388 = vadd.f32 %v1260, %v1300
  %v1389 = vadd.f32 %v1261, %v1303
  %v1390 = vadd.f32 %v1262, %v1306
  %v1391 = vadd.f32 %v1263, %v1309
  %v1392 = vadd.f32 %v1264, %v1312
  %v1393 = vadd.f32 %v1265, %v1315
  %v1394 = vadd.f32 %v1266, %v1318
  %v1395 = vadd.f32 %v1267, %v1321
  %v1396 = vadd.f32 %v1268, %v1324
  %v1397 = vadd.f32 %v1269, %v1327
  %v1398 = vadd.f32 %v1270, %v1330
  %v1399 = vadd.f32 %v1271, %v1333
  %v1400 = vadd.f32 %v1272, %v1336
  %v1401 = vadd.f32 %v1273, %v1339
  %v1402 = vadd.f32 %v1274, %v1342
  %v1403 = vadd.f32 %v1275, %v1345
  %v1404 = vadd.f32 %v1276, %v1348
  %v1405 = vadd.f32 %v1277, %v1351
  %v1406 = vadd.f32 %v1278, %v1354
  %v1407 = vadd.f32 %v1279, %v1357
  %v1408 = vadd.f32 %v1280, %v1360
  %v1409 = vadd.f32 %v1281, %v1363
  %v1410 = vadd.f32 %v1282, %v1366
  %v1411 = vadd.f32 %v1283, %v1369
  %v1412 = vadd.f32 %v1284, %v1372
  %v1413 = vadd.f32 %v1285, %v1375
  %v1414 = vadd.f32 %v1286, %v1378
  %v1415 = vadd.f32 %v1287, %v1381
  %v1416 = vadd.f32 %v1288, %v1384
  %vm1417 = vcmask 7168
  %1418 = vst.msk [vmem:[#allocation3] sm:$0xff] %vm1417, %v1385
  %1419 = vst.msk [vmem:[#allocation3 + $0x8] sm:$0xff] %vm1417, %v1386
  %1420 = vst.msk [vmem:[#allocation3 + $0x10] sm:$0xff] %vm1417, %v1387
  %1421 = vst.msk [vmem:[#allocation3 + $0x18] sm:$0xff] %vm1417, %v1388
  %1422 = vst.msk [vmem:[#allocation3 + $0x20] sm:$0xff] %vm1417, %v1389
  %1423 = vst.msk [vmem:[#allocation3 + $0x28] sm:$0xff] %vm1417, %v1390
  %1424 = vst.msk [vmem:[#allocation3 + $0x30] sm:$0xff] %vm1417, %v1391
  %1425 = vst.msk [vmem:[#allocation3 + $0x38] sm:$0xff] %vm1417, %v1392
  %1426 = vst.msk [vmem:[#allocation3 + $0x40] sm:$0xff] %vm1417, %v1393
  %1427 = vst.msk [vmem:[#allocation3 + $0x48] sm:$0xff] %vm1417, %v1394
  %1428 = vst.msk [vmem:[#allocation3 + $0x50] sm:$0xff] %vm1417, %v1395
  %1429 = vst.msk [vmem:[#allocation3 + $0x58] sm:$0xff] %vm1417, %v1396
  %1430 = vst.msk [vmem:[#allocation3 + $0x60] sm:$0xff] %vm1417, %v1397
  %1431 = vst.msk [vmem:[#allocation3 + $0x68] sm:$0xff] %vm1417, %v1398
  %1432 = vst.msk [vmem:[#allocation3 + $0x70] sm:$0xff] %vm1417, %v1399
  %1433 = vst.msk [vmem:[#allocation3 + $0x78] sm:$0xff] %vm1417, %v1400
  %1434 = vst.msk [vmem:[#allocation3 + $0x80] sm:$0xff] %vm1417, %v1401
  %1435 = vst.msk [vmem:[#allocation3 + $0x88] sm:$0xff] %vm1417, %v1402
  %1436 = vst.msk [vmem:[#allocation3 + $0x90] sm:$0xff] %vm1417, %v1403
  %1437 = vst.msk [vmem:[#allocation3 + $0x98] sm:$0xff] %vm1417, %v1404
  %1438 = vst.msk [vmem:[#allocation3 + $0xa0] sm:$0xff] %vm1417, %v1405
  %1439 = vst.msk [vmem:[#allocation3 + $0xa8] sm:$0xff] %vm1417, %v1406
  %1440 = vst.msk [vmem:[#allocation3 + $0xb0] sm:$0xff] %vm1417, %v1407
  %1441 = vst.msk [vmem:[#allocation3 + $0xb8] sm:$0xff] %vm1417, %v1408
  %1442 = vst.msk [vmem:[#allocation3 + $0xc0] sm:$0xff] %vm1417, %v1409
  %1443 = vst.msk [vmem:[#allocation3 + $0xc8] sm:$0xff] %vm1417, %v1410
  %1444 = vst.msk [vmem:[#allocation3 + $0xd0] sm:$0xff] %vm1417, %v1411
  %1445 = vst.msk [vmem:[#allocation3 + $0xd8] sm:$0xff] %vm1417, %v1412
  %1446 = vst.msk [vmem:[#allocation3 + $0xe0] sm:$0xff] %vm1417, %v1413
  %1447 = vst.msk [vmem:[#allocation3 + $0xe8] sm:$0xff] %vm1417, %v1414
  %1448 = vst.msk [vmem:[#allocation3 + $0xf0] sm:$0xff] %vm1417, %v1415
  %1449 = vst.msk [vmem:[#allocation3 + $0xf8] sm:$0xff] %vm1417, %v1416
  %v1450 = vpack.c.bf16 %v1102, %v1098
  %v1451 = vpack.c.bf16 %v1104, %v1100
  %v1452 = vpack.c.bf16 %v1110, %v1106
  %v1453 = vpack.c.bf16 %v1112, %v1108
  %v1454 = vpack.c.bf16 %v1118, %v1114
  %v1455 = vpack.c.bf16 %v1120, %v1116
  %v1456 = vpack.c.bf16 %v1126, %v1122
  %v1457 = vpack.c.bf16 %v1128, %v1124
  %v1458 = vpack.c.bf16 %v1134, %v1130
  %v1459 = vpack.c.bf16 %v1136, %v1132
  %v1460 = vpack.c.bf16 %v1142, %v1138
  %v1461 = vpack.c.bf16 %v1144, %v1140
  %v1462 = vpack.c.bf16 %v1150, %v1146
  %v1463 = vpack.c.bf16 %v1152, %v1148
  %v1464 = vpack.c.bf16 %v1158, %v1154
  %v1465 = vpack.c.bf16 %v1160, %v1156
  %v1466 = vpack.c.bf16 %v1166, %v1162
  %v1467 = vpack.c.bf16 %v1168, %v1164
  %v1468 = vpack.c.bf16 %v1174, %v1170
  %v1469 = vpack.c.bf16 %v1176, %v1172
  %v1470 = vpack.c.bf16 %v1182, %v1178
  %v1471 = vpack.c.bf16 %v1184, %v1180
  %v1472 = vpack.c.bf16 %v1190, %v1186
  %v1473 = vpack.c.bf16 %v1192, %v1188
  %v1474 = vpack.c.bf16 %v1198, %v1194
  %v1475 = vpack.c.bf16 %v1200, %v1196
  %v1476 = vpack.c.bf16 %v1206, %v1202
  %v1477 = vpack.c.bf16 %v1208, %v1204
  %v1478 = vpack.c.bf16 %v1214, %v1210
  %v1479 = vpack.c.bf16 %v1216, %v1212
  %v1480 = vpack.c.bf16 %v1222, %v1218
  %v1481 = vpack.c.bf16 %v1224, %v1220
  %v1514 = vunpack.c.l.b16 %v117
  %v1515 = vunpack.c.l.b16 %v118
  %v1516 = vunpack.c.l.b16 %v119
  %v1517 = vunpack.c.l.b16 %v120
  %v1518 = vunpack.c.l.b16 %v121
  %v1519 = vunpack.c.l.b16 %v122
  %v1520 = vunpack.c.l.b16 %v123
  %v1521 = vunpack.c.l.b16 %v124
  %v1522 = vunpack.c.l.b16 %v125
  %v1523 = vunpack.c.l.b16 %v126
  %v1524 = vunpack.c.l.b16 %v127
  %v1525 = vunpack.c.l.b16 %v128
  %v1526 = vunpack.c.l.b16 %v129
  %v1527 = vunpack.c.l.b16 %v130
  %v1528 = vunpack.c.l.b16 %v131
  %v1529 = vunpack.c.l.b16 %v132
  %v1530 = vunpack.c.l.b16 %v133
  %v1531 = vunpack.c.l.b16 %v134
  %v1532 = vunpack.c.l.b16 %v135
  %v1533 = vunpack.c.l.b16 %v136
  %v1534 = vunpack.c.l.b16 %v137
  %v1535 = vunpack.c.l.b16 %v138
  %v1536 = vunpack.c.l.b16 %v139
  %v1537 = vunpack.c.l.b16 %v140
  %v1538 = vunpack.c.l.b16 %v141
  %v1539 = vunpack.c.l.b16 %v142
  %v1540 = vunpack.c.l.b16 %v143
  %v1541 = vunpack.c.l.b16 %v144
  %v1542 = vunpack.c.l.b16 %v145
  %v1543 = vunpack.c.l.b16 %v146
  %v1544 = vunpack.c.l.b16 %v147
  %v1545 = vunpack.c.l.b16 %v148
  %v1546 = vpack.c.b16 %v1515, %v1514
  %v1547 = vpack.c.b16 %v1517, %v1516
  %v1548 = vpack.c.b16 %v1519, %v1518
  %v1549 = vpack.c.b16 %v1521, %v1520
  %v1550 = vpack.c.b16 %v1523, %v1522
  %v1551 = vpack.c.b16 %v1525, %v1524
  %v1552 = vpack.c.b16 %v1527, %v1526
  %v1553 = vpack.c.b16 %v1529, %v1528
  %v1554 = vpack.c.b16 %v1531, %v1530
  %v1555 = vpack.c.b16 %v1533, %v1532
  %v1556 = vpack.c.b16 %v1535, %v1534
  %v1557 = vpack.c.b16 %v1537, %v1536
  %v1558 = vpack.c.b16 %v1539, %v1538
  %v1559 = vpack.c.b16 %v1541, %v1540
  %v1560 = vpack.c.b16 %v1543, %v1542
  %v1561 = vpack.c.b16 %v1545, %v1544
  %1578 = vmatprep.subr.bf16.mxu0 0
  %1579 = vmatpush1.bf16.msra.mxu0 %v1546
  %1580 = vmatprep.subr.bf16.mxu0 0
  %1581 = vmatpush1.bf16.msra.mxu0 %v1547
  %1582 = vmatprep.subr.bf16.mxu0 0
  %1583 = vmatpush1.bf16.msra.mxu0 %v1548
  %1584 = vmatprep.subr.bf16.mxu0 0
  %1585 = vmatpush1.bf16.msra.mxu0 %v1549
  %1586 = vmatprep.subr.bf16.mxu0 0
  %1587 = vmatpush1.bf16.msra.mxu0 %v1550
  %1588 = vmatprep.subr.bf16.mxu0 0
  %1589 = vmatpush1.bf16.msra.mxu0 %v1551
  %1590 = vmatprep.subr.bf16.mxu0 0
  %1591 = vmatpush1.bf16.msra.mxu0 %v1552
  %1592 = vmatprep.subr.bf16.mxu0 0
  %1593 = vmatpush1.bf16.msra.mxu0 %v1553
  %1594 = vmatprep.subr.bf16.mxu0 0
  %1595 = vmatpush1.bf16.msra.mxu0 %v1554
  %1596 = vmatprep.subr.bf16.mxu0 0
  %1597 = vmatpush1.bf16.msra.mxu0 %v1555
  %1598 = vmatprep.subr.bf16.mxu0 0
  %1599 = vmatpush1.bf16.msra.mxu0 %v1556
  %1600 = vmatprep.subr.bf16.mxu0 0
  %1601 = vmatpush1.bf16.msra.mxu0 %v1557
  %1602 = vmatprep.subr.bf16.mxu0 0
  %1603 = vmatpush1.bf16.msra.mxu0 %v1558
  %1604 = vmatprep.subr.bf16.mxu0 0
  %1605 = vmatpush1.bf16.msra.mxu0 %v1559
  %1606 = vmatprep.subr.bf16.mxu0 0
  %1607 = vmatpush1.bf16.msra.mxu0 %v1560
  %1608 = vmatprep.subr.bf16.mxu0 0
  %1609 = vmatpush1.bf16.msra.mxu0 %v1561
  %1610 = vmatprep.mubr.bf16.mxu0 %v1451
  %1611 = vmatmul.mubr.bf16.gmra.mrb[0].mxu0 %v1450
  %v1612 = vpop.f32.mrb[0].mxu0
  %v1613 = vadd.f32 0.0, %v1612
  %v1614 = vpop.f32.mrb[0].mxu0
  %v1615 = vpop.f32.mrb[0].mxu0
  %v1616 = vadd.f32 0.0, %v1615
  %v1617 = vpop.f32.mrb[0].mxu0
  %1618 = vmatprep.mubr.bf16.mxu0 %v1453
  %1619 = vmatmul.mubr.bf16.gmra.mrb[0].mxu0 %v1452
  %v1620 = vpop.f32.mrb[0].mxu0
  %v1621 = vadd.f32 0.0, %v1620
  %v1622 = vpop.f32.mrb[0].mxu0
  %v1623 = vpop.f32.mrb[0].mxu0
  %v1624 = vadd.f32 0.0, %v1623
  %v1625 = vpop.f32.mrb[0].mxu0
  %1626 = vmatprep.mubr.bf16.mxu0 %v1455
  %1627 = vmatmul.mubr.bf16.gmra.mrb[0].mxu0 %v1454
  %v1628 = vpop.f32.mrb[0].mxu0
  %v1629 = vadd.f32 0.0, %v1628
  %v1630 = vpop.f32.mrb[0].mxu0
  %v1631 = vpop.f32.mrb[0].mxu0
  %v1632 = vadd.f32 0.0, %v1631
  %v1633 = vpop.f32.mrb[0].mxu0
  %1634 = vmatprep.mubr.bf16.mxu0 %v1457
  %1635 = vmatmul.mubr.bf16.gmra.mrb[0].mxu0 %v1456
  %v1636 = vpop.f32.mrb[0].mxu0
  %v1637 = vadd.f32 0.0, %v1636
  %v1638 = vpop.f32.mrb[0].mxu0
  %v1639 = vpop.f32.mrb[0].mxu0
  %v1640 = vadd.f32 0.0, %v1639
  %v1641 = vpop.f32.mrb[0].mxu0
  %1642 = vmatprep.mubr.bf16.mxu0 %v1459
  %1643 = vmatmul.mubr.bf16.gmra.mrb[0].mxu0 %v1458
  %v1644 = vpop.f32.mrb[0].mxu0
  %v1645 = vadd.f32 0.0, %v1644
  %v1646 = vpop.f32.mrb[0].mxu0
  %v1647 = vpop.f32.mrb[0].mxu0
  %v1648 = vadd.f32 0.0, %v1647
  %v1649 = vpop.f32.mrb[0].mxu0
  %1650 = vmatprep.mubr.bf16.mxu0 %v1461
  %1651 = vmatmul.mubr.bf16.gmra.mrb[0].mxu0 %v1460
  %v1652 = vpop.f32.mrb[0].mxu0
  %v1653 = vadd.f32 0.0, %v1652
  %v1654 = vpop.f32.mrb[0].mxu0
  %v1655 = vpop.f32.mrb[0].mxu0
  %v1656 = vadd.f32 0.0, %v1655
  %v1657 = vpop.f32.mrb[0].mxu0
  %1658 = vmatprep.mubr.bf16.mxu0 %v1463
  %1659 = vmatmul.mubr.bf16.gmra.mrb[0].mxu0 %v1462
  %v1660 = vpop.f32.mrb[0].mxu0
  %v1661 = vadd.f32 0.0, %v1660
  %v1662 = vpop.f32.mrb[0].mxu0
  %v1663 = vpop.f32.mrb[0].mxu0
  %v1664 = vadd.f32 0.0, %v1663
  %v1665 = vpop.f32.mrb[0].mxu0
  %1666 = vmatprep.mubr.bf16.mxu0 %v1465
  %1667 = vmatmul.mubr.bf16.gmra.mrb[0].mxu0 %v1464
  %v1668 = vpop.f32.mrb[0].mxu0
  %v1669 = vadd.f32 0.0, %v1668
  %v1670 = vpop.f32.mrb[0].mxu0
  %v1671 = vpop.f32.mrb[0].mxu0
  %v1672 = vadd.f32 0.0, %v1671
  %v1673 = vpop.f32.mrb[0].mxu0
  %1674 = vmatprep.mubr.bf16.mxu0 %v1467
  %1675 = vmatmul.mubr.bf16.gmra.mrb[0].mxu0 %v1466
  %v1676 = vpop.f32.mrb[0].mxu0
  %v1677 = vadd.f32 0.0, %v1676
  %v1678 = vpop.f32.mrb[0].mxu0
  %v1679 = vpop.f32.mrb[0].mxu0
  %v1680 = vadd.f32 0.0, %v1679
  %v1681 = vpop.f32.mrb[0].mxu0
  %1682 = vmatprep.mubr.bf16.mxu0 %v1469
  %1683 = vmatmul.mubr.bf16.gmra.mrb[0].mxu0 %v1468
  %v1684 = vpop.f32.mrb[0].mxu0
  %v1685 = vadd.f32 0.0, %v1684
  %v1686 = vpop.f32.mrb[0].mxu0
  %v1687 = vpop.f32.mrb[0].mxu0
  %v1688 = vadd.f32 0.0, %v1687
  %v1689 = vpop.f32.mrb[0].mxu0
  %1690 = vmatprep.mubr.bf16.mxu0 %v1471
  %1691 = vmatmul.mubr.bf16.gmra.mrb[0].mxu0 %v1470
  %v1692 = vpop.f32.mrb[0].mxu0
  %v1693 = vadd.f32 0.0, %v1692
  %v1694 = vpop.f32.mrb[0].mxu0
  %v1695 = vpop.f32.mrb[0].mxu0
  %v1696 = vadd.f32 0.0, %v1695
  %v1697 = vpop.f32.mrb[0].mxu0
  %1698 = vmatprep.mubr.bf16.mxu0 %v1473
  %1699 = vmatmul.mubr.bf16.gmra.mrb[0].mxu0 %v1472
  %v1700 = vpop.f32.mrb[0].mxu0
  %v1701 = vadd.f32 0.0, %v1700
  %v1702 = vpop.f32.mrb[0].mxu0
  %v1703 = vpop.f32.mrb[0].mxu0
  %v1704 = vadd.f32 0.0, %v1703
  %v1705 = vpop.f32.mrb[0].mxu0
  %1706 = vmatprep.mubr.bf16.mxu0 %v1475
  %1707 = vmatmul.mubr.bf16.gmra.mrb[0].mxu0 %v1474
  %v1708 = vpop.f32.mrb[0].mxu0
  %v1709 = vadd.f32 0.0, %v1708
  %v1710 = vpop.f32.mrb[0].mxu0
  %v1711 = vpop.f32.mrb[0].mxu0
  %v1712 = vadd.f32 0.0, %v1711
  %v1713 = vpop.f32.mrb[0].mxu0
  %1714 = vmatprep.mubr.bf16.mxu0 %v1477
  %1715 = vmatmul.mubr.bf16.gmra.mrb[0].mxu0 %v1476
  %v1716 = vpop.f32.mrb[0].mxu0
  %v1717 = vadd.f32 0.0, %v1716
  %v1718 = vpop.f32.mrb[0].mxu0
  %v1719 = vpop.f32.mrb[0].mxu0
  %v1720 = vadd.f32 0.0, %v1719
  %v1721 = vpop.f32.mrb[0].mxu0
  %1722 = vmatprep.mubr.bf16.mxu0 %v1479
  %1723 = vmatmul.mubr.bf16.gmra.mrb[0].mxu0 %v1478
  %v1724 = vpop.f32.mrb[0].mxu0
  %v1725 = vadd.f32 0.0, %v1724
  %v1726 = vpop.f32.mrb[0].mxu0
  %v1727 = vpop.f32.mrb[0].mxu0
  %v1728 = vadd.f32 0.0, %v1727
  %v1729 = vpop.f32.mrb[0].mxu0
  %1730 = vmatprep.mubr.bf16.mxu0 %v1481
  %1731 = vmatmul.mubr.bf16.gmra.mrb[0].mxu0 %v1480
  %v1732 = vpop.f32.mrb[0].mxu0
  %v1733 = vadd.f32 0.0, %v1732
  %v1734 = vpop.f32.mrb[0].mxu0
  %v1735 = vpop.f32.mrb[0].mxu0
  %v1736 = vadd.f32 0.0, %v1735
  %v1737 = vpop.f32.mrb[0].mxu0
  %1738 = vdwg.mxu0
  %v1739 = vld [vmem:[#allocation4] sm:$0xff]
  %v1740 = vld [vmem:[#allocation4 + $0x8] sm:$0xff]
  %v1741 = vld [vmem:[#allocation4 + $0x10] sm:$0xff]
  %v1742 = vld [vmem:[#allocation4 + $0x18] sm:$0xff]
  %v1743 = vld [vmem:[#allocation4 + $0x20] sm:$0xff]
  %v1744 = vld [vmem:[#allocation4 + $0x28] sm:$0xff]
  %v1745 = vld [vmem:[#allocation4 + $0x30] sm:$0xff]
  %v1746 = vld [vmem:[#allocation4 + $0x38] sm:$0xff]
  %v1747 = vld [vmem:[#allocation4 + $0x40] sm:$0xff]
  %v1748 = vld [vmem:[#allocation4 + $0x48] sm:$0xff]
  %v1749 = vld [vmem:[#allocation4 + $0x50] sm:$0xff]
  %v1750 = vld [vmem:[#allocation4 + $0x58] sm:$0xff]
  %v1751 = vld [vmem:[#allocation4 + $0x60] sm:$0xff]
  %v1752 = vld [vmem:[#allocation4 + $0x68] sm:$0xff]
  %v1753 = vld [vmem:[#allocation4 + $0x70] sm:$0xff]
  %v1754 = vld [vmem:[#allocation4 + $0x78] sm:$0xff]
  %v1755 = vld [vmem:[#allocation4 + $0x80] sm:$0xff]
  %v1756 = vld [vmem:[#allocation4 + $0x88] sm:$0xff]
  %v1757 = vld [vmem:[#allocation4 + $0x90] sm:$0xff]
  %v1758 = vld [vmem:[#allocation4 + $0x98] sm:$0xff]
  %v1759 = vld [vmem:[#allocation4 + $0xa0] sm:$0xff]
  %v1760 = vld [vmem:[#allocation4 + $0xa8] sm:$0xff]
  %v1761 = vld [vmem:[#allocation4 + $0xb0] sm:$0xff]
  %v1762 = vld [vmem:[#allocation4 + $0xb8] sm:$0xff]
  %v1763 = vld [vmem:[#allocation4 + $0xc0] sm:$0xff]
  %v1764 = vld [vmem:[#allocation4 + $0xc8] sm:$0xff]
  %v1765 = vld [vmem:[#allocation4 + $0xd0] sm:$0xff]
  %v1766 = vld [vmem:[#allocation4 + $0xd8] sm:$0xff]
  %v1767 = vld [vmem:[#allocation4 + $0xe0] sm:$0xff]
  %v1768 = vld [vmem:[#allocation4 + $0xe8] sm:$0xff]
  %v1769 = vld [vmem:[#allocation4 + $0xf0] sm:$0xff]
  %v1770 = vld [vmem:[#allocation4 + $0xf8] sm:$0xff]
  %1772 = vset.pattern.permute.xlu0 0
  %1773 = vperm.xlu0 %1772, %v810
  %v1774 = vpop.permute.xlu0 %1773
  %1777 = vset.pattern.permute.xlu0 0
  %1778 = vperm.xlu0 %1777, %v812
  %v1779 = vpop.permute.xlu0 %1778
  %1782 = vset.pattern.permute.xlu0 0
  %1783 = vperm.xlu0 %1782, %v814
  %v1784 = vpop.permute.xlu0 %1783
  %1787 = vset.pattern.permute.xlu0 0
  %1788 = vperm.xlu0 %1787, %v816
  %v1789 = vpop.permute.xlu0 %1788
  %1792 = vset.pattern.permute.xlu0 0
  %1793 = vperm.xlu0 %1792, %v818
  %v1794 = vpop.permute.xlu0 %1793
  %1797 = vset.pattern.permute.xlu0 0
  %1798 = vperm.xlu0 %1797, %v820
  %v1799 = vpop.permute.xlu0 %1798
  %1802 = vset.pattern.permute.xlu0 0
  %1803 = vperm.xlu0 %1802, %v822
  %v1804 = vpop.permute.xlu0 %1803
  %1807 = vset.pattern.permute.xlu0 0
  %1808 = vperm.xlu0 %1807, %v824
  %v1809 = vpop.permute.xlu0 %1808
  %1812 = vset.pattern.permute.xlu0 0
  %1813 = vperm.xlu0 %1812, %v826
  %v1814 = vpop.permute.xlu0 %1813
  %1817 = vset.pattern.permute.xlu0 0
  %1818 = vperm.xlu0 %1817, %v828
  %v1819 = vpop.permute.xlu0 %1818
  %1822 = vset.pattern.permute.xlu0 0
  %1823 = vperm.xlu0 %1822, %v830
  %v1824 = vpop.permute.xlu0 %1823
  %1827 = vset.pattern.permute.xlu0 0
  %1828 = vperm.xlu0 %1827, %v832
  %v1829 = vpop.permute.xlu0 %1828
  %1832 = vset.pattern.permute.xlu0 0
  %1833 = vperm.xlu0 %1832, %v834
  %v1834 = vpop.permute.xlu0 %1833
  %1837 = vset.pattern.permute.xlu0 0
  %1838 = vperm.xlu0 %1837, %v836
  %v1839 = vpop.permute.xlu0 %1838
  %1842 = vset.pattern.permute.xlu0 0
  %1843 = vperm.xlu0 %1842, %v838
  %v1844 = vpop.permute.xlu0 %1843
  %1847 = vset.pattern.permute.xlu0 0
  %1848 = vperm.xlu0 %1847, %v840
  %v1849 = vpop.permute.xlu0 %1848
  %1852 = vset.pattern.permute.xlu0 0
  %1853 = vperm.xlu0 %1852, %v842
  %v1854 = vpop.permute.xlu0 %1853
  %1857 = vset.pattern.permute.xlu0 0
  %1858 = vperm.xlu0 %1857, %v844
  %v1859 = vpop.permute.xlu0 %1858
  %1862 = vset.pattern.permute.xlu0 0
  %1863 = vperm.xlu0 %1862, %v846
  %v1864 = vpop.permute.xlu0 %1863
  %1867 = vset.pattern.permute.xlu0 0
  %1868 = vperm.xlu0 %1867, %v848
  %v1869 = vpop.permute.xlu0 %1868
  %1872 = vset.pattern.permute.xlu0 0
  %1873 = vperm.xlu0 %1872, %v850
  %v1874 = vpop.permute.xlu0 %1873
  %1877 = vset.pattern.permute.xlu0 0
  %1878 = vperm.xlu0 %1877, %v852
  %v1879 = vpop.permute.xlu0 %1878
  %1882 = vset.pattern.permute.xlu0 0
  %1883 = vperm.xlu0 %1882, %v854
  %v1884 = vpop.permute.xlu0 %1883
  %1887 = vset.pattern.permute.xlu0 0
  %1888 = vperm.xlu0 %1887, %v856
  %v1889 = vpop.permute.xlu0 %1888
  %1892 = vset.pattern.permute.xlu0 0
  %1893 = vperm.xlu0 %1892, %v858
  %v1894 = vpop.permute.xlu0 %1893
  %1897 = vset.pattern.permute.xlu0 0
  %1898 = vperm.xlu0 %1897, %v860
  %v1899 = vpop.permute.xlu0 %1898
  %1902 = vset.pattern.permute.xlu0 0
  %1903 = vperm.xlu0 %1902, %v862
  %v1904 = vpop.permute.xlu0 %1903
  %1907 = vset.pattern.permute.xlu0 0
  %1908 = vperm.xlu0 %1907, %v864
  %v1909 = vpop.permute.xlu0 %1908
  %1912 = vset.pattern.permute.xlu0 0
  %1913 = vperm.xlu0 %1912, %v866
  %v1914 = vpop.permute.xlu0 %1913
  %1917 = vset.pattern.permute.xlu0 0
  %1918 = vperm.xlu0 %1917, %v868
  %v1919 = vpop.permute.xlu0 %1918
  %1922 = vset.pattern.permute.xlu0 0
  %1923 = vperm.xlu0 %1922, %v870
  %v1924 = vpop.permute.xlu0 %1923
  %1927 = vset.pattern.permute.xlu0 0
  %1928 = vperm.xlu0 %1927, %v872
  %v1929 = vpop.permute.xlu0 %1928
  %v1931 = vmul.f32 %v1774, %v1739
  %v1932 = vmul.f32 %v1779, %v1740
  %v1933 = vmul.f32 %v1784, %v1741
  %v1934 = vmul.f32 %v1789, %v1742
  %v1935 = vmul.f32 %v1794, %v1743
  %v1936 = vmul.f32 %v1799, %v1744
  %v1937 = vmul.f32 %v1804, %v1745
  %v1938 = vmul.f32 %v1809, %v1746
  %v1939 = vmul.f32 %v1814, %v1747
  %v1940 = vmul.f32 %v1819, %v1748
  %v1941 = vmul.f32 %v1824, %v1749
  %v1942 = vmul.f32 %v1829, %v1750
  %v1943 = vmul.f32 %v1834, %v1751
  %v1944 = vmul.f32 %v1839, %v1752
  %v1945 = vmul.f32 %v1844, %v1753
  %v1946 = vmul.f32 %v1849, %v1754
  %v1947 = vmul.f32 %v1854, %v1755
  %v1948 = vmul.f32 %v1859, %v1756
  %v1949 = vmul.f32 %v1864, %v1757
  %v1950 = vmul.f32 %v1869, %v1758
  %v1951 = vmul.f32 %v1874, %v1759
  %v1952 = vmul.f32 %v1879, %v1760
  %v1953 = vmul.f32 %v1884, %v1761
  %v1954 = vmul.f32 %v1889, %v1762
  %v1955 = vmul.f32 %v1894, %v1763
  %v1956 = vmul.f32 %v1899, %v1764
  %v1957 = vmul.f32 %v1904, %v1765
  %v1958 = vmul.f32 %v1909, %v1766
  %v1959 = vmul.f32 %v1914, %v1767
  %v1960 = vmul.f32 %v1919, %v1768
  %v1961 = vmul.f32 %v1924, %v1769
  %v1962 = vmul.f32 %v1929, %v1770
  %v1963 = vadd.f32 %v1931, %v1613
  %v1964 = vadd.f32 %v1932, %v1616
  %v1965 = vadd.f32 %v1933, %v1621
  %v1966 = vadd.f32 %v1934, %v1624
  %v1967 = vadd.f32 %v1935, %v1629
  %v1968 = vadd.f32 %v1936, %v1632
  %v1969 = vadd.f32 %v1937, %v1637
  %v1970 = vadd.f32 %v1938, %v1640
  %v1971 = vadd.f32 %v1939, %v1645
  %v1972 = vadd.f32 %v1940, %v1648
  %v1973 = vadd.f32 %v1941, %v1653
  %v1974 = vadd.f32 %v1942, %v1656
  %v1975 = vadd.f32 %v1943, %v1661
  %v1976 = vadd.f32 %v1944, %v1664
  %v1977 = vadd.f32 %v1945, %v1669
  %v1978 = vadd.f32 %v1946, %v1672
  %v1979 = vadd.f32 %v1947, %v1677
  %v1980 = vadd.f32 %v1948, %v1680
  %v1981 = vadd.f32 %v1949, %v1685
  %v1982 = vadd.f32 %v1950, %v1688
  %v1983 = vadd.f32 %v1951, %v1693
  %v1984 = vadd.f32 %v1952, %v1696
  %v1985 = vadd.f32 %v1953, %v1701
  %v1986 = vadd.f32 %v1954, %v1704
  %v1987 = vadd.f32 %v1955, %v1709
  %v1988 = vadd.f32 %v1956, %v1712
  %v1989 = vadd.f32 %v1957, %v1717
  %v1990 = vadd.f32 %v1958, %v1720
  %v1991 = vadd.f32 %v1959, %v1725
  %v1992 = vadd.f32 %v1960, %v1728
  %v1993 = vadd.f32 %v1961, %v1733
  %v1994 = vadd.f32 %v1962, %v1736
  %vm1995 = vcmask 261120
  %1996 = vst.msk [vmem:[#allocation4] sm:$0xff] %vm1995, %v1963
  %1997 = vst.msk [vmem:[#allocation4 + $0x8] sm:$0xff] %vm1995, %v1964
  %1998 = vst.msk [vmem:[#allocation4 + $0x10] sm:$0xff] %vm1995, %v1965
  %1999 = vst.msk [vmem:[#allocation4 + $0x18] sm:$0xff] %vm1995, %v1966
  %2000 = vst.msk [vmem:[#allocation4 + $0x20] sm:$0xff] %vm1995, %v1967
  %2001 = vst.msk [vmem:[#allocation4 + $0x28] sm:$0xff] %vm1995, %v1968
  %2002 = vst.msk [vmem:[#allocation4 + $0x30] sm:$0xff] %vm1995, %v1969
  %2003 = vst.msk [vmem:[#allocation4 + $0x38] sm:$0xff] %vm1995, %v1970
  %2004 = vst.msk [vmem:[#allocation4 + $0x40] sm:$0xff] %vm1995, %v1971
  %2005 = vst.msk [vmem:[#allocation4 + $0x48] sm:$0xff] %vm1995, %v1972
  %2006 = vst.msk [vmem:[#allocation4 + $0x50] sm:$0xff] %vm1995, %v1973
  %2007 = vst.msk [vmem:[#allocation4 + $0x58] sm:$0xff] %vm1995, %v1974
  %2008 = vst.msk [vmem:[#allocation4 + $0x60] sm:$0xff] %vm1995, %v1975
  %2009 = vst.msk [vmem:[#allocation4 + $0x68] sm:$0xff] %vm1995, %v1976
  %2010 = vst.msk [vmem:[#allocation4 + $0x70] sm:$0xff] %vm1995, %v1977
  %2011 = vst.msk [vmem:[#allocation4 + $0x78] sm:$0xff] %vm1995, %v1978
  %2012 = vst.msk [vmem:[#allocation4 + $0x80] sm:$0xff] %vm1995, %v1979
  %2013 = vst.msk [vmem:[#allocation4 + $0x88] sm:$0xff] %vm1995, %v1980
  %2014 = vst.msk [vmem:[#allocation4 + $0x90] sm:$0xff] %vm1995, %v1981
  %2015 = vst.msk [vmem:[#allocation4 + $0x98] sm:$0xff] %vm1995, %v1982
  %2016 = vst.msk [vmem:[#allocation4 + $0xa0] sm:$0xff] %vm1995, %v1983
  %2017 = vst.msk [vmem:[#allocation4 + $0xa8] sm:$0xff] %vm1995, %v1984
  %2018 = vst.msk [vmem:[#allocation4 + $0xb0] sm:$0xff] %vm1995, %v1985
  %2019 = vst.msk [vmem:[#allocation4 + $0xb8] sm:$0xff] %vm1995, %v1986
  %2020 = vst.msk [vmem:[#allocation4 + $0xc0] sm:$0xff] %vm1995, %v1987
  %2021 = vst.msk [vmem:[#allocation4 + $0xc8] sm:$0xff] %vm1995, %v1988
  %2022 = vst.msk [vmem:[#allocation4 + $0xd0] sm:$0xff] %vm1995, %v1989
  %2023 = vst.msk [vmem:[#allocation4 + $0xd8] sm:$0xff] %vm1995, %v1990
  %2024 = vst.msk [vmem:[#allocation4 + $0xe0] sm:$0xff] %vm1995, %v1991
  %2025 = vst.msk [vmem:[#allocation4 + $0xe8] sm:$0xff] %vm1995, %v1992
  %2026 = vst.msk [vmem:[#allocation4 + $0xf0] sm:$0xff] %vm1995, %v1993
  %2027 = vst.msk [vmem:[#allocation4 + $0xf8] sm:$0xff] %vm1995, %v1994
  %2028 = vst.msk [vmem:[#allocation2] sm:$0xff] %vm1417, %v745
  %2029 = vst.msk [vmem:[#allocation2 + $0x8] sm:$0xff] %vm1417, %v746
  %2030 = vst.msk [vmem:[#allocation2 + $0x10] sm:$0xff] %vm1417, %v747
  %2031 = vst.msk [vmem:[#allocation2 + $0x18] sm:$0xff] %vm1417, %v748
  %2032 = vst.msk [vmem:[#allocation2 + $0x20] sm:$0xff] %vm1417, %v749
  %2033 = vst.msk [vmem:[#allocation2 + $0x28] sm:$0xff] %vm1417, %v750
  %2034 = vst.msk [vmem:[#allocation2 + $0x30] sm:$0xff] %vm1417, %v751
  %2035 = vst.msk [vmem:[#allocation2 + $0x38] sm:$0xff] %vm1417, %v752
  %2036 = vst.msk [vmem:[#allocation2 + $0x40] sm:$0xff] %vm1417, %v753
  %2037 = vst.msk [vmem:[#allocation2 + $0x48] sm:$0xff] %vm1417, %v754
  %2038 = vst.msk [vmem:[#allocation2 + $0x50] sm:$0xff] %vm1417, %v755
  %2039 = vst.msk [vmem:[#allocation2 + $0x58] sm:$0xff] %vm1417, %v756
  %2040 = vst.msk [vmem:[#allocation2 + $0x60] sm:$0xff] %vm1417, %v757
  %2041 = vst.msk [vmem:[#allocation2 + $0x68] sm:$0xff] %vm1417, %v758
  %2042 = vst.msk [vmem:[#allocation2 + $0x70] sm:$0xff] %vm1417, %v759
  %2043 = vst.msk [vmem:[#allocation2 + $0x78] sm:$0xff] %vm1417, %v760
  %2044 = vst.msk [vmem:[#allocation2 + $0x80] sm:$0xff] %vm1417, %v761
  %2045 = vst.msk [vmem:[#allocation2 + $0x88] sm:$0xff] %vm1417, %v762
  %2046 = vst.msk [vmem:[#allocation2 + $0x90] sm:$0xff] %vm1417, %v763
  %2047 = vst.msk [vmem:[#allocation2 + $0x98] sm:$0xff] %vm1417, %v764
  %2048 = vst.msk [vmem:[#allocation2 + $0xa0] sm:$0xff] %vm1417, %v765
  %2049 = vst.msk [vmem:[#allocation2 + $0xa8] sm:$0xff] %vm1417, %v766
  %2050 = vst.msk [vmem:[#allocation2 + $0xb0] sm:$0xff] %vm1417, %v767
  %2051 = vst.msk [vmem:[#allocation2 + $0xb8] sm:$0xff] %vm1417, %v768
  %2052 = vst.msk [vmem:[#allocation2 + $0xc0] sm:$0xff] %vm1417, %v769
  %2053 = vst.msk [vmem:[#allocation2 + $0xc8] sm:$0xff] %vm1417, %v770
  %2054 = vst.msk [vmem:[#allocation2 + $0xd0] sm:$0xff] %vm1417, %v771
  %2055 = vst.msk [vmem:[#allocation2 + $0xd8] sm:$0xff] %vm1417, %v772
  %2056 = vst.msk [vmem:[#allocation2 + $0xe0] sm:$0xff] %vm1417, %v773
  %2057 = vst.msk [vmem:[#allocation2 + $0xe8] sm:$0xff] %vm1417, %v774
  %2058 = vst.msk [vmem:[#allocation2 + $0xf0] sm:$0xff] %vm1417, %v775
  %2059 = vst.msk [vmem:[#allocation2 + $0xf8] sm:$0xff] %vm1417, %v776
  %2060 = vset.pattern.permute.xlu0 1
  %2061 = vperm.xlu0 %2060, %v149
  %v2062 = vpop.permute.xlu0 %2061
  %2064 = vset.pattern.permute.xlu0 1
  %2065 = vperm.xlu0 %2064, %v150
  %v2066 = vpop.permute.xlu0 %2065
  %2068 = vset.pattern.permute.xlu0 1
  %2069 = vperm.xlu0 %2068, %v151
  %v2070 = vpop.permute.xlu0 %2069
  %2072 = vset.pattern.permute.xlu0 1
  %2073 = vperm.xlu0 %2072, %v152
  %v2074 = vpop.permute.xlu0 %2073
  %2076 = vset.pattern.permute.xlu0 1
  %2077 = vperm.xlu0 %2076, %v153
  %v2078 = vpop.permute.xlu0 %2077
  %2080 = vset.pattern.permute.xlu0 1
  %2081 = vperm.xlu0 %2080, %v154
  %v2082 = vpop.permute.xlu0 %2081
  %2084 = vset.pattern.permute.xlu0 1
  %2085 = vperm.xlu0 %2084, %v155
  %v2086 = vpop.permute.xlu0 %2085
  %2088 = vset.pattern.permute.xlu0 1
  %2089 = vperm.xlu0 %2088, %v156
  %v2090 = vpop.permute.xlu0 %2089
  %2092 = vset.pattern.permute.xlu0 1
  %2093 = vperm.xlu0 %2092, %v157
  %v2094 = vpop.permute.xlu0 %2093
  %2096 = vset.pattern.permute.xlu0 1
  %2097 = vperm.xlu0 %2096, %v158
  %v2098 = vpop.permute.xlu0 %2097
  %2100 = vset.pattern.permute.xlu0 1
  %2101 = vperm.xlu0 %2100, %v159
  %v2102 = vpop.permute.xlu0 %2101
  %2104 = vset.pattern.permute.xlu0 1
  %2105 = vperm.xlu0 %2104, %v160
  %v2106 = vpop.permute.xlu0 %2105
  %2108 = vset.pattern.permute.xlu0 1
  %2109 = vperm.xlu0 %2108, %v161
  %v2110 = vpop.permute.xlu0 %2109
  %2112 = vset.pattern.permute.xlu0 1
  %2113 = vperm.xlu0 %2112, %v162
  %v2114 = vpop.permute.xlu0 %2113
  %2116 = vset.pattern.permute.xlu0 1
  %2117 = vperm.xlu0 %2116, %v163
  %v2118 = vpop.permute.xlu0 %2117
  %2120 = vset.pattern.permute.xlu0 1
  %2121 = vperm.xlu0 %2120, %v164
  %v2122 = vpop.permute.xlu0 %2121
  %2124 = vset.pattern.permute.xlu0 1
  %2125 = vperm.xlu0 %2124, %v165
  %v2126 = vpop.permute.xlu0 %2125
  %2128 = vset.pattern.permute.xlu0 1
  %2129 = vperm.xlu0 %2128, %v166
  %v2130 = vpop.permute.xlu0 %2129
  %2132 = vset.pattern.permute.xlu0 1
  %2133 = vperm.xlu0 %2132, %v167
  %v2134 = vpop.permute.xlu0 %2133
  %2136 = vset.pattern.permute.xlu0 1
  %2137 = vperm.xlu0 %2136, %v168
  %v2138 = vpop.permute.xlu0 %2137
  %2140 = vset.pattern.permute.xlu0 1
  %2141 = vperm.xlu0 %2140, %v169
  %v2142 = vpop.permute.xlu0 %2141
  %2144 = vset.pattern.permute.xlu0 1
  %2145 = vperm.xlu0 %2144, %v170
  %v2146 = vpop.permute.xlu0 %2145
  %2148 = vset.pattern.permute.xlu0 1
  %2149 = vperm.xlu0 %2148, %v171
  %v2150 = vpop.permute.xlu0 %2149
  %2152 = vset.pattern.permute.xlu0 1
  %2153 = vperm.xlu0 %2152, %v172
  %v2154 = vpop.permute.xlu0 %2153
  %2156 = vset.pattern.permute.xlu0 1
  %2157 = vperm.xlu0 %2156, %v173
  %v2158 = vpop.permute.xlu0 %2157
  %2160 = vset.pattern.permute.xlu0 1
  %2161 = vperm.xlu0 %2160, %v174
  %v2162 = vpop.permute.xlu0 %2161
  %2164 = vset.pattern.permute.xlu0 1
  %2165 = vperm.xlu0 %2164, %v175
  %v2166 = vpop.permute.xlu0 %2165
  %2168 = vset.pattern.permute.xlu0 1
  %2169 = vperm.xlu0 %2168, %v176
  %v2170 = vpop.permute.xlu0 %2169
  %2172 = vset.pattern.permute.xlu0 1
  %2173 = vperm.xlu0 %2172, %v177
  %v2174 = vpop.permute.xlu0 %2173
  %2176 = vset.pattern.permute.xlu0 1
  %2177 = vperm.xlu0 %2176, %v178
  %v2178 = vpop.permute.xlu0 %2177
  %2180 = vset.pattern.permute.xlu0 1
  %2181 = vperm.xlu0 %2180, %v179
  %v2182 = vpop.permute.xlu0 %2181
  %2184 = vset.pattern.permute.xlu0 1
  %2185 = vperm.xlu0 %2184, %v180
  %v2186 = vpop.permute.xlu0 %2185
  %v2188 = vlaneseq
  %v2189 = vshrl.u32 %v2188, 7
  %v2190 = vsub.s32 1, %v2189
  %v2191 = vrot.slane %v181, %v2190
  %v2192 = vlaneseq
  %v2193 = vshrl.u32 %v2192, 7
  %v2194 = vsub.s32 3, %v2193
  %v2195 = vrot.slane %v181, %v2194
  %v2198 = vlaneseq
  %v2199 = vshrl.u32 %v2198, 7
  %v2200 = vsub.s32 1, %v2199
  %v2201 = vrot.slane %v2191, %v2200
  %v2202 = vlaneseq
  %v2203 = vshrl.u32 %v2202, 7
  %v2204 = vsub.s32 1, %v2203
  %v2205 = vrot.slane %v2195, %v2204
  %v2206 = vadd.f32 %v2062, %v2201
  %v2207 = vadd.f32 %v2062, %v2205
  %v2208 = vadd.f32 %v2066, %v2201
  %v2209 = vadd.f32 %v2066, %v2205
  %v2210 = vadd.f32 %v2070, %v2201
  %v2211 = vadd.f32 %v2070, %v2205
  %v2212 = vadd.f32 %v2074, %v2201
  %v2213 = vadd.f32 %v2074, %v2205
  %v2214 = vadd.f32 %v2078, %v2201
  %v2215 = vadd.f32 %v2078, %v2205
  %v2216 = vadd.f32 %v2082, %v2201
  %v2217 = vadd.f32 %v2082, %v2205
  %v2218 = vadd.f32 %v2086, %v2201
  %v2219 = vadd.f32 %v2086, %v2205
  %v2220 = vadd.f32 %v2090, %v2201
  %v2221 = vadd.f32 %v2090, %v2205
  %v2222 = vadd.f32 %v2094, %v2201
  %v2223 = vadd.f32 %v2094, %v2205
  %v2224 = vadd.f32 %v2098, %v2201
  %v2225 = vadd.f32 %v2098, %v2205
  %v2226 = vadd.f32 %v2102, %v2201
  %v2227 = vadd.f32 %v2102, %v2205
  %v2228 = vadd.f32 %v2106, %v2201
  %v2229 = vadd.f32 %v2106, %v2205
  %v2230 = vadd.f32 %v2110, %v2201
  %v2231 = vadd.f32 %v2110, %v2205
  %v2232 = vadd.f32 %v2114, %v2201
  %v2233 = vadd.f32 %v2114, %v2205
  %v2234 = vadd.f32 %v2118, %v2201
  %v2235 = vadd.f32 %v2118, %v2205
  %v2236 = vadd.f32 %v2122, %v2201
  %v2237 = vadd.f32 %v2122, %v2205
  %v2238 = vadd.f32 %v2126, %v2201
  %v2239 = vadd.f32 %v2126, %v2205
  %v2240 = vadd.f32 %v2130, %v2201
  %v2241 = vadd.f32 %v2130, %v2205
  %v2242 = vadd.f32 %v2134, %v2201
  %v2243 = vadd.f32 %v2134, %v2205
  %v2244 = vadd.f32 %v2138, %v2201
  %v2245 = vadd.f32 %v2138, %v2205
  %v2246 = vadd.f32 %v2142, %v2201
  %v2247 = vadd.f32 %v2142, %v2205
  %v2248 = vadd.f32 %v2146, %v2201
  %v2249 = vadd.f32 %v2146, %v2205
  %v2250 = vadd.f32 %v2150, %v2201
  %v2251 = vadd.f32 %v2150, %v2205
  %v2252 = vadd.f32 %v2154, %v2201
  %v2253 = vadd.f32 %v2154, %v2205
  %v2254 = vadd.f32 %v2158, %v2201
  %v2255 = vadd.f32 %v2158, %v2205
  %v2256 = vadd.f32 %v2162, %v2201
  %v2257 = vadd.f32 %v2162, %v2205
  %v2258 = vadd.f32 %v2166, %v2201
  %v2259 = vadd.f32 %v2166, %v2205
  %v2260 = vadd.f32 %v2170, %v2201
  %v2261 = vadd.f32 %v2170, %v2205
  %v2262 = vadd.f32 %v2174, %v2201
  %v2263 = vadd.f32 %v2174, %v2205
  %v2264 = vadd.f32 %v2178, %v2201
  %v2265 = vadd.f32 %v2178, %v2205
  %v2266 = vadd.f32 %v2182, %v2201
  %v2267 = vadd.f32 %v2182, %v2205
  %v2268 = vadd.f32 %v2186, %v2201
  %v2269 = vadd.f32 %v2186, %v2205
  %vm2270 = vcmp.gt.f32.partialorder %v2206, 0.0
  %vm2271 = vcmp.gt.f32.partialorder %v2207, 0.0
  %vm2272 = vcmp.gt.f32.partialorder %v2208, 0.0
  %vm2273 = vcmp.gt.f32.partialorder %v2209, 0.0
  %vm2274 = vcmp.gt.f32.partialorder %v2210, 0.0
  %vm2275 = vcmp.gt.f32.partialorder %v2211, 0.0
  %vm2276 = vcmp.gt.f32.partialorder %v2212, 0.0
  %vm2277 = vcmp.gt.f32.partialorder %v2213, 0.0
  %vm2278 = vcmp.gt.f32.partialorder %v2214, 0.0
  %vm2279 = vcmp.gt.f32.partialorder %v2215, 0.0
  %vm2280 = vcmp.gt.f32.partialorder %v2216, 0.0
  %vm2281 = vcmp.gt.f32.partialorder %v2217, 0.0
  %vm2282 = vcmp.gt.f32.partialorder %v2218, 0.0
  %vm2283 = vcmp.gt.f32.partialorder %v2219, 0.0
  %vm2284 = vcmp.gt.f32.partialorder %v2220, 0.0
  %vm2285 = vcmp.gt.f32.partialorder %v2221, 0.0
  %vm2286 = vcmp.gt.f32.partialorder %v2222, 0.0
  %vm2287 = vcmp.gt.f32.partialorder %v2223, 0.0
  %vm2288 = vcmp.gt.f32.partialorder %v2224, 0.0
  %vm2289 = vcmp.gt.f32.partialorder %v2225, 0.0
  %vm2290 = vcmp.gt.f32.partialorder %v2226, 0.0
  %vm2291 = vcmp.gt.f32.partialorder %v2227, 0.0
  %vm2292 = vcmp.gt.f32.partialorder %v2228, 0.0
  %vm2293 = vcmp.gt.f32.partialorder %v2229, 0.0
  %vm2294 = vcmp.gt.f32.partialorder %v2230, 0.0
  %vm2295 = vcmp.gt.f32.partialorder %v2231, 0.0
  %vm2296 = vcmp.gt.f32.partialorder %v2232, 0.0
  %vm2297 = vcmp.gt.f32.partialorder %v2233, 0.0
  %vm2298 = vcmp.gt.f32.partialorder %v2234, 0.0
  %vm2299 = vcmp.gt.f32.partialorder %v2235, 0.0
  %vm2300 = vcmp.gt.f32.partialorder %v2236, 0.0
  %vm2301 = vcmp.gt.f32.partialorder %v2237, 0.0
  %vm2302 = vcmp.gt.f32.partialorder %v2238, 0.0
  %vm2303 = vcmp.gt.f32.partialorder %v2239, 0.0
  %vm2304 = vcmp.gt.f32.partialorder %v2240, 0.0
  %vm2305 = vcmp.gt.f32.partialorder %v2241, 0.0
  %vm2306 = vcmp.gt.f32.partialorder %v2242, 0.0
  %vm2307 = vcmp.gt.f32.partialorder %v2243, 0.0
  %vm2308 = vcmp.gt.f32.partialorder %v2244, 0.0
  %vm2309 = vcmp.gt.f32.partialorder %v2245, 0.0
  %vm2310 = vcmp.gt.f32.partialorder %v2246, 0.0
  %vm2311 = vcmp.gt.f32.partialorder %v2247, 0.0
  %vm2312 = vcmp.gt.f32.partialorder %v2248, 0.0
  %vm2313 = vcmp.gt.f32.partialorder %v2249, 0.0
  %vm2314 = vcmp.gt.f32.partialorder %v2250, 0.0
  %vm2315 = vcmp.gt.f32.partialorder %v2251, 0.0
  %vm2316 = vcmp.gt.f32.partialorder %v2252, 0.0
  %vm2317 = vcmp.gt.f32.partialorder %v2253, 0.0
  %vm2318 = vcmp.gt.f32.partialorder %v2254, 0.0
  %vm2319 = vcmp.gt.f32.partialorder %v2255, 0.0
  %vm2320 = vcmp.gt.f32.partialorder %v2256, 0.0
  %vm2321 = vcmp.gt.f32.partialorder %v2257, 0.0
  %vm2322 = vcmp.gt.f32.partialorder %v2258, 0.0
  %vm2323 = vcmp.gt.f32.partialorder %v2259, 0.0
  %vm2324 = vcmp.gt.f32.partialorder %v2260, 0.0
  %vm2325 = vcmp.gt.f32.partialorder %v2261, 0.0
  %vm2326 = vcmp.gt.f32.partialorder %v2262, 0.0
  %vm2327 = vcmp.gt.f32.partialorder %v2263, 0.0
  %vm2328 = vcmp.gt.f32.partialorder %v2264, 0.0
  %vm2329 = vcmp.gt.f32.partialorder %v2265, 0.0
  %vm2330 = vcmp.gt.f32.partialorder %v2266, 0.0
  %vm2331 = vcmp.gt.f32.partialorder %v2267, 0.0
  %vm2332 = vcmp.gt.f32.partialorder %v2268, 0.0
  %vm2333 = vcmp.gt.f32.partialorder %v2269, 0.0
  %v2334 = vmul.f32 %v2206, 0.2
  %v2335 = vmul.f32 %v2207, 0.2
  %v2336 = vmul.f32 %v2208, 0.2
  %v2337 = vmul.f32 %v2209, 0.2
  %v2338 = vmul.f32 %v2210, 0.2
  %v2339 = vmul.f32 %v2211, 0.2
  %v2340 = vmul.f32 %v2212, 0.2
  %v2341 = vmul.f32 %v2213, 0.2
  %v2342 = vmul.f32 %v2214, 0.2
  %v2343 = vmul.f32 %v2215, 0.2
  %v2344 = vmul.f32 %v2216, 0.2
  %v2345 = vmul.f32 %v2217, 0.2
  %v2346 = vmul.f32 %v2218, 0.2
  %v2347 = vmul.f32 %v2219, 0.2
  %v2348 = vmul.f32 %v2220, 0.2
  %v2349 = vmul.f32 %v2221, 0.2
  %v2350 = vmul.f32 %v2222, 0.2
  %v2351 = vmul.f32 %v2223, 0.2
  %v2352 = vmul.f32 %v2224, 0.2
  %v2353 = vmul.f32 %v2225, 0.2
  %v2354 = vmul.f32 %v2226, 0.2
  %v2355 = vmul.f32 %v2227, 0.2
  %v2356 = vmul.f32 %v2228, 0.2
  %v2357 = vmul.f32 %v2229, 0.2
  %v2358 = vmul.f32 %v2230, 0.2
  %v2359 = vmul.f32 %v2231, 0.2
  %v2360 = vmul.f32 %v2232, 0.2
  %v2361 = vmul.f32 %v2233, 0.2
  %v2362 = vmul.f32 %v2234, 0.2
  %v2363 = vmul.f32 %v2235, 0.2
  %v2364 = vmul.f32 %v2236, 0.2
  %v2365 = vmul.f32 %v2237, 0.2
  %v2366 = vmul.f32 %v2238, 0.2
  %v2367 = vmul.f32 %v2239, 0.2
  %v2368 = vmul.f32 %v2240, 0.2
  %v2369 = vmul.f32 %v2241, 0.2
  %v2370 = vmul.f32 %v2242, 0.2
  %v2371 = vmul.f32 %v2243, 0.2
  %v2372 = vmul.f32 %v2244, 0.2
  %v2373 = vmul.f32 %v2245, 0.2
  %v2374 = vmul.f32 %v2246, 0.2
  %v2375 = vmul.f32 %v2247, 0.2
  %v2376 = vmul.f32 %v2248, 0.2
  %v2377 = vmul.f32 %v2249, 0.2
  %v2378 = vmul.f32 %v2250, 0.2
  %v2379 = vmul.f32 %v2251, 0.2
  %v2380 = vmul.f32 %v2252, 0.2
  %v2381 = vmul.f32 %v2253, 0.2
  %v2382 = vmul.f32 %v2254, 0.2
  %v2383 = vmul.f32 %v2255, 0.2
  %v2384 = vmul.f32 %v2256, 0.2
  %v2385 = vmul.f32 %v2257, 0.2
  %v2386 = vmul.f32 %v2258, 0.2
  %v2387 = vmul.f32 %v2259, 0.2
  %v2388 = vmul.f32 %v2260, 0.2
  %v2389 = vmul.f32 %v2261, 0.2
  %v2390 = vmul.f32 %v2262, 0.2
  %v2391 = vmul.f32 %v2263, 0.2
  %v2392 = vmul.f32 %v2264, 0.2
  %v2393 = vmul.f32 %v2265, 0.2
  %v2394 = vmul.f32 %v2266, 0.2
  %v2395 = vmul.f32 %v2267, 0.2
  %v2396 = vmul.f32 %v2268, 0.2
  %v2397 = vmul.f32 %v2269, 0.2
  %v2398 = vsel %vm2270, %v2206, %v2334
  %v2399 = vsel %vm2271, %v2207, %v2335
  %v2400 = vsel %vm2272, %v2208, %v2336
  %v2401 = vsel %vm2273, %v2209, %v2337
  %v2402 = vsel %vm2274, %v2210, %v2338
  %v2403 = vsel %vm2275, %v2211, %v2339
  %v2404 = vsel %vm2276, %v2212, %v2340
  %v2405 = vsel %vm2277, %v2213, %v2341
  %v2406 = vsel %vm2278, %v2214, %v2342
  %v2407 = vsel %vm2279, %v2215, %v2343
  %v2408 = vsel %vm2280, %v2216, %v2344
  %v2409 = vsel %vm2281, %v2217, %v2345
  %v2410 = vsel %vm2282, %v2218, %v2346
  %v2411 = vsel %vm2283, %v2219, %v2347
  %v2412 = vsel %vm2284, %v2220, %v2348
  %v2413 = vsel %vm2285, %v2221, %v2349
  %v2414 = vsel %vm2286, %v2222, %v2350
  %v2415 = vsel %vm2287, %v2223, %v2351
  %v2416 = vsel %vm2288, %v2224, %v2352
  %v2417 = vsel %vm2289, %v2225, %v2353
  %v2418 = vsel %vm2290, %v2226, %v2354
  %v2419 = vsel %vm2291, %v2227, %v2355
  %v2420 = vsel %vm2292, %v2228, %v2356
  %v2421 = vsel %vm2293, %v2229, %v2357
  %v2422 = vsel %vm2294, %v2230, %v2358
  %v2423 = vsel %vm2295, %v2231, %v2359
  %v2424 = vsel %vm2296, %v2232, %v2360
  %v2425 = vsel %vm2297, %v2233, %v2361
  %v2426 = vsel %vm2298, %v2234, %v2362
  %v2427 = vsel %vm2299, %v2235, %v2363
  %v2428 = vsel %vm2300, %v2236, %v2364
  %v2429 = vsel %vm2301, %v2237, %v2365
  %v2430 = vsel %vm2302, %v2238, %v2366
  %v2431 = vsel %vm2303, %v2239, %v2367
  %v2432 = vsel %vm2304, %v2240, %v2368
  %v2433 = vsel %vm2305, %v2241, %v2369
  %v2434 = vsel %vm2306, %v2242, %v2370
  %v2435 = vsel %vm2307, %v2243, %v2371
  %v2436 = vsel %vm2308, %v2244, %v2372
  %v2437 = vsel %vm2309, %v2245, %v2373
  %v2438 = vsel %vm2310, %v2246, %v2374
  %v2439 = vsel %vm2311, %v2247, %v2375
  %v2440 = vsel %vm2312, %v2248, %v2376
  %v2441 = vsel %vm2313, %v2249, %v2377
  %v2442 = vsel %vm2314, %v2250, %v2378
  %v2443 = vsel %vm2315, %v2251, %v2379
  %v2444 = vsel %vm2316, %v2252, %v2380
  %v2445 = vsel %vm2317, %v2253, %v2381
  %v2446 = vsel %vm2318, %v2254, %v2382
  %v2447 = vsel %vm2319, %v2255, %v2383
  %v2448 = vsel %vm2320, %v2256, %v2384
  %v2449 = vsel %vm2321, %v2257, %v2385
  %v2450 = vsel %vm2322, %v2258, %v2386
  %v2451 = vsel %vm2323, %v2259, %v2387
  %v2452 = vsel %vm2324, %v2260, %v2388
  %v2453 = vsel %vm2325, %v2261, %v2389
  %v2454 = vsel %vm2326, %v2262, %v2390
  %v2455 = vsel %vm2327, %v2263, %v2391
  %v2456 = vsel %vm2328, %v2264, %v2392
  %v2457 = vsel %vm2329, %v2265, %v2393
  %v2458 = vsel %vm2330, %v2266, %v2394
  %v2459 = vsel %vm2331, %v2267, %v2395
  %v2460 = vsel %vm2332, %v2268, %v2396
  %v2461 = vsel %vm2333, %v2269, %v2397
  %v2462 = vld [vmem:[#allocation2] sm:$0xff]
  %v2463 = vld [vmem:[#allocation2 + $0x8] sm:$0xff]
  %v2464 = vld [vmem:[#allocation2 + $0x10] sm:$0xff]
  %v2465 = vld [vmem:[#allocation2 + $0x18] sm:$0xff]
  %v2466 = vld [vmem:[#allocation2 + $0x20] sm:$0xff]
  %v2467 = vld [vmem:[#allocation2 + $0x28] sm:$0xff]
  %v2468 = vld [vmem:[#allocation2 + $0x30] sm:$0xff]
  %v2469 = vld [vmem:[#allocation2 + $0x38] sm:$0xff]
  %v2470 = vld [vmem:[#allocation2 + $0x40] sm:$0xff]
  %v2471 = vld [vmem:[#allocation2 + $0x48] sm:$0xff]
  %v2472 = vld [vmem:[#allocation2 + $0x50] sm:$0xff]
  %v2473 = vld [vmem:[#allocation2 + $0x58] sm:$0xff]
  %v2474 = vld [vmem:[#allocation2 + $0x60] sm:$0xff]
  %v2475 = vld [vmem:[#allocation2 + $0x68] sm:$0xff]
  %v2476 = vld [vmem:[#allocation2 + $0x70] sm:$0xff]
  %v2477 = vld [vmem:[#allocation2 + $0x78] sm:$0xff]
  %v2478 = vld [vmem:[#allocation2 + $0x80] sm:$0xff]
  %v2479 = vld [vmem:[#allocation2 + $0x88] sm:$0xff]
  %v2480 = vld [vmem:[#allocation2 + $0x90] sm:$0xff]
  %v2481 = vld [vmem:[#allocation2 + $0x98] sm:$0xff]
  %v2482 = vld [vmem:[#allocation2 + $0xa0] sm:$0xff]
  %v2483 = vld [vmem:[#allocation2 + $0xa8] sm:$0xff]
  %v2484 = vld [vmem:[#allocation2 + $0xb0] sm:$0xff]
  %v2485 = vld [vmem:[#allocation2 + $0xb8] sm:$0xff]
  %v2486 = vld [vmem:[#allocation2 + $0xc0] sm:$0xff]
  %v2487 = vld [vmem:[#allocation2 + $0xc8] sm:$0xff]
  %v2488 = vld [vmem:[#allocation2 + $0xd0] sm:$0xff]
  %v2489 = vld [vmem:[#allocation2 + $0xd8] sm:$0xff]
  %v2490 = vld [vmem:[#allocation2 + $0xe0] sm:$0xff]
  %v2491 = vld [vmem:[#allocation2 + $0xe8] sm:$0xff]
  %v2492 = vld [vmem:[#allocation2 + $0xf0] sm:$0xff]
  %v2493 = vld [vmem:[#allocation2 + $0xf8] sm:$0xff]
  %v2494 = vmax.f32 %v2398, %v2399
  %2495 = vmax.xlane.f32.xlu0 %v2494
  %v2496 = vpop.xlane.xlu0 %2495
  %v2497 = vmax.f32 %v2400, %v2401
  %2498 = vmax.xlane.f32.xlu0 %v2497
  %v2499 = vpop.xlane.xlu0 %2498
  %v2500 = vmax.f32 %v2402, %v2403
  %2501 = vmax.xlane.f32.xlu0 %v2500
  %v2502 = vpop.xlane.xlu0 %2501
  %v2503 = vmax.f32 %v2404, %v2405
  %2504 = vmax.xlane.f32.xlu0 %v2503
  %v2505 = vpop.xlane.xlu0 %2504
  %v2506 = vmax.f32 %v2406, %v2407
  %2507 = vmax.xlane.f32.xlu0 %v2506
  %v2508 = vpop.xlane.xlu0 %2507
  %v2509 = vmax.f32 %v2408, %v2409
  %2510 = vmax.xlane.f32.xlu0 %v2509
  %v2511 = vpop.xlane.xlu0 %2510
  %v2512 = vmax.f32 %v2410, %v2411
  %2513 = vmax.xlane.f32.xlu0 %v2512
  %v2514 = vpop.xlane.xlu0 %2513
  %v2515 = vmax.f32 %v2412, %v2413
  %2516 = vmax.xlane.f32.xlu0 %v2515
  %v2517 = vpop.xlane.xlu0 %2516
  %v2518 = vmax.f32 %v2414, %v2415
  %2519 = vmax.xlane.f32.xlu0 %v2518
  %v2520 = vpop.xlane.xlu0 %2519
  %v2521 = vmax.f32 %v2416, %v2417
  %2522 = vmax.xlane.f32.xlu0 %v2521
  %v2523 = vpop.xlane.xlu0 %2522
  %v2524 = vmax.f32 %v2418, %v2419
  %2525 = vmax.xlane.f32.xlu0 %v2524
  %v2526 = vpop.xlane.xlu0 %2525
  %v2527 = vmax.f32 %v2420, %v2421
  %2528 = vmax.xlane.f32.xlu0 %v2527
  %v2529 = vpop.xlane.xlu0 %2528
  %v2530 = vmax.f32 %v2422, %v2423
  %2531 = vmax.xlane.f32.xlu0 %v2530
  %v2532 = vpop.xlane.xlu0 %2531
  %v2533 = vmax.f32 %v2424, %v2425
  %2534 = vmax.xlane.f32.xlu0 %v2533
  %v2535 = vpop.xlane.xlu0 %2534
  %v2536 = vmax.f32 %v2426, %v2427
  %2537 = vmax.xlane.f32.xlu0 %v2536
  %v2538 = vpop.xlane.xlu0 %2537
  %v2539 = vmax.f32 %v2428, %v2429
  %2540 = vmax.xlane.f32.xlu0 %v2539
  %v2541 = vpop.xlane.xlu0 %2540
  %v2542 = vmax.f32 %v2430, %v2431
  %2543 = vmax.xlane.f32.xlu0 %v2542
  %v2544 = vpop.xlane.xlu0 %2543
  %v2545 = vmax.f32 %v2432, %v2433
  %2546 = vmax.xlane.f32.xlu0 %v2545
  %v2547 = vpop.xlane.xlu0 %2546
  %v2548 = vmax.f32 %v2434, %v2435
  %2549 = vmax.xlane.f32.xlu0 %v2548
  %v2550 = vpop.xlane.xlu0 %2549
  %v2551 = vmax.f32 %v2436, %v2437
  %2552 = vmax.xlane.f32.xlu0 %v2551
  %v2553 = vpop.xlane.xlu0 %2552
  %v2554 = vmax.f32 %v2438, %v2439
  %2555 = vmax.xlane.f32.xlu0 %v2554
  %v2556 = vpop.xlane.xlu0 %2555
  %v2557 = vmax.f32 %v2440, %v2441
  %2558 = vmax.xlane.f32.xlu0 %v2557
  %v2559 = vpop.xlane.xlu0 %2558
  %v2560 = vmax.f32 %v2442, %v2443
  %2561 = vmax.xlane.f32.xlu0 %v2560
  %v2562 = vpop.xlane.xlu0 %2561
  %v2563 = vmax.f32 %v2444, %v2445
  %2564 = vmax.xlane.f32.xlu0 %v2563
  %v2565 = vpop.xlane.xlu0 %2564
  %v2566 = vmax.f32 %v2446, %v2447
  %2567 = vmax.xlane.f32.xlu0 %v2566
  %v2568 = vpop.xlane.xlu0 %2567
  %v2569 = vmax.f32 %v2448, %v2449
  %2570 = vmax.xlane.f32.xlu0 %v2569
  %v2571 = vpop.xlane.xlu0 %2570
  %v2572 = vmax.f32 %v2450, %v2451
  %2573 = vmax.xlane.f32.xlu0 %v2572
  %v2574 = vpop.xlane.xlu0 %2573
  %v2575 = vmax.f32 %v2452, %v2453
  %2576 = vmax.xlane.f32.xlu0 %v2575
  %v2577 = vpop.xlane.xlu0 %2576
  %v2578 = vmax.f32 %v2454, %v2455
  %2579 = vmax.xlane.f32.xlu0 %v2578
  %v2580 = vpop.xlane.xlu0 %2579
  %v2581 = vmax.f32 %v2456, %v2457
  %2582 = vmax.xlane.f32.xlu0 %v2581
  %v2583 = vpop.xlane.xlu0 %2582
  %v2584 = vmax.f32 %v2458, %v2459
  %2585 = vmax.xlane.f32.xlu0 %v2584
  %v2586 = vpop.xlane.xlu0 %2585
  %v2587 = vmax.f32 %v2460, %v2461
  %2588 = vmax.xlane.f32.xlu0 %v2587
  %v2589 = vpop.xlane.xlu0 %2588
  %v2590 = vmax.f32 %v2462, %v2496
  %v2591 = vmax.f32 %v2463, %v2499
  %v2592 = vmax.f32 %v2464, %v2502
  %v2593 = vmax.f32 %v2465, %v2505
  %v2594 = vmax.f32 %v2466, %v2508
  %v2595 = vmax.f32 %v2467, %v2511
  %v2596 = vmax.f32 %v2468, %v2514
  %v2597 = vmax.f32 %v2469, %v2517
  %v2598 = vmax.f32 %v2470, %v2520
  %v2599 = vmax.f32 %v2471, %v2523
  %v2600 = vmax.f32 %v2472, %v2526
  %v2601 = vmax.f32 %v2473, %v2529
  %v2602 = vmax.f32 %v2474, %v2532
  %v2603 = vmax.f32 %v2475, %v2535
  %v2604 = vmax.f32 %v2476, %v2538
  %v2605 = vmax.f32 %v2477, %v2541
  %v2606 = vmax.f32 %v2478, %v2544
  %v2607 = vmax.f32 %v2479, %v2547
  %v2608 = vmax.f32 %v2480, %v2550
  %v2609 = vmax.f32 %v2481, %v2553
  %v2610 = vmax.f32 %v2482, %v2556
  %v2611 = vmax.f32 %v2483, %v2559
  %v2612 = vmax.f32 %v2484, %v2562
  %v2613 = vmax.f32 %v2485, %v2565
  %v2614 = vmax.f32 %v2486, %v2568
  %v2615 = vmax.f32 %v2487, %v2571
  %v2616 = vmax.f32 %v2488, %v2574
  %v2617 = vmax.f32 %v2489, %v2577
  %v2618 = vmax.f32 %v2490, %v2580
  %v2619 = vmax.f32 %v2491, %v2583
  %v2620 = vmax.f32 %v2492, %v2586
  %v2621 = vmax.f32 %v2493, %v2589
  %v2622 = vsub.f32 %v2462, %v2590
  %v2623 = vsub.f32 %v2463, %v2591
  %v2624 = vsub.f32 %v2464, %v2592
  %v2625 = vsub.f32 %v2465, %v2593
  %v2626 = vsub.f32 %v2466, %v2594
  %v2627 = vsub.f32 %v2467, %v2595
  %v2628 = vsub.f32 %v2468, %v2596
  %v2629 = vsub.f32 %v2469, %v2597
  %v2630 = vsub.f32 %v2470, %v2598
  %v2631 = vsub.f32 %v2471, %v2599
  %v2632 = vsub.f32 %v2472, %v2600
  %v2633 = vsub.f32 %v2473, %v2601
  %v2634 = vsub.f32 %v2474, %v2602
  %v2635 = vsub.f32 %v2475, %v2603
  %v2636 = vsub.f32 %v2476, %v2604
  %v2637 = vsub.f32 %v2477, %v2605
  %v2638 = vsub.f32 %v2478, %v2606
  %v2639 = vsub.f32 %v2479, %v2607
  %v2640 = vsub.f32 %v2480, %v2608
  %v2641 = vsub.f32 %v2481, %v2609
  %v2642 = vsub.f32 %v2482, %v2610
  %v2643 = vsub.f32 %v2483, %v2611
  %v2644 = vsub.f32 %v2484, %v2612
  %v2645 = vsub.f32 %v2485, %v2613
  %v2646 = vsub.f32 %v2486, %v2614
  %v2647 = vsub.f32 %v2487, %v2615
  %v2648 = vsub.f32 %v2488, %v2616
  %v2649 = vsub.f32 %v2489, %v2617
  %v2650 = vsub.f32 %v2490, %v2618
  %v2651 = vsub.f32 %v2491, %v2619
  %v2652 = vsub.f32 %v2492, %v2620
  %v2653 = vsub.f32 %v2493, %v2621
  %v2654 = vmul.f32 %v2622, 1.442695
  %v2655 = vpow.pop %v2654
  %v2656 = vmul.f32 %v2623, 1.442695
  %v2657 = vpow.pop %v2656
  %v2658 = vmul.f32 %v2624, 1.442695
  %v2659 = vpow.pop %v2658
  %v2660 = vmul.f32 %v2625, 1.442695
  %v2661 = vpow.pop %v2660
  %v2662 = vmul.f32 %v2626, 1.442695
  %v2663 = vpow.pop %v2662
  %v2664 = vmul.f32 %v2627, 1.442695
  %v2665 = vpow.pop %v2664
  %v2666 = vmul.f32 %v2628, 1.442695
  %v2667 = vpow.pop %v2666
  %v2668 = vmul.f32 %v2629, 1.442695
  %v2669 = vpow.pop %v2668
  %v2670 = vmul.f32 %v2630, 1.442695
  %v2671 = vpow.pop %v2670
  %v2672 = vmul.f32 %v2631, 1.442695
  %v2673 = vpow.pop %v2672
  %v2674 = vmul.f32 %v2632, 1.442695
  %v2675 = vpow.pop %v2674
  %v2676 = vmul.f32 %v2633, 1.442695
  %v2677 = vpow.pop %v2676
  %v2678 = vmul.f32 %v2634, 1.442695
  %v2679 = vpow.pop %v2678
  %v2680 = vmul.f32 %v2635, 1.442695
  %v2681 = vpow.pop %v2680
  %v2682 = vmul.f32 %v2636, 1.442695
  %v2683 = vpow.pop %v2682
  %v2684 = vmul.f32 %v2637, 1.442695
  %v2685 = vpow.pop %v2684
  %v2686 = vmul.f32 %v2638, 1.442695
  %v2687 = vpow.pop %v2686
  %v2688 = vmul.f32 %v2639, 1.442695
  %v2689 = vpow.pop %v2688
  %v2690 = vmul.f32 %v2640, 1.442695
  %v2691 = vpow.pop %v2690
  %v2692 = vmul.f32 %v2641, 1.442695
  %v2693 = vpow.pop %v2692
  %v2694 = vmul.f32 %v2642, 1.442695
  %v2695 = vpow.pop %v2694
  %v2696 = vmul.f32 %v2643, 1.442695
  %v2697 = vpow.pop %v2696
  %v2698 = vmul.f32 %v2644, 1.442695
  %v2699 = vpow.pop %v2698
  %v2700 = vmul.f32 %v2645, 1.442695
  %v2701 = vpow.pop %v2700
  %v2702 = vmul.f32 %v2646, 1.442695
  %v2703 = vpow.pop %v2702
  %v2704 = vmul.f32 %v2647, 1.442695
  %v2705 = vpow.pop %v2704
  %v2706 = vmul.f32 %v2648, 1.442695
  %v2707 = vpow.pop %v2706
  %v2708 = vmul.f32 %v2649, 1.442695
  %v2709 = vpow.pop %v2708
  %v2710 = vmul.f32 %v2650, 1.442695
  %v2711 = vpow.pop %v2710
  %v2712 = vmul.f32 %v2651, 1.442695
  %v2713 = vpow.pop %v2712
  %v2714 = vmul.f32 %v2652, 1.442695
  %v2715 = vpow.pop %v2714
  %v2716 = vmul.f32 %v2653, 1.442695
  %v2717 = vpow.pop %v2716
  %2719 = vset.pattern.permute.xlu0 1
  %2720 = vperm.xlu0 %2719, %v2590
  %v2721 = vpop.permute.xlu0 %2720
  %2724 = vset.pattern.permute.xlu0 1
  %2725 = vperm.xlu0 %2724, %v2591
  %v2726 = vpop.permute.xlu0 %2725
  %2729 = vset.pattern.permute.xlu0 1
  %2730 = vperm.xlu0 %2729, %v2592
  %v2731 = vpop.permute.xlu0 %2730
  %2734 = vset.pattern.permute.xlu0 1
  %2735 = vperm.xlu0 %2734, %v2593
  %v2736 = vpop.permute.xlu0 %2735
  %2739 = vset.pattern.permute.xlu0 1
  %2740 = vperm.xlu0 %2739, %v2594
  %v2741 = vpop.permute.xlu0 %2740
  %2744 = vset.pattern.permute.xlu0 1
  %2745 = vperm.xlu0 %2744, %v2595
  %v2746 = vpop.permute.xlu0 %2745
  %2749 = vset.pattern.permute.xlu0 1
  %2750 = vperm.xlu0 %2749, %v2596
  %v2751 = vpop.permute.xlu0 %2750
  %2754 = vset.pattern.permute.xlu0 1
  %2755 = vperm.xlu0 %2754, %v2597
  %v2756 = vpop.permute.xlu0 %2755
  %2759 = vset.pattern.permute.xlu0 1
  %2760 = vperm.xlu0 %2759, %v2598
  %v2761 = vpop.permute.xlu0 %2760
  %2764 = vset.pattern.permute.xlu0 1
  %2765 = vperm.xlu0 %2764, %v2599
  %v2766 = vpop.permute.xlu0 %2765
  %2769 = vset.pattern.permute.xlu0 1
  %2770 = vperm.xlu0 %2769, %v2600
  %v2771 = vpop.permute.xlu0 %2770
  %2774 = vset.pattern.permute.xlu0 1
  %2775 = vperm.xlu0 %2774, %v2601
  %v2776 = vpop.permute.xlu0 %2775
  %2779 = vset.pattern.permute.xlu0 1
  %2780 = vperm.xlu0 %2779, %v2602
  %v2781 = vpop.permute.xlu0 %2780
  %2784 = vset.pattern.permute.xlu0 1
  %2785 = vperm.xlu0 %2784, %v2603
  %v2786 = vpop.permute.xlu0 %2785
  %2789 = vset.pattern.permute.xlu0 1
  %2790 = vperm.xlu0 %2789, %v2604
  %v2791 = vpop.permute.xlu0 %2790
  %2794 = vset.pattern.permute.xlu0 1
  %2795 = vperm.xlu0 %2794, %v2605
  %v2796 = vpop.permute.xlu0 %2795
  %2799 = vset.pattern.permute.xlu0 1
  %2800 = vperm.xlu0 %2799, %v2606
  %v2801 = vpop.permute.xlu0 %2800
  %2804 = vset.pattern.permute.xlu0 1
  %2805 = vperm.xlu0 %2804, %v2607
  %v2806 = vpop.permute.xlu0 %2805
  %2809 = vset.pattern.permute.xlu0 1
  %2810 = vperm.xlu0 %2809, %v2608
  %v2811 = vpop.permute.xlu0 %2810
  %2814 = vset.pattern.permute.xlu0 1
  %2815 = vperm.xlu0 %2814, %v2609
  %v2816 = vpop.permute.xlu0 %2815
  %2819 = vset.pattern.permute.xlu0 1
  %2820 = vperm.xlu0 %2819, %v2610
  %v2821 = vpop.permute.xlu0 %2820
  %2824 = vset.pattern.permute.xlu0 1
  %2825 = vperm.xlu0 %2824, %v2611
  %v2826 = vpop.permute.xlu0 %2825
  %2829 = vset.pattern.permute.xlu0 1
  %2830 = vperm.xlu0 %2829, %v2612
  %v2831 = vpop.permute.xlu0 %2830
  %2834 = vset.pattern.permute.xlu0 1
  %2835 = vperm.xlu0 %2834, %v2613
  %v2836 = vpop.permute.xlu0 %2835
  %2839 = vset.pattern.permute.xlu0 1
  %2840 = vperm.xlu0 %2839, %v2614
  %v2841 = vpop.permute.xlu0 %2840
  %2844 = vset.pattern.permute.xlu0 1
  %2845 = vperm.xlu0 %2844, %v2615
  %v2846 = vpop.permute.xlu0 %2845
  %2849 = vset.pattern.permute.xlu0 1
  %2850 = vperm.xlu0 %2849, %v2616
  %v2851 = vpop.permute.xlu0 %2850
  %2854 = vset.pattern.permute.xlu0 1
  %2855 = vperm.xlu0 %2854, %v2617
  %v2856 = vpop.permute.xlu0 %2855
  %2859 = vset.pattern.permute.xlu0 1
  %2860 = vperm.xlu0 %2859, %v2618
  %v2861 = vpop.permute.xlu0 %2860
  %2864 = vset.pattern.permute.xlu0 1
  %2865 = vperm.xlu0 %2864, %v2619
  %v2866 = vpop.permute.xlu0 %2865
  %2869 = vset.pattern.permute.xlu0 1
  %2870 = vperm.xlu0 %2869, %v2620
  %v2871 = vpop.permute.xlu0 %2870
  %2874 = vset.pattern.permute.xlu0 1
  %2875 = vperm.xlu0 %2874, %v2621
  %v2876 = vpop.permute.xlu0 %2875
  %v2878 = vsub.f32 %v2398, %v2721
  %v2879 = vsub.f32 %v2399, %v2721
  %v2880 = vsub.f32 %v2400, %v2726
  %v2881 = vsub.f32 %v2401, %v2726
  %v2882 = vsub.f32 %v2402, %v2731
  %v2883 = vsub.f32 %v2403, %v2731
  %v2884 = vsub.f32 %v2404, %v2736
  %v2885 = vsub.f32 %v2405, %v2736
  %v2886 = vsub.f32 %v2406, %v2741
  %v2887 = vsub.f32 %v2407, %v2741
  %v2888 = vsub.f32 %v2408, %v2746
  %v2889 = vsub.f32 %v2409, %v2746
  %v2890 = vsub.f32 %v2410, %v2751
  %v2891 = vsub.f32 %v2411, %v2751
  %v2892 = vsub.f32 %v2412, %v2756
  %v2893 = vsub.f32 %v2413, %v2756
  %v2894 = vsub.f32 %v2414, %v2761
  %v2895 = vsub.f32 %v2415, %v2761
  %v2896 = vsub.f32 %v2416, %v2766
  %v2897 = vsub.f32 %v2417, %v2766
  %v2898 = vsub.f32 %v2418, %v2771
  %v2899 = vsub.f32 %v2419, %v2771
  %v2900 = vsub.f32 %v2420, %v2776
  %v2901 = vsub.f32 %v2421, %v2776
  %v2902 = vsub.f32 %v2422, %v2781
  %v2903 = vsub.f32 %v2423, %v2781
  %v2904 = vsub.f32 %v2424, %v2786
  %v2905 = vsub.f32 %v2425, %v2786
  %v2906 = vsub.f32 %v2426, %v2791
  %v2907 = vsub.f32 %v2427, %v2791
  %v2908 = vsub.f32 %v2428, %v2796
  %v2909 = vsub.f32 %v2429, %v2796
  %v2910 = vsub.f32 %v2430, %v2801
  %v2911 = vsub.f32 %v2431, %v2801
  %v2912 = vsub.f32 %v2432, %v2806
  %v2913 = vsub.f32 %v2433, %v2806
  %v2914 = vsub.f32 %v2434, %v2811
  %v2915 = vsub.f32 %v2435, %v2811
  %v2916 = vsub.f32 %v2436, %v2816
  %v2917 = vsub.f32 %v2437, %v2816
  %v2918 = vsub.f32 %v2438, %v2821
  %v2919 = vsub.f32 %v2439, %v2821
  %v2920 = vsub.f32 %v2440, %v2826
  %v2921 = vsub.f32 %v2441, %v2826
  %v2922 = vsub.f32 %v2442, %v2831
  %v2923 = vsub.f32 %v2443, %v2831
  %v2924 = vsub.f32 %v2444, %v2836
  %v2925 = vsub.f32 %v2445, %v2836
  %v2926 = vsub.f32 %v2446, %v2841
  %v2927 = vsub.f32 %v2447, %v2841
  %v2928 = vsub.f32 %v2448, %v2846
  %v2929 = vsub.f32 %v2449, %v2846
  %v2930 = vsub.f32 %v2450, %v2851
  %v2931 = vsub.f32 %v2451, %v2851
  %v2932 = vsub.f32 %v2452, %v2856
  %v2933 = vsub.f32 %v2453, %v2856
  %v2934 = vsub.f32 %v2454, %v2861
  %v2935 = vsub.f32 %v2455, %v2861
  %v2936 = vsub.f32 %v2456, %v2866
  %v2937 = vsub.f32 %v2457, %v2866
  %v2938 = vsub.f32 %v2458, %v2871
  %v2939 = vsub.f32 %v2459, %v2871
  %v2940 = vsub.f32 %v2460, %v2876
  %v2941 = vsub.f32 %v2461, %v2876
  %v2942 = vmul.f32 %v2878, 1.442695
  %v2943 = vpow.pop %v2942
  %v2944 = vmul.f32 %v2879, 1.442695
  %v2945 = vpow.pop %v2944
  %v2946 = vmul.f32 %v2880, 1.442695
  %v2947 = vpow.pop %v2946
  %v2948 = vmul.f32 %v2881, 1.442695
  %v2949 = vpow.pop %v2948
  %v2950 = vmul.f32 %v2882, 1.442695
  %v2951 = vpow.pop %v2950
  %v2952 = vmul.f32 %v2883, 1.442695
  %v2953 = vpow.pop %v2952
  %v2954 = vmul.f32 %v2884, 1.442695
  %v2955 = vpow.pop %v2954
  %v2956 = vmul.f32 %v2885, 1.442695
  %v2957 = vpow.pop %v2956
  %v2958 = vmul.f32 %v2886, 1.442695
  %v2959 = vpow.pop %v2958
  %v2960 = vmul.f32 %v2887, 1.442695
  %v2961 = vpow.pop %v2960
  %v2962 = vmul.f32 %v2888, 1.442695
  %v2963 = vpow.pop %v2962
  %v2964 = vmul.f32 %v2889, 1.442695
  %v2965 = vpow.pop %v2964
  %v2966 = vmul.f32 %v2890, 1.442695
  %v2967 = vpow.pop %v2966
  %v2968 = vmul.f32 %v2891, 1.442695
  %v2969 = vpow.pop %v2968
  %v2970 = vmul.f32 %v2892, 1.442695
  %v2971 = vpow.pop %v2970
  %v2972 = vmul.f32 %v2893, 1.442695
  %v2973 = vpow.pop %v2972
  %v2974 = vmul.f32 %v2894, 1.442695
  %v2975 = vpow.pop %v2974
  %v2976 = vmul.f32 %v2895, 1.442695
  %v2977 = vpow.pop %v2976
  %v2978 = vmul.f32 %v2896, 1.442695
  %v2979 = vpow.pop %v2978
  %v2980 = vmul.f32 %v2897, 1.442695
  %v2981 = vpow.pop %v2980
  %v2982 = vmul.f32 %v2898, 1.442695
  %v2983 = vpow.pop %v2982
  %v2984 = vmul.f32 %v2899, 1.442695
  %v2985 = vpow.pop %v2984
  %v2986 = vmul.f32 %v2900, 1.442695
  %v2987 = vpow.pop %v2986
  %v2988 = vmul.f32 %v2901, 1.442695
  %v2989 = vpow.pop %v2988
  %v2990 = vmul.f32 %v2902, 1.442695
  %v2991 = vpow.pop %v2990
  %v2992 = vmul.f32 %v2903, 1.442695
  %v2993 = vpow.pop %v2992
  %v2994 = vmul.f32 %v2904, 1.442695
  %v2995 = vpow.pop %v2994
  %v2996 = vmul.f32 %v2905, 1.442695
  %v2997 = vpow.pop %v2996
  %v2998 = vmul.f32 %v2906, 1.442695
  %v2999 = vpow.pop %v2998
  %v3000 = vmul.f32 %v2907, 1.442695
  %v3001 = vpow.pop %v3000
  %v3002 = vmul.f32 %v2908, 1.442695
  %v3003 = vpow.pop %v3002
  %v3004 = vmul.f32 %v2909, 1.442695
  %v3005 = vpow.pop %v3004
  %v3006 = vmul.f32 %v2910, 1.442695
  %v3007 = vpow.pop %v3006
  %v3008 = vmul.f32 %v2911, 1.442695
  %v3009 = vpow.pop %v3008
  %v3010 = vmul.f32 %v2912, 1.442695
  %v3011 = vpow.pop %v3010
  %v3012 = vmul.f32 %v2913, 1.442695
  %v3013 = vpow.pop %v3012
  %v3014 = vmul.f32 %v2914, 1.442695
  %v3015 = vpow.pop %v3014
  %v3016 = vmul.f32 %v2915, 1.442695
  %v3017 = vpow.pop %v3016
  %v3018 = vmul.f32 %v2916, 1.442695
  %v3019 = vpow.pop %v3018
  %v3020 = vmul.f32 %v2917, 1.442695
  %v3021 = vpow.pop %v3020
  %v3022 = vmul.f32 %v2918, 1.442695
  %v3023 = vpow.pop %v3022
  %v3024 = vmul.f32 %v2919, 1.442695
  %v3025 = vpow.pop %v3024
  %v3026 = vmul.f32 %v2920, 1.442695
  %v3027 = vpow.pop %v3026
  %v3028 = vmul.f32 %v2921, 1.442695
  %v3029 = vpow.pop %v3028
  %v3030 = vmul.f32 %v2922, 1.442695
  %v3031 = vpow.pop %v3030
  %v3032 = vmul.f32 %v2923, 1.442695
  %v3033 = vpow.pop %v3032
  %v3034 = vmul.f32 %v2924, 1.442695
  %v3035 = vpow.pop %v3034
  %v3036 = vmul.f32 %v2925, 1.442695
  %v3037 = vpow.pop %v3036
  %v3038 = vmul.f32 %v2926, 1.442695
  %v3039 = vpow.pop %v3038
  %v3040 = vmul.f32 %v2927, 1.442695
  %v3041 = vpow.pop %v3040
  %v3042 = vmul.f32 %v2928, 1.442695
  %v3043 = vpow.pop %v3042
  %v3044 = vmul.f32 %v2929, 1.442695
  %v3045 = vpow.pop %v3044
  %v3046 = vmul.f32 %v2930, 1.442695
  %v3047 = vpow.pop %v3046
  %v3048 = vmul.f32 %v2931, 1.442695
  %v3049 = vpow.pop %v3048
  %v3050 = vmul.f32 %v2932, 1.442695
  %v3051 = vpow.pop %v3050
  %v3052 = vmul.f32 %v2933, 1.442695
  %v3053 = vpow.pop %v3052
  %v3054 = vmul.f32 %v2934, 1.442695
  %v3055 = vpow.pop %v3054
  %v3056 = vmul.f32 %v2935, 1.442695
  %v3057 = vpow.pop %v3056
  %v3058 = vmul.f32 %v2936, 1.442695
  %v3059 = vpow.pop %v3058
  %v3060 = vmul.f32 %v2937, 1.442695
  %v3061 = vpow.pop %v3060
  %v3062 = vmul.f32 %v2938, 1.442695
  %v3063 = vpow.pop %v3062
  %v3064 = vmul.f32 %v2939, 1.442695
  %v3065 = vpow.pop %v3064
  %v3066 = vmul.f32 %v2940, 1.442695
  %v3067 = vpow.pop %v3066
  %v3068 = vmul.f32 %v2941, 1.442695
  %v3069 = vpow.pop %v3068
  %v3070 = vld [vmem:[#allocation3] sm:$0xff]
  %v3071 = vld [vmem:[#allocation3 + $0x8] sm:$0xff]
  %v3072 = vld [vmem:[#allocation3 + $0x10] sm:$0xff]
  %v3073 = vld [vmem:[#allocation3 + $0x18] sm:$0xff]
  %v3074 = vld [vmem:[#allocation3 + $0x20] sm:$0xff]
  %v3075 = vld [vmem:[#allocation3 + $0x28] sm:$0xff]
  %v3076 = vld [vmem:[#allocation3 + $0x30] sm:$0xff]
  %v3077 = vld [vmem:[#allocation3 + $0x38] sm:$0xff]
  %v3078 = vld [vmem:[#allocation3 + $0x40] sm:$0xff]
  %v3079 = vld [vmem:[#allocation3 + $0x48] sm:$0xff]
  %v3080 = vld [vmem:[#allocation3 + $0x50] sm:$0xff]
  %v3081 = vld [vmem:[#allocation3 + $0x58] sm:$0xff]
  %v3082 = vld [vmem:[#allocation3 + $0x60] sm:$0xff]
  %v3083 = vld [vmem:[#allocation3 + $0x68] sm:$0xff]
  %v3084 = vld [vmem:[#allocation3 + $0x70] sm:$0xff]
  %v3085 = vld [vmem:[#allocation3 + $0x78] sm:$0xff]
  %v3086 = vld [vmem:[#allocation3 + $0x80] sm:$0xff]
  %v3087 = vld [vmem:[#allocation3 + $0x88] sm:$0xff]
  %v3088 = vld [vmem:[#allocation3 + $0x90] sm:$0xff]
  %v3089 = vld [vmem:[#allocation3 + $0x98] sm:$0xff]
  %v3090 = vld [vmem:[#allocation3 + $0xa0] sm:$0xff]
  %v3091 = vld [vmem:[#allocation3 + $0xa8] sm:$0xff]
  %v3092 = vld [vmem:[#allocation3 + $0xb0] sm:$0xff]
  %v3093 = vld [vmem:[#allocation3 + $0xb8] sm:$0xff]
  %v3094 = vld [vmem:[#allocation3 + $0xc0] sm:$0xff]
  %v3095 = vld [vmem:[#allocation3 + $0xc8] sm:$0xff]
  %v3096 = vld [vmem:[#allocation3 + $0xd0] sm:$0xff]
  %v3097 = vld [vmem:[#allocation3 + $0xd8] sm:$0xff]
  %v3098 = vld [vmem:[#allocation3 + $0xe0] sm:$0xff]
  %v3099 = vld [vmem:[#allocation3 + $0xe8] sm:$0xff]
  %v3100 = vld [vmem:[#allocation3 + $0xf0] sm:$0xff]
  %v3101 = vld [vmem:[#allocation3 + $0xf8] sm:$0xff]
  %v3102 = vmul.f32 %v2655, %v3070
  %v3103 = vmul.f32 %v2657, %v3071
  %v3104 = vmul.f32 %v2659, %v3072
  %v3105 = vmul.f32 %v2661, %v3073
  %v3106 = vmul.f32 %v2663, %v3074
  %v3107 = vmul.f32 %v2665, %v3075
  %v3108 = vmul.f32 %v2667, %v3076
  %v3109 = vmul.f32 %v2669, %v3077
  %v3110 = vmul.f32 %v2671, %v3078
  %v3111 = vmul.f32 %v2673, %v3079
  %v3112 = vmul.f32 %v2675, %v3080
  %v3113 = vmul.f32 %v2677, %v3081
  %v3114 = vmul.f32 %v2679, %v3082
  %v3115 = vmul.f32 %v2681, %v3083
  %v3116 = vmul.f32 %v2683, %v3084
  %v3117 = vmul.f32 %v2685, %v3085
  %v3118 = vmul.f32 %v2687, %v3086
  %v3119 = vmul.f32 %v2689, %v3087
  %v3120 = vmul.f32 %v2691, %v3088
  %v3121 = vmul.f32 %v2693, %v3089
  %v3122 = vmul.f32 %v2695, %v3090
  %v3123 = vmul.f32 %v2697, %v3091
  %v3124 = vmul.f32 %v2699, %v3092
  %v3125 = vmul.f32 %v2701, %v3093
  %v3126 = vmul.f32 %v2703, %v3094
  %v3127 = vmul.f32 %v2705, %v3095
  %v3128 = vmul.f32 %v2707, %v3096
  %v3129 = vmul.f32 %v2709, %v3097
  %v3130 = vmul.f32 %v2711, %v3098
  %v3131 = vmul.f32 %v2713, %v3099
  %v3132 = vmul.f32 %v2715, %v3100
  %v3133 = vmul.f32 %v2717, %v3101
  %v3134 = vadd.f32 %v2943, %v2945
  %3135 = vadd.xlane.f32.xlu0 %v3134
  %v3136 = vpop.xlane.xlu0 %3135
  %v3137 = vadd.f32 %v2947, %v2949
  %3138 = vadd.xlane.f32.xlu0 %v3137
  %v3139 = vpop.xlane.xlu0 %3138
  %v3140 = vadd.f32 %v2951, %v2953
  %3141 = vadd.xlane.f32.xlu0 %v3140
  %v3142 = vpop.xlane.xlu0 %3141
  %v3143 = vadd.f32 %v2955, %v2957
  %3144 = vadd.xlane.f32.xlu0 %v3143
  %v3145 = vpop.xlane.xlu0 %3144
  %v3146 = vadd.f32 %v2959, %v2961
  %3147 = vadd.xlane.f32.xlu0 %v3146
  %v3148 = vpop.xlane.xlu0 %3147
  %v3149 = vadd.f32 %v2963, %v2965
  %3150 = vadd.xlane.f32.xlu0 %v3149
  %v3151 = vpop.xlane.xlu0 %3150
  %v3152 = vadd.f32 %v2967, %v2969
  %3153 = vadd.xlane.f32.xlu0 %v3152
  %v3154 = vpop.xlane.xlu0 %3153
  %v3155 = vadd.f32 %v2971, %v2973
  %3156 = vadd.xlane.f32.xlu0 %v3155
  %v3157 = vpop.xlane.xlu0 %3156
  %v3158 = vadd.f32 %v2975, %v2977
  %3159 = vadd.xlane.f32.xlu0 %v3158
  %v3160 = vpop.xlane.xlu0 %3159
  %v3161 = vadd.f32 %v2979, %v2981
  %3162 = vadd.xlane.f32.xlu0 %v3161
  %v3163 = vpop.xlane.xlu0 %3162
  %v3164 = vadd.f32 %v2983, %v2985
  %3165 = vadd.xlane.f32.xlu0 %v3164
  %v3166 = vpop.xlane.xlu0 %3165
  %v3167 = vadd.f32 %v2987, %v2989
  %3168 = vadd.xlane.f32.xlu0 %v3167
  %v3169 = vpop.xlane.xlu0 %3168
  %v3170 = vadd.f32 %v2991, %v2993
  %3171 = vadd.xlane.f32.xlu0 %v3170
  %v3172 = vpop.xlane.xlu0 %3171
  %v3173 = vadd.f32 %v2995, %v2997
  %3174 = vadd.xlane.f32.xlu0 %v3173
  %v3175 = vpop.xlane.xlu0 %3174
  %v3176 = vadd.f32 %v2999, %v3001
  %3177 = vadd.xlane.f32.xlu0 %v3176
  %v3178 = vpop.xlane.xlu0 %3177
  %v3179 = vadd.f32 %v3003, %v3005
  %3180 = vadd.xlane.f32.xlu0 %v3179
  %v3181 = vpop.xlane.xlu0 %3180
  %v3182 = vadd.f32 %v3007, %v3009
  %3183 = vadd.xlane.f32.xlu0 %v3182
  %v3184 = vpop.xlane.xlu0 %3183
  %v3185 = vadd.f32 %v3011, %v3013
  %3186 = vadd.xlane.f32.xlu0 %v3185
  %v3187 = vpop.xlane.xlu0 %3186
  %v3188 = vadd.f32 %v3015, %v3017
  %3189 = vadd.xlane.f32.xlu0 %v3188
  %v3190 = vpop.xlane.xlu0 %3189
  %v3191 = vadd.f32 %v3019, %v3021
  %3192 = vadd.xlane.f32.xlu0 %v3191
  %v3193 = vpop.xlane.xlu0 %3192
  %v3194 = vadd.f32 %v3023, %v3025
  %3195 = vadd.xlane.f32.xlu0 %v3194
  %v3196 = vpop.xlane.xlu0 %3195
  %v3197 = vadd.f32 %v3027, %v3029
  %3198 = vadd.xlane.f32.xlu0 %v3197
  %v3199 = vpop.xlane.xlu0 %3198
  %v3200 = vadd.f32 %v3031, %v3033
  %3201 = vadd.xlane.f32.xlu0 %v3200
  %v3202 = vpop.xlane.xlu0 %3201
  %v3203 = vadd.f32 %v3035, %v3037
  %3204 = vadd.xlane.f32.xlu0 %v3203
  %v3205 = vpop.xlane.xlu0 %3204
  %v3206 = vadd.f32 %v3039, %v3041
  %3207 = vadd.xlane.f32.xlu0 %v3206
  %v3208 = vpop.xlane.xlu0 %3207
  %v3209 = vadd.f32 %v3043, %v3045
  %3210 = vadd.xlane.f32.xlu0 %v3209
  %v3211 = vpop.xlane.xlu0 %3210
  %v3212 = vadd.f32 %v3047, %v3049
  %3213 = vadd.xlane.f32.xlu0 %v3212
  %v3214 = vpop.xlane.xlu0 %3213
  %v3215 = vadd.f32 %v3051, %v3053
  %3216 = vadd.xlane.f32.xlu0 %v3215
  %v3217 = vpop.xlane.xlu0 %3216
  %v3218 = vadd.f32 %v3055, %v3057
  %3219 = vadd.xlane.f32.xlu0 %v3218
  %v3220 = vpop.xlane.xlu0 %3219
  %v3221 = vadd.f32 %v3059, %v3061
  %3222 = vadd.xlane.f32.xlu0 %v3221
  %v3223 = vpop.xlane.xlu0 %3222
  %v3224 = vadd.f32 %v3063, %v3065
  %3225 = vadd.xlane.f32.xlu0 %v3224
  %v3226 = vpop.xlane.xlu0 %3225
  %v3227 = vadd.f32 %v3067, %v3069
  %3228 = vadd.xlane.f32.xlu0 %v3227
  %v3229 = vpop.xlane.xlu0 %3228
  %v3230 = vadd.f32 %v3102, %v3136
  %v3231 = vadd.f32 %v3103, %v3139
  %v3232 = vadd.f32 %v3104, %v3142
  %v3233 = vadd.f32 %v3105, %v3145
  %v3234 = vadd.f32 %v3106, %v3148
  %v3235 = vadd.f32 %v3107, %v3151
  %v3236 = vadd.f32 %v3108, %v3154
  %v3237 = vadd.f32 %v3109, %v3157
  %v3238 = vadd.f32 %v3110, %v3160
  %v3239 = vadd.f32 %v3111, %v3163
  %v3240 = vadd.f32 %v3112, %v3166
  %v3241 = vadd.f32 %v3113, %v3169
  %v3242 = vadd.f32 %v3114, %v3172
  %v3243 = vadd.f32 %v3115, %v3175
  %v3244 = vadd.f32 %v3116, %v3178
  %v3245 = vadd.f32 %v3117, %v3181
  %v3246 = vadd.f32 %v3118, %v3184
  %v3247 = vadd.f32 %v3119, %v3187
  %v3248 = vadd.f32 %v3120, %v3190
  %v3249 = vadd.f32 %v3121, %v3193
  %v3250 = vadd.f32 %v3122, %v3196
  %v3251 = vadd.f32 %v3123, %v3199
  %v3252 = vadd.f32 %v3124, %v3202
  %v3253 = vadd.f32 %v3125, %v3205
  %v3254 = vadd.f32 %v3126, %v3208
  %v3255 = vadd.f32 %v3127, %v3211
  %v3256 = vadd.f32 %v3128, %v3214
  %v3257 = vadd.f32 %v3129, %v3217
  %v3258 = vadd.f32 %v3130, %v3220
  %v3259 = vadd.f32 %v3131, %v3223
  %v3260 = vadd.f32 %v3132, %v3226
  %v3261 = vadd.f32 %v3133, %v3229
  %vm3262 = vcmask 15368
  %3263 = vst.msk [vmem:[#allocation3] sm:$0xff] %vm3262, %v3230
  %3264 = vst.msk [vmem:[#allocation3 + $0x8] sm:$0xff] %vm3262, %v3231
  %3265 = vst.msk [vmem:[#allocation3 + $0x10] sm:$0xff] %vm3262, %v3232
  %3266 = vst.msk [vmem:[#allocation3 + $0x18] sm:$0xff] %vm3262, %v3233
  %3267 = vst.msk [vmem:[#allocation3 + $0x20] sm:$0xff] %vm3262, %v3234
  %3268 = vst.msk [vmem:[#allocation3 + $0x28] sm:$0xff] %vm3262, %v3235
  %3269 = vst.msk [vmem:[#allocation3 + $0x30] sm:$0xff] %vm3262, %v3236
  %3270 = vst.msk [vmem:[#allocation3 + $0x38] sm:$0xff] %vm3262, %v3237
  %3271 = vst.msk [vmem:[#allocation3 + $0x40] sm:$0xff] %vm3262, %v3238
  %3272 = vst.msk [vmem:[#allocation3 + $0x48] sm:$0xff] %vm3262, %v3239
  %3273 = vst.msk [vmem:[#allocation3 + $0x50] sm:$0xff] %vm3262, %v3240
  %3274 = vst.msk [vmem:[#allocation3 + $0x58] sm:$0xff] %vm3262, %v3241
  %3275 = vst.msk [vmem:[#allocation3 + $0x60] sm:$0xff] %vm3262, %v3242
  %3276 = vst.msk [vmem:[#allocation3 + $0x68] sm:$0xff] %vm3262, %v3243
  %3277 = vst.msk [vmem:[#allocation3 + $0x70] sm:$0xff] %vm3262, %v3244
  %3278 = vst.msk [vmem:[#allocation3 + $0x78] sm:$0xff] %vm3262, %v3245
  %3279 = vst.msk [vmem:[#allocation3 + $0x80] sm:$0xff] %vm3262, %v3246
  %3280 = vst.msk [vmem:[#allocation3 + $0x88] sm:$0xff] %vm3262, %v3247
  %3281 = vst.msk [vmem:[#allocation3 + $0x90] sm:$0xff] %vm3262, %v3248
  %3282 = vst.msk [vmem:[#allocation3 + $0x98] sm:$0xff] %vm3262, %v3249
  %3283 = vst.msk [vmem:[#allocation3 + $0xa0] sm:$0xff] %vm3262, %v3250
  %3284 = vst.msk [vmem:[#allocation3 + $0xa8] sm:$0xff] %vm3262, %v3251
  %3285 = vst.msk [vmem:[#allocation3 + $0xb0] sm:$0xff] %vm3262, %v3252
  %3286 = vst.msk [vmem:[#allocation3 + $0xb8] sm:$0xff] %vm3262, %v3253
  %3287 = vst.msk [vmem:[#allocation3 + $0xc0] sm:$0xff] %vm3262, %v3254
  %3288 = vst.msk [vmem:[#allocation3 + $0xc8] sm:$0xff] %vm3262, %v3255
  %3289 = vst.msk [vmem:[#allocation3 + $0xd0] sm:$0xff] %vm3262, %v3256
  %3290 = vst.msk [vmem:[#allocation3 + $0xd8] sm:$0xff] %vm3262, %v3257
  %3291 = vst.msk [vmem:[#allocation3 + $0xe0] sm:$0xff] %vm3262, %v3258
  %3292 = vst.msk [vmem:[#allocation3 + $0xe8] sm:$0xff] %vm3262, %v3259
  %3293 = vst.msk [vmem:[#allocation3 + $0xf0] sm:$0xff] %vm3262, %v3260
  %3294 = vst.msk [vmem:[#allocation3 + $0xf8] sm:$0xff] %vm3262, %v3261
  %v3295 = vpack.c.bf16 %v2947, %v2943
  %v3296 = vpack.c.bf16 %v2949, %v2945
  %v3297 = vpack.c.bf16 %v2955, %v2951
  %v3298 = vpack.c.bf16 %v2957, %v2953
  %v3299 = vpack.c.bf16 %v2963, %v2959
  %v3300 = vpack.c.bf16 %v2965, %v2961
  %v3301 = vpack.c.bf16 %v2971, %v2967
  %v3302 = vpack.c.bf16 %v2973, %v2969
  %v3303 = vpack.c.bf16 %v2979, %v2975
  %v3304 = vpack.c.bf16 %v2981, %v2977
  %v3305 = vpack.c.bf16 %v2987, %v2983
  %v3306 = vpack.c.bf16 %v2989, %v2985
  %v3307 = vpack.c.bf16 %v2995, %v2991
  %v3308 = vpack.c.bf16 %v2997, %v2993
  %v3309 = vpack.c.bf16 %v3003, %v2999
  %v3310 = vpack.c.bf16 %v3005, %v3001
  %v3311 = vpack.c.bf16 %v3011, %v3007
  %v3312 = vpack.c.bf16 %v3013, %v3009
  %v3313 = vpack.c.bf16 %v3019, %v3015
  %v3314 = vpack.c.bf16 %v3021, %v3017
  %v3315 = vpack.c.bf16 %v3027, %v3023
  %v3316 = vpack.c.bf16 %v3029, %v3025
  %v3317 = vpack.c.bf16 %v3035, %v3031
  %v3318 = vpack.c.bf16 %v3037, %v3033
  %v3319 = vpack.c.bf16 %v3043, %v3039
  %v3320 = vpack.c.bf16 %v3045, %v3041
  %v3321 = vpack.c.bf16 %v3051, %v3047
  %v3322 = vpack.c.bf16 %v3053, %v3049
  %v3323 = vpack.c.bf16 %v3059, %v3055
  %v3324 = vpack.c.bf16 %v3061, %v3057
  %v3325 = vpack.c.bf16 %v3067, %v3063
  %v3326 = vpack.c.bf16 %v3069, %v3065
  %3327 = vrot.lane.b32.xlu0 %v1546, 96
  %v3328 = vpop.permute.xlu0 %3327
  %3329 = vrot.lane.b32.xlu0 %v1547, 96
  %v3330 = vpop.permute.xlu0 %3329
  %3331 = vrot.lane.b32.xlu0 %v1548, 96
  %v3332 = vpop.permute.xlu0 %3331
  %3333 = vrot.lane.b32.xlu0 %v1549, 96
  %v3334 = vpop.permute.xlu0 %3333
  %3335 = vrot.lane.b32.xlu0 %v1550, 96
  %v3336 = vpop.permute.xlu0 %3335
  %3337 = vrot.lane.b32.xlu0 %v1551, 96
  %v3338 = vpop.permute.xlu0 %3337
  %3339 = vrot.lane.b32.xlu0 %v1552, 96
  %v3340 = vpop.permute.xlu0 %3339
  %3341 = vrot.lane.b32.xlu0 %v1553, 96
  %v3342 = vpop.permute.xlu0 %3341
  %3343 = vrot.lane.b32.xlu0 %v1554, 96
  %v3344 = vpop.permute.xlu0 %3343
  %3345 = vrot.lane.b32.xlu0 %v1555, 96
  %v3346 = vpop.permute.xlu0 %3345
  %3347 = vrot.lane.b32.xlu0 %v1556, 96
  %v3348 = vpop.permute.xlu0 %3347
  %3349 = vrot.lane.b32.xlu0 %v1557, 96
  %v3350 = vpop.permute.xlu0 %3349
  %3351 = vrot.lane.b32.xlu0 %v1558, 96
  %v3352 = vpop.permute.xlu0 %3351
  %3353 = vrot.lane.b32.xlu0 %v1559, 96
  %v3354 = vpop.permute.xlu0 %3353
  %3355 = vrot.lane.b32.xlu0 %v1560, 96
  %v3356 = vpop.permute.xlu0 %3355
  %3357 = vrot.lane.b32.xlu0 %v1561, 96
  %v3358 = vpop.permute.xlu0 %3357
  %3375 = vmatprep.subr.bf16.mxu0 0
  %3376 = vmatpush1.bf16.msra.mxu0 %v3328
  %3377 = vmatprep.subr.bf16.mxu0 0
  %3378 = vmatpush1.bf16.msra.mxu0 %v3330
  %3379 = vmatprep.subr.bf16.mxu0 0
  %3380 = vmatpush1.bf16.msra.mxu0 %v3332
  %3381 = vmatprep.subr.bf16.mxu0 0
  %3382 = vmatpush1.bf16.msra.mxu0 %v3334
  %3383 = vmatprep.subr.bf16.mxu0 0
  %3384 = vmatpush1.bf16.msra.mxu0 %v3336
  %3385 = vmatprep.subr.bf16.mxu0 0
  %3386 = vmatpush1.bf16.msra.mxu0 %v3338
  %3387 = vmatprep.subr.bf16.mxu0 0
  %3388 = vmatpush1.bf16.msra.mxu0 %v3340
  %3389 = vmatprep.subr.bf16.mxu0 0
  %3390 = vmatpush1.bf16.msra.mxu0 %v3342
  %3391 = vmatprep.subr.bf16.mxu0 0
  %3392 = vmatpush1.bf16.msra.mxu0 %v3344
  %3393 = vmatprep.subr.bf16.mxu0 0
  %3394 = vmatpush1.bf16.msra.mxu0 %v3346
  %3395 = vmatprep.subr.bf16.mxu0 0
  %3396 = vmatpush1.bf16.msra.mxu0 %v3348
  %3397 = vmatprep.subr.bf16.mxu0 0
  %3398 = vmatpush1.bf16.msra.mxu0 %v3350
  %3399 = vmatprep.subr.bf16.mxu0 0
  %3400 = vmatpush1.bf16.msra.mxu0 %v3352
  %3401 = vmatprep.subr.bf16.mxu0 0
  %3402 = vmatpush1.bf16.msra.mxu0 %v3354
  %3403 = vmatprep.subr.bf16.mxu0 0
  %3404 = vmatpush1.bf16.msra.mxu0 %v3356
  %3405 = vmatprep.subr.bf16.mxu0 0
  %3406 = vmatpush1.bf16.msra.mxu0 %v3358
  %3407 = vmatprep.mubr.bf16.mxu0 %v3296
  %3408 = vmatmul.mubr.bf16.gmra.mrb[0].mxu0 %v3295
  %v3409 = vpop.f32.mrb[0].mxu0
  %v3410 = vadd.f32 0.0, %v3409
  %v3411 = vpop.f32.mrb[0].mxu0
  %v3412 = vpop.f32.mrb[0].mxu0
  %v3413 = vadd.f32 0.0, %v3412
  %v3414 = vpop.f32.mrb[0].mxu0
  %3415 = vmatprep.mubr.bf16.mxu0 %v3298
  %3416 = vmatmul.mubr.bf16.gmra.mrb[0].mxu0 %v3297
  %v3417 = vpop.f32.mrb[0].mxu0
  %v3418 = vadd.f32 0.0, %v3417
  %v3419 = vpop.f32.mrb[0].mxu0
  %v3420 = vpop.f32.mrb[0].mxu0
  %v3421 = vadd.f32 0.0, %v3420
  %v3422 = vpop.f32.mrb[0].mxu0
  %3423 = vmatprep.mubr.bf16.mxu0 %v3300
  %3424 = vmatmul.mubr.bf16.gmra.mrb[0].mxu0 %v3299
  %v3425 = vpop.f32.mrb[0].mxu0
  %v3426 = vadd.f32 0.0, %v3425
  %v3427 = vpop.f32.mrb[0].mxu0
  %v3428 = vpop.f32.mrb[0].mxu0
  %v3429 = vadd.f32 0.0, %v3428
  %v3430 = vpop.f32.mrb[0].mxu0
  %3431 = vmatprep.mubr.bf16.mxu0 %v3302
  %3432 = vmatmul.mubr.bf16.gmra.mrb[0].mxu0 %v3301
  %v3433 = vpop.f32.mrb[0].mxu0
  %v3434 = vadd.f32 0.0, %v3433
  %v3435 = vpop.f32.mrb[0].mxu0
  %v3436 = vpop.f32.mrb[0].mxu0
  %v3437 = vadd.f32 0.0, %v3436
  %v3438 = vpop.f32.mrb[0].mxu0
  %3439 = vmatprep.mubr.bf16.mxu0 %v3304
  %3440 = vmatmul.mubr.bf16.gmra.mrb[0].mxu0 %v3303
  %v3441 = vpop.f32.mrb[0].mxu0
  %v3442 = vadd.f32 0.0, %v3441
  %v3443 = vpop.f32.mrb[0].mxu0
  %v3444 = vpop.f32.mrb[0].mxu0
  %v3445 = vadd.f32 0.0, %v3444
  %v3446 = vpop.f32.mrb[0].mxu0
  %3447 = vmatprep.mubr.bf16.mxu0 %v3306
  %3448 = vmatmul.mubr.bf16.gmra.mrb[0].mxu0 %v3305
  %v3449 = vpop.f32.mrb[0].mxu0
  %v3450 = vadd.f32 0.0, %v3449
  %v3451 = vpop.f32.mrb[0].mxu0
  %v3452 = vpop.f32.mrb[0].mxu0
  %v3453 = vadd.f32 0.0, %v3452
  %v3454 = vpop.f32.mrb[0].mxu0
  %3455 = vmatprep.mubr.bf16.mxu0 %v3308
  %3456 = vmatmul.mubr.bf16.gmra.mrb[0].mxu0 %v3307
  %v3457 = vpop.f32.mrb[0].mxu0
  %v3458 = vadd.f32 0.0, %v3457
  %v3459 = vpop.f32.mrb[0].mxu0
  %v3460 = vpop.f32.mrb[0].mxu0
  %v3461 = vadd.f32 0.0, %v3460
  %v3462 = vpop.f32.mrb[0].mxu0
  %3463 = vmatprep.mubr.bf16.mxu0 %v3310
  %3464 = vmatmul.mubr.bf16.gmra.mrb[0].mxu0 %v3309
  %v3465 = vpop.f32.mrb[0].mxu0
  %v3466 = vadd.f32 0.0, %v3465
  %v3467 = vpop.f32.mrb[0].mxu0
  %v3468 = vpop.f32.mrb[0].mxu0
  %v3469 = vadd.f32 0.0, %v3468
  %v3470 = vpop.f32.mrb[0].mxu0
  %3471 = vmatprep.mubr.bf16.mxu0 %v3312
  %3472 = vmatmul.mubr.bf16.gmra.mrb[0].mxu0 %v3311
  %v3473 = vpop.f32.mrb[0].mxu0
  %v3474 = vadd.f32 0.0, %v3473
  %v3475 = vpop.f32.mrb[0].mxu0
  %v3476 = vpop.f32.mrb[0].mxu0
  %v3477 = vadd.f32 0.0, %v3476
  %v3478 = vpop.f32.mrb[0].mxu0
  %3479 = vmatprep.mubr.bf16.mxu0 %v3314
  %3480 = vmatmul.mubr.bf16.gmra.mrb[0].mxu0 %v3313
  %v3481 = vpop.f32.mrb[0].mxu0
  %v3482 = vadd.f32 0.0, %v3481
  %v3483 = vpop.f32.mrb[0].mxu0
  %v3484 = vpop.f32.mrb[0].mxu0
  %v3485 = vadd.f32 0.0, %v3484
  %v3486 = vpop.f32.mrb[0].mxu0
  %3487 = vmatprep.mubr.bf16.mxu0 %v3316
  %3488 = vmatmul.mubr.bf16.gmra.mrb[0].mxu0 %v3315
  %v3489 = vpop.f32.mrb[0].mxu0
  %v3490 = vadd.f32 0.0, %v3489
  %v3491 = vpop.f32.mrb[0].mxu0
  %v3492 = vpop.f32.mrb[0].mxu0
  %v3493 = vadd.f32 0.0, %v3492
  %v3494 = vpop.f32.mrb[0].mxu0
  %3495 = vmatprep.mubr.bf16.mxu0 %v3318
  %3496 = vmatmul.mubr.bf16.gmra.mrb[0].mxu0 %v3317
  %v3497 = vpop.f32.mrb[0].mxu0
  %v3498 = vadd.f32 0.0, %v3497
  %v3499 = vpop.f32.mrb[0].mxu0
  %v3500 = vpop.f32.mrb[0].mxu0
  %v3501 = vadd.f32 0.0, %v3500
  %v3502 = vpop.f32.mrb[0].mxu0
  %3503 = vmatprep.mubr.bf16.mxu0 %v3320
  %3504 = vmatmul.mubr.bf16.gmra.mrb[0].mxu0 %v3319
  %v3505 = vpop.f32.mrb[0].mxu0
  %v3506 = vadd.f32 0.0, %v3505
  %v3507 = vpop.f32.mrb[0].mxu0
  %v3508 = vpop.f32.mrb[0].mxu0
  %v3509 = vadd.f32 0.0, %v3508
  %v3510 = vpop.f32.mrb[0].mxu0
  %3511 = vmatprep.mubr.bf16.mxu0 %v3322
  %3512 = vmatmul.mubr.bf16.gmra.mrb[0].mxu0 %v3321
  %v3513 = vpop.f32.mrb[0].mxu0
  %v3514 = vadd.f32 0.0, %v3513
  %v3515 = vpop.f32.mrb[0].mxu0
  %v3516 = vpop.f32.mrb[0].mxu0
  %v3517 = vadd.f32 0.0, %v3516
  %v3518 = vpop.f32.mrb[0].mxu0
  %3519 = vmatprep.mubr.bf16.mxu0 %v3324
  %3520 = vmatmul.mubr.bf16.gmra.mrb[0].mxu0 %v3323
  %v3521 = vpop.f32.mrb[0].mxu0
  %v3522 = vadd.f32 0.0, %v3521
  %v3523 = vpop.f32.mrb[0].mxu0
  %v3524 = vpop.f32.mrb[0].mxu0
  %v3525 = vadd.f32 0.0, %v3524
  %v3526 = vpop.f32.mrb[0].mxu0
  %3527 = vmatprep.mubr.bf16.mxu0 %v3326
  %3528 = vmatmul.mubr.bf16.gmra.mrb[0].mxu0 %v3325
  %v3529 = vpop.f32.mrb[0].mxu0
  %v3530 = vadd.f32 0.0, %v3529
  %v3531 = vpop.f32.mrb[0].mxu0
  %v3532 = vpop.f32.mrb[0].mxu0
  %v3533 = vadd.f32 0.0, %v3532
  %v3534 = vpop.f32.mrb[0].mxu0
  %3535 = vdwg.mxu0
  %v3536 = vld [vmem:[#allocation4] sm:$0xff]
  %v3537 = vld [vmem:[#allocation4 + $0x8] sm:$0xff]
  %v3538 = vld [vmem:[#allocation4 + $0x10] sm:$0xff]
  %v3539 = vld [vmem:[#allocation4 + $0x18] sm:$0xff]
  %v3540 = vld [vmem:[#allocation4 + $0x20] sm:$0xff]
  %v3541 = vld [vmem:[#allocation4 + $0x28] sm:$0xff]
  %v3542 = vld [vmem:[#allocation4 + $0x30] sm:$0xff]
  %v3543 = vld [vmem:[#allocation4 + $0x38] sm:$0xff]
  %v3544 = vld [vmem:[#allocation4 + $0x40] sm:$0xff]
  %v3545 = vld [vmem:[#allocation4 + $0x48] sm:$0xff]
  %v3546 = vld [vmem:[#allocation4 + $0x50] sm:$0xff]
  %v3547 = vld [vmem:[#allocation4 + $0x58] sm:$0xff]
  %v3548 = vld [vmem:[#allocation4 + $0x60] sm:$0xff]
  %v3549 = vld [vmem:[#allocation4 + $0x68] sm:$0xff]
  %v3550 = vld [vmem:[#allocation4 + $0x70] sm:$0xff]
  %v3551 = vld [vmem:[#allocation4 + $0x78] sm:$0xff]
  %v3552 = vld [vmem:[#allocation4 + $0x80] sm:$0xff]
  %v3553 = vld [vmem:[#allocation4 + $0x88] sm:$0xff]
  %v3554 = vld [vmem:[#allocation4 + $0x90] sm:$0xff]
  %v3555 = vld [vmem:[#allocation4 + $0x98] sm:$0xff]
  %v3556 = vld [vmem:[#allocation4 + $0xa0] sm:$0xff]
  %v3557 = vld [vmem:[#allocation4 + $0xa8] sm:$0xff]
  %v3558 = vld [vmem:[#allocation4 + $0xb0] sm:$0xff]
  %v3559 = vld [vmem:[#allocation4 + $0xb8] sm:$0xff]
  %v3560 = vld [vmem:[#allocation4 + $0xc0] sm:$0xff]
  %v3561 = vld [vmem:[#allocation4 + $0xc8] sm:$0xff]
  %v3562 = vld [vmem:[#allocation4 + $0xd0] sm:$0xff]
  %v3563 = vld [vmem:[#allocation4 + $0xd8] sm:$0xff]
  %v3564 = vld [vmem:[#allocation4 + $0xe0] sm:$0xff]
  %v3565 = vld [vmem:[#allocation4 + $0xe8] sm:$0xff]
  %v3566 = vld [vmem:[#allocation4 + $0xf0] sm:$0xff]
  %v3567 = vld [vmem:[#allocation4 + $0xf8] sm:$0xff]
  %3569 = vset.pattern.permute.xlu0 1
  %3570 = vperm.xlu0 %3569, %v2655
  %v3571 = vpop.permute.xlu0 %3570
  %3574 = vset.pattern.permute.xlu0 1
  %3575 = vperm.xlu0 %3574, %v2657
  %v3576 = vpop.permute.xlu0 %3575
  %3579 = vset.pattern.permute.xlu0 1
  %3580 = vperm.xlu0 %3579, %v2659
  %v3581 = vpop.permute.xlu0 %3580
  %3584 = vset.pattern.permute.xlu0 1
  %3585 = vperm.xlu0 %3584, %v2661
  %v3586 = vpop.permute.xlu0 %3585
  %3589 = vset.pattern.permute.xlu0 1
  %3590 = vperm.xlu0 %3589, %v2663
  %v3591 = vpop.permute.xlu0 %3590
  %3594 = vset.pattern.permute.xlu0 1
  %3595 = vperm.xlu0 %3594, %v2665
  %v3596 = vpop.permute.xlu0 %3595
  %3599 = vset.pattern.permute.xlu0 1
  %3600 = vperm.xlu0 %3599, %v2667
  %v3601 = vpop.permute.xlu0 %3600
  %3604 = vset.pattern.permute.xlu0 1
  %3605 = vperm.xlu0 %3604, %v2669
  %v3606 = vpop.permute.xlu0 %3605
  %3609 = vset.pattern.permute.xlu0 1
  %3610 = vperm.xlu0 %3609, %v2671
  %v3611 = vpop.permute.xlu0 %3610
  %3614 = vset.pattern.permute.xlu0 1
  %3615 = vperm.xlu0 %3614, %v2673
  %v3616 = vpop.permute.xlu0 %3615
  %3619 = vset.pattern.permute.xlu0 1
  %3620 = vperm.xlu0 %3619, %v2675
  %v3621 = vpop.permute.xlu0 %3620
  %3624 = vset.pattern.permute.xlu0 1
  %3625 = vperm.xlu0 %3624, %v2677
  %v3626 = vpop.permute.xlu0 %3625
  %3629 = vset.pattern.permute.xlu0 1
  %3630 = vperm.xlu0 %3629, %v2679
  %v3631 = vpop.permute.xlu0 %3630
  %3634 = vset.pattern.permute.xlu0 1
  %3635 = vperm.xlu0 %3634, %v2681
  %v3636 = vpop.permute.xlu0 %3635
  %3639 = vset.pattern.permute.xlu0 1
  %3640 = vperm.xlu0 %3639, %v2683
  %v3641 = vpop.permute.xlu0 %3640
  %3644 = vset.pattern.permute.xlu0 1
  %3645 = vperm.xlu0 %3644, %v2685
  %v3646 = vpop.permute.xlu0 %3645
  %3649 = vset.pattern.permute.xlu0 1
  %3650 = vperm.xlu0 %3649, %v2687
  %v3651 = vpop.permute.xlu0 %3650
  %3654 = vset.pattern.permute.xlu0 1
  %3655 = vperm.xlu0 %3654, %v2689
  %v3656 = vpop.permute.xlu0 %3655
  %3659 = vset.pattern.permute.xlu0 1
  %3660 = vperm.xlu0 %3659, %v2691
  %v3661 = vpop.permute.xlu0 %3660
  %3664 = vset.pattern.permute.xlu0 1
  %3665 = vperm.xlu0 %3664, %v2693
  %v3666 = vpop.permute.xlu0 %3665
  %3669 = vset.pattern.permute.xlu0 1
  %3670 = vperm.xlu0 %3669, %v2695
  %v3671 = vpop.permute.xlu0 %3670
  %3674 = vset.pattern.permute.xlu0 1
  %3675 = vperm.xlu0 %3674, %v2697
  %v3676 = vpop.permute.xlu0 %3675
  %3679 = vset.pattern.permute.xlu0 1
  %3680 = vperm.xlu0 %3679, %v2699
  %v3681 = vpop.permute.xlu0 %3680
  %3684 = vset.pattern.permute.xlu0 1
  %3685 = vperm.xlu0 %3684, %v2701
  %v3686 = vpop.permute.xlu0 %3685
  %3689 = vset.pattern.permute.xlu0 1
  %3690 = vperm.xlu0 %3689, %v2703
  %v3691 = vpop.permute.xlu0 %3690
  %3694 = vset.pattern.permute.xlu0 1
  %3695 = vperm.xlu0 %3694, %v2705
  %v3696 = vpop.permute.xlu0 %3695
  %3699 = vset.pattern.permute.xlu0 1
  %3700 = vperm.xlu0 %3699, %v2707
  %v3701 = vpop.permute.xlu0 %3700
  %3704 = vset.pattern.permute.xlu0 1
  %3705 = vperm.xlu0 %3704, %v2709
  %v3706 = vpop.permute.xlu0 %3705
  %3709 = vset.pattern.permute.xlu0 1
  %3710 = vperm.xlu0 %3709, %v2711
  %v3711 = vpop.permute.xlu0 %3710
  %3714 = vset.pattern.permute.xlu0 1
  %3715 = vperm.xlu0 %3714, %v2713
  %v3716 = vpop.permute.xlu0 %3715
  %3719 = vset.pattern.permute.xlu0 1
  %3720 = vperm.xlu0 %3719, %v2715
  %v3721 = vpop.permute.xlu0 %3720
  %3724 = vset.pattern.permute.xlu0 1
  %3725 = vperm.xlu0 %3724, %v2717
  %v3726 = vpop.permute.xlu0 %3725
  %v3728 = vmul.f32 %v3571, %v3536
  %v3729 = vmul.f32 %v3576, %v3537
  %v3730 = vmul.f32 %v3581, %v3538
  %v3731 = vmul.f32 %v3586, %v3539
  %v3732 = vmul.f32 %v3591, %v3540
  %v3733 = vmul.f32 %v3596, %v3541
  %v3734 = vmul.f32 %v3601, %v3542
  %v3735 = vmul.f32 %v3606, %v3543
  %v3736 = vmul.f32 %v3611, %v3544
  %v3737 = vmul.f32 %v3616, %v3545
  %v3738 = vmul.f32 %v3621, %v3546
  %v3739 = vmul.f32 %v3626, %v3547
  %v3740 = vmul.f32 %v3631, %v3548
  %v3741 = vmul.f32 %v3636, %v3549
  %v3742 = vmul.f32 %v3641, %v3550
  %v3743 = vmul.f32 %v3646, %v3551
  %v3744 = vmul.f32 %v3651, %v3552
  %v3745 = vmul.f32 %v3656, %v3553
  %v3746 = vmul.f32 %v3661, %v3554
  %v3747 = vmul.f32 %v3666, %v3555
  %v3748 = vmul.f32 %v3671, %v3556
  %v3749 = vmul.f32 %v3676, %v3557
  %v3750 = vmul.f32 %v3681, %v3558
  %v3751 = vmul.f32 %v3686, %v3559
  %v3752 = vmul.f32 %v3691, %v3560
  %v3753 = vmul.f32 %v3696, %v3561
  %v3754 = vmul.f32 %v3701, %v3562
  %v3755 = vmul.f32 %v3706, %v3563
  %v3756 = vmul.f32 %v3711, %v3564
  %v3757 = vmul.f32 %v3716, %v3565
  %v3758 = vmul.f32 %v3721, %v3566
  %v3759 = vmul.f32 %v3726, %v3567
  %3792 = vrot.lane.b32.xlu0 %v3410, 32
  %v3793 = vpop.permute.xlu0 %3792
  %3794 = vrot.lane.b32.xlu0 %v3413, 32
  %v3795 = vpop.permute.xlu0 %3794
  %3796 = vrot.lane.b32.xlu0 %v3418, 32
  %v3797 = vpop.permute.xlu0 %3796
  %3798 = vrot.lane.b32.xlu0 %v3421, 32
  %v3799 = vpop.permute.xlu0 %3798
  %3800 = vrot.lane.b32.xlu0 %v3426, 32
  %v3801 = vpop.permute.xlu0 %3800
  %3802 = vrot.lane.b32.xlu0 %v3429, 32
  %v3803 = vpop.permute.xlu0 %3802
  %3804 = vrot.lane.b32.xlu0 %v3434, 32
  %v3805 = vpop.permute.xlu0 %3804
  %3806 = vrot.lane.b32.xlu0 %v3437, 32
  %v3807 = vpop.permute.xlu0 %3806
  %3808 = vrot.lane.b32.xlu0 %v3442, 32
  %v3809 = vpop.permute.xlu0 %3808
  %3810 = vrot.lane.b32.xlu0 %v3445, 32
  %v3811 = vpop.permute.xlu0 %3810
  %3812 = vrot.lane.b32.xlu0 %v3450, 32
  %v3813 = vpop.permute.xlu0 %3812
  %3814 = vrot.lane.b32.xlu0 %v3453, 32
  %v3815 = vpop.permute.xlu0 %3814
  %3816 = vrot.lane.b32.xlu0 %v3458, 32
  %v3817 = vpop.permute.xlu0 %3816
  %3818 = vrot.lane.b32.xlu0 %v3461, 32
  %v3819 = vpop.permute.xlu0 %3818
  %3820 = vrot.lane.b32.xlu0 %v3466, 32
  %v3821 = vpop.permute.xlu0 %3820
  %3822 = vrot.lane.b32.xlu0 %v3469, 32
  %v3823 = vpop.permute.xlu0 %3822
  %3824 = vrot.lane.b32.xlu0 %v3474, 32
  %v3825 = vpop.permute.xlu0 %3824
  %3826 = vrot.lane.b32.xlu0 %v3477, 32
  %v3827 = vpop.permute.xlu0 %3826
  %3828 = vrot.lane.b32.xlu0 %v3482, 32
  %v3829 = vpop.permute.xlu0 %3828
  %3830 = vrot.lane.b32.xlu0 %v3485, 32
  %v3831 = vpop.permute.xlu0 %3830
  %3832 = vrot.lane.b32.xlu0 %v3490, 32
  %v3833 = vpop.permute.xlu0 %3832
  %3834 = vrot.lane.b32.xlu0 %v3493, 32
  %v3835 = vpop.permute.xlu0 %3834
  %3836 = vrot.lane.b32.xlu0 %v3498, 32
  %v3837 = vpop.permute.xlu0 %3836
  %3838 = vrot.lane.b32.xlu0 %v3501, 32
  %v3839 = vpop.permute.xlu0 %3838
  %3840 = vrot.lane.b32.xlu0 %v3506, 32
  %v3841 = vpop.permute.xlu0 %3840
  %3842 = vrot.lane.b32.xlu0 %v3509, 32
  %v3843 = vpop.permute.xlu0 %3842
  %3844 = vrot.lane.b32.xlu0 %v3514, 32
  %v3845 = vpop.permute.xlu0 %3844
  %3846 = vrot.lane.b32.xlu0 %v3517, 32
  %v3847 = vpop.permute.xlu0 %3846
  %3848 = vrot.lane.b32.xlu0 %v3522, 32
  %v3849 = vpop.permute.xlu0 %3848
  %3850 = vrot.lane.b32.xlu0 %v3525, 32
  %v3851 = vpop.permute.xlu0 %3850
  %3852 = vrot.lane.b32.xlu0 %v3530, 32
  %v3853 = vpop.permute.xlu0 %3852
  %3854 = vrot.lane.b32.xlu0 %v3533, 32
  %v3855 = vpop.permute.xlu0 %3854
  %v3888 = vadd.f32 %v3728, %v3793
  %v3889 = vadd.f32 %v3729, %v3795
  %v3890 = vadd.f32 %v3730, %v3797
  %v3891 = vadd.f32 %v3731, %v3799
  %v3892 = vadd.f32 %v3732, %v3801
  %v3893 = vadd.f32 %v3733, %v3803
  %v3894 = vadd.f32 %v3734, %v3805
  %v3895 = vadd.f32 %v3735, %v3807
  %v3896 = vadd.f32 %v3736, %v3809
  %v3897 = vadd.f32 %v3737, %v3811
  %v3898 = vadd.f32 %v3738, %v3813
  %v3899 = vadd.f32 %v3739, %v3815
  %v3900 = vadd.f32 %v3740, %v3817
  %v3901 = vadd.f32 %v3741, %v3819
  %v3902 = vadd.f32 %v3742, %v3821
  %v3903 = vadd.f32 %v3743, %v3823
  %v3904 = vadd.f32 %v3744, %v3825
  %v3905 = vadd.f32 %v3745, %v3827
  %v3906 = vadd.f32 %v3746, %v3829
  %v3907 = vadd.f32 %v3747, %v3831
  %v3908 = vadd.f32 %v3748, %v3833
  %v3909 = vadd.f32 %v3749, %v3835
  %v3910 = vadd.f32 %v3750, %v3837
  %v3911 = vadd.f32 %v3751, %v3839
  %v3912 = vadd.f32 %v3752, %v3841
  %v3913 = vadd.f32 %v3753, %v3843
  %v3914 = vadd.f32 %v3754, %v3845
  %v3915 = vadd.f32 %v3755, %v3847
  %v3916 = vadd.f32 %v3756, %v3849
  %v3917 = vadd.f32 %v3757, %v3851
  %v3918 = vadd.f32 %v3758, %v3853
  %v3919 = vadd.f32 %v3759, %v3855
  %vm3920 = vcmask 523520
  %3921 = vst.msk [vmem:[#allocation4] sm:$0xff] %vm3920, %v3888
  %3922 = vst.msk [vmem:[#allocation4 + $0x8] sm:$0xff] %vm3920, %v3889
  %3923 = vst.msk [vmem:[#allocation4 + $0x10] sm:$0xff] %vm3920, %v3890
  %3924 = vst.msk [vmem:[#allocation4 + $0x18] sm:$0xff] %vm3920, %v3891
  %3925 = vst.msk [vmem:[#allocation4 + $0x20] sm:$0xff] %vm3920, %v3892
  %3926 = vst.msk [vmem:[#allocation4 + $0x28] sm:$0xff] %vm3920, %v3893
  %3927 = vst.msk [vmem:[#allocation4 + $0x30] sm:$0xff] %vm3920, %v3894
  %3928 = vst.msk [vmem:[#allocation4 + $0x38] sm:$0xff] %vm3920, %v3895
  %3929 = vst.msk [vmem:[#allocation4 + $0x40] sm:$0xff] %vm3920, %v3896
  %3930 = vst.msk [vmem:[#allocation4 + $0x48] sm:$0xff] %vm3920, %v3897
  %3931 = vst.msk [vmem:[#allocation4 + $0x50] sm:$0xff] %vm3920, %v3898
  %3932 = vst.msk [vmem:[#allocation4 + $0x58] sm:$0xff] %vm3920, %v3899
  %3933 = vst.msk [vmem:[#allocation4 + $0x60] sm:$0xff] %vm3920, %v3900
  %3934 = vst.msk [vmem:[#allocation4 + $0x68] sm:$0xff] %vm3920, %v3901
  %3935 = vst.msk [vmem:[#allocation4 + $0x70] sm:$0xff] %vm3920, %v3902
  %3936 = vst.msk [vmem:[#allocation4 + $0x78] sm:$0xff] %vm3920, %v3903
  %3937 = vst.msk [vmem:[#allocation4 + $0x80] sm:$0xff] %vm3920, %v3904
  %3938 = vst.msk [vmem:[#allocation4 + $0x88] sm:$0xff] %vm3920, %v3905
  %3939 = vst.msk [vmem:[#allocation4 + $0x90] sm:$0xff] %vm3920, %v3906
  %3940 = vst.msk [vmem:[#allocation4 + $0x98] sm:$0xff] %vm3920, %v3907
  %3941 = vst.msk [vmem:[#allocation4 + $0xa0] sm:$0xff] %vm3920, %v3908
  %3942 = vst.msk [vmem:[#allocation4 + $0xa8] sm:$0xff] %vm3920, %v3909
  %3943 = vst.msk [vmem:[#allocation4 + $0xb0] sm:$0xff] %vm3920, %v3910
  %3944 = vst.msk [vmem:[#allocation4 + $0xb8] sm:$0xff] %vm3920, %v3911
  %3945 = vst.msk [vmem:[#allocation4 + $0xc0] sm:$0xff] %vm3920, %v3912
  %3946 = vst.msk [vmem:[#allocation4 + $0xc8] sm:$0xff] %vm3920, %v3913
  %3947 = vst.msk [vmem:[#allocation4 + $0xd0] sm:$0xff] %vm3920, %v3914
  %3948 = vst.msk [vmem:[#allocation4 + $0xd8] sm:$0xff] %vm3920, %v3915
  %3949 = vst.msk [vmem:[#allocation4 + $0xe0] sm:$0xff] %vm3920, %v3916
  %3950 = vst.msk [vmem:[#allocation4 + $0xe8] sm:$0xff] %vm3920, %v3917
  %3951 = vst.msk [vmem:[#allocation4 + $0xf0] sm:$0xff] %vm3920, %v3918
  %3952 = vst.msk [vmem:[#allocation4 + $0xf8] sm:$0xff] %vm3920, %v3919
  %3953 = vst.msk [vmem:[#allocation2] sm:$0xff] %vm3262, %v2590
  %3954 = vst.msk [vmem:[#allocation2 + $0x8] sm:$0xff] %vm3262, %v2591
  %3955 = vst.msk [vmem:[#allocation2 + $0x10] sm:$0xff] %vm3262, %v2592
  %3956 = vst.msk [vmem:[#allocation2 + $0x18] sm:$0xff] %vm3262, %v2593
  %3957 = vst.msk [vmem:[#allocation2 + $0x20] sm:$0xff] %vm3262, %v2594
  %3958 = vst.msk [vmem:[#allocation2 + $0x28] sm:$0xff] %vm3262, %v2595
  %3959 = vst.msk [vmem:[#allocation2 + $0x30] sm:$0xff] %vm3262, %v2596
  %3960 = vst.msk [vmem:[#allocation2 + $0x38] sm:$0xff] %vm3262, %v2597
  %3961 = vst.msk [vmem:[#allocation2 + $0x40] sm:$0xff] %vm3262, %v2598
  %3962 = vst.msk [vmem:[#allocation2 + $0x48] sm:$0xff] %vm3262, %v2599
  %3963 = vst.msk [vmem:[#allocation2 + $0x50] sm:$0xff] %vm3262, %v2600
  %3964 = vst.msk [vmem:[#allocation2 + $0x58] sm:$0xff] %vm3262, %v2601
  %3965 = vst.msk [vmem:[#allocation2 + $0x60] sm:$0xff] %vm3262, %v2602
  %3966 = vst.msk [vmem:[#allocation2 + $0x68] sm:$0xff] %vm3262, %v2603
  %3967 = vst.msk [vmem:[#allocation2 + $0x70] sm:$0xff] %vm3262, %v2604
  %3968 = vst.msk [vmem:[#allocation2 + $0x78] sm:$0xff] %vm3262, %v2605
  %3969 = vst.msk [vmem:[#allocation2 + $0x80] sm:$0xff] %vm3262, %v2606
  %3970 = vst.msk [vmem:[#allocation2 + $0x88] sm:$0xff] %vm3262, %v2607
  %3971 = vst.msk [vmem:[#allocation2 + $0x90] sm:$0xff] %vm3262, %v2608
  %3972 = vst.msk [vmem:[#allocation2 + $0x98] sm:$0xff] %vm3262, %v2609
  %3973 = vst.msk [vmem:[#allocation2 + $0xa0] sm:$0xff] %vm3262, %v2610
  %3974 = vst.msk [vmem:[#allocation2 + $0xa8] sm:$0xff] %vm3262, %v2611
  %3975 = vst.msk [vmem:[#allocation2 + $0xb0] sm:$0xff] %vm3262, %v2612
  %3976 = vst.msk [vmem:[#allocation2 + $0xb8] sm:$0xff] %vm3262, %v2613
  %3977 = vst.msk [vmem:[#allocation2 + $0xc0] sm:$0xff] %vm3262, %v2614
  %3978 = vst.msk [vmem:[#allocation2 + $0xc8] sm:$0xff] %vm3262, %v2615
  %3979 = vst.msk [vmem:[#allocation2 + $0xd0] sm:$0xff] %vm3262, %v2616
  %3980 = vst.msk [vmem:[#allocation2 + $0xd8] sm:$0xff] %vm3262, %v2617
  %3981 = vst.msk [vmem:[#allocation2 + $0xe0] sm:$0xff] %vm3262, %v2618
  %3982 = vst.msk [vmem:[#allocation2 + $0xe8] sm:$0xff] %vm3262, %v2619
  %3983 = vst.msk [vmem:[#allocation2 + $0xf0] sm:$0xff] %vm3262, %v2620
  %3984 = vst.msk [vmem:[#allocation2 + $0xf8] sm:$0xff] %vm3262, %v2621
  // Predicated region
  $region18: #{tpu_custom_call.1} parent=0 // pred_check
    %p3985 = pneg %p15
  $region19: #{tpu_custom_call.1} parent=0 // pred_check_branch
    %3987 = sbr.rel (%p3985) target = $region21
  $region20: #{tpu_custom_call.1} parent=0 // pred_region
    %v3988 = vld [vmem:[#allocation3] sm:$0xff]
    %v3989 = vld [vmem:[#allocation3 + $0x8] sm:$0xff]
    %v3990 = vld [vmem:[#allocation3 + $0x10] sm:$0xff]
    %v3991 = vld [vmem:[#allocation3 + $0x18] sm:$0xff]
    %v3992 = vld [vmem:[#allocation3 + $0x20] sm:$0xff]
    %v3993 = vld [vmem:[#allocation3 + $0x28] sm:$0xff]
    %v3994 = vld [vmem:[#allocation3 + $0x30] sm:$0xff]
    %v3995 = vld [vmem:[#allocation3 + $0x38] sm:$0xff]
    %v3996 = vld [vmem:[#allocation3 + $0x40] sm:$0xff]
    %v3997 = vld [vmem:[#allocation3 + $0x48] sm:$0xff]
    %v3998 = vld [vmem:[#allocation3 + $0x50] sm:$0xff]
    %v3999 = vld [vmem:[#allocation3 + $0x58] sm:$0xff]
    %v4000 = vld [vmem:[#allocation3 + $0x60] sm:$0xff]
    %v4001 = vld [vmem:[#allocation3 + $0x68] sm:$0xff]
    %v4002 = vld [vmem:[#allocation3 + $0x70] sm:$0xff]
    %v4003 = vld [vmem:[#allocation3 + $0x78] sm:$0xff]
    %v4004 = vld [vmem:[#allocation3 + $0x80] sm:$0xff]
    %v4005 = vld [vmem:[#allocation3 + $0x88] sm:$0xff]
    %v4006 = vld [vmem:[#allocation3 + $0x90] sm:$0xff]
    %v4007 = vld [vmem:[#allocation3 + $0x98] sm:$0xff]
    %v4008 = vld [vmem:[#allocation3 + $0xa0] sm:$0xff]
    %v4009 = vld [vmem:[#allocation3 + $0xa8] sm:$0xff]
    %v4010 = vld [vmem:[#allocation3 + $0xb0] sm:$0xff]
    %v4011 = vld [vmem:[#allocation3 + $0xb8] sm:$0xff]
    %v4012 = vld [vmem:[#allocation3 + $0xc0] sm:$0xff]
    %v4013 = vld [vmem:[#allocation3 + $0xc8] sm:$0xff]
    %v4014 = vld [vmem:[#allocation3 + $0xd0] sm:$0xff]
    %v4015 = vld [vmem:[#allocation3 + $0xd8] sm:$0xff]
    %v4016 = vld [vmem:[#allocation3 + $0xe0] sm:$0xff]
    %v4017 = vld [vmem:[#allocation3 + $0xe8] sm:$0xff]
    %v4018 = vld [vmem:[#allocation3 + $0xf0] sm:$0xff]
    %v4019 = vld [vmem:[#allocation3 + $0xf8] sm:$0xff]
    %v4020 = vrcp.pop %v3988
    %v4021 = vrcp.pop %v3989
    %v4022 = vrcp.pop %v3990
    %v4023 = vrcp.pop %v3991
    %v4024 = vrcp.pop %v3992
    %v4025 = vrcp.pop %v3993
    %v4026 = vrcp.pop %v3994
    %v4027 = vrcp.pop %v3995
    %v4028 = vrcp.pop %v3996
    %v4029 = vrcp.pop %v3997
    %v4030 = vrcp.pop %v3998
    %v4031 = vrcp.pop %v3999
    %v4032 = vrcp.pop %v4000
    %v4033 = vrcp.pop %v4001
    %v4034 = vrcp.pop %v4002
    %v4035 = vrcp.pop %v4003
    %v4036 = vrcp.pop %v4004
    %v4037 = vrcp.pop %v4005
    %v4038 = vrcp.pop %v4006
    %v4039 = vrcp.pop %v4007
    %v4040 = vrcp.pop %v4008
    %v4041 = vrcp.pop %v4009
    %v4042 = vrcp.pop %v4010
    %v4043 = vrcp.pop %v4011
    %v4044 = vrcp.pop %v4012
    %v4045 = vrcp.pop %v4013
    %v4046 = vrcp.pop %v4014
    %v4047 = vrcp.pop %v4015
    %v4048 = vrcp.pop %v4016
    %v4049 = vrcp.pop %v4017
    %v4050 = vrcp.pop %v4018
    %v4051 = vrcp.pop %v4019
    %v4052 = vld [vmem:[#allocation4] sm:$0xff]
    %v4053 = vld [vmem:[#allocation4 + $0x8] sm:$0xff]
    %v4054 = vld [vmem:[#allocation4 + $0x10] sm:$0xff]
    %v4055 = vld [vmem:[#allocation4 + $0x18] sm:$0xff]
    %v4056 = vld [vmem:[#allocation4 + $0x20] sm:$0xff]
    %v4057 = vld [vmem:[#allocation4 + $0x28] sm:$0xff]
    %v4058 = vld [vmem:[#allocation4 + $0x30] sm:$0xff]
    %v4059 = vld [vmem:[#allocation4 + $0x38] sm:$0xff]
    %v4060 = vld [vmem:[#allocation4 + $0x40] sm:$0xff]
    %v4061 = vld [vmem:[#allocation4 + $0x48] sm:$0xff]
    %v4062 = vld [vmem:[#allocation4 + $0x50] sm:$0xff]
    %v4063 = vld [vmem:[#allocation4 + $0x58] sm:$0xff]
    %v4064 = vld [vmem:[#allocation4 + $0x60] sm:$0xff]
    %v4065 = vld [vmem:[#allocation4 + $0x68] sm:$0xff]
    %v4066 = vld [vmem:[#allocation4 + $0x70] sm:$0xff]
    %v4067 = vld [vmem:[#allocation4 + $0x78] sm:$0xff]
    %v4068 = vld [vmem:[#allocation4 + $0x80] sm:$0xff]
    %v4069 = vld [vmem:[#allocation4 + $0x88] sm:$0xff]
    %v4070 = vld [vmem:[#allocation4 + $0x90] sm:$0xff]
    %v4071 = vld [vmem:[#allocation4 + $0x98] sm:$0xff]
    %v4072 = vld [vmem:[#allocation4 + $0xa0] sm:$0xff]
    %v4073 = vld [vmem:[#allocation4 + $0xa8] sm:$0xff]
    %v4074 = vld [vmem:[#allocation4 + $0xb0] sm:$0xff]
    %v4075 = vld [vmem:[#allocation4 + $0xb8] sm:$0xff]
    %v4076 = vld [vmem:[#allocation4 + $0xc0] sm:$0xff]
    %v4077 = vld [vmem:[#allocation4 + $0xc8] sm:$0xff]
    %v4078 = vld [vmem:[#allocation4 + $0xd0] sm:$0xff]
    %v4079 = vld [vmem:[#allocation4 + $0xd8] sm:$0xff]
    %v4080 = vld [vmem:[#allocation4 + $0xe0] sm:$0xff]
    %v4081 = vld [vmem:[#allocation4 + $0xe8] sm:$0xff]
    %v4082 = vld [vmem:[#allocation4 + $0xf0] sm:$0xff]
    %v4083 = vld [vmem:[#allocation4 + $0xf8] sm:$0xff]
    %4085 = vset.pattern.permute.xlu0 0
    %4086 = vperm.xlu0 %4085, %v4020
    %v4087 = vpop.permute.xlu0 %4086
    %4090 = vset.pattern.permute.xlu0 0
    %4091 = vperm.xlu0 %4090, %v4021
    %v4092 = vpop.permute.xlu0 %4091
    %4095 = vset.pattern.permute.xlu0 0
    %4096 = vperm.xlu0 %4095, %v4022
    %v4097 = vpop.permute.xlu0 %4096
    %4100 = vset.pattern.permute.xlu0 0
    %4101 = vperm.xlu0 %4100, %v4023
    %v4102 = vpop.permute.xlu0 %4101
    %4105 = vset.pattern.permute.xlu0 0
    %4106 = vperm.xlu0 %4105, %v4024
    %v4107 = vpop.permute.xlu0 %4106
    %4110 = vset.pattern.permute.xlu0 0
    %4111 = vperm.xlu0 %4110, %v4025
    %v4112 = vpop.permute.xlu0 %4111
    %4115 = vset.pattern.permute.xlu0 0
    %4116 = vperm.xlu0 %4115, %v4026
    %v4117 = vpop.permute.xlu0 %4116
    %4120 = vset.pattern.permute.xlu0 0
    %4121 = vperm.xlu0 %4120, %v4027
    %v4122 = vpop.permute.xlu0 %4121
    %4125 = vset.pattern.permute.xlu0 0
    %4126 = vperm.xlu0 %4125, %v4028
    %v4127 = vpop.permute.xlu0 %4126
    %4130 = vset.pattern.permute.xlu0 0
    %4131 = vperm.xlu0 %4130, %v4029
    %v4132 = vpop.permute.xlu0 %4131
    %4135 = vset.pattern.permute.xlu0 0
    %4136 = vperm.xlu0 %4135, %v4030
    %v4137 = vpop.permute.xlu0 %4136
    %4140 = vset.pattern.permute.xlu0 0
    %4141 = vperm.xlu0 %4140, %v4031
    %v4142 = vpop.permute.xlu0 %4141
    %4145 = vset.pattern.permute.xlu0 0
    %4146 = vperm.xlu0 %4145, %v4032
    %v4147 = vpop.permute.xlu0 %4146
    %4150 = vset.pattern.permute.xlu0 0
    %4151 = vperm.xlu0 %4150, %v4033
    %v4152 = vpop.permute.xlu0 %4151
    %4155 = vset.pattern.permute.xlu0 0
    %4156 = vperm.xlu0 %4155, %v4034
    %v4157 = vpop.permute.xlu0 %4156
    %4160 = vset.pattern.permute.xlu0 0
    %4161 = vperm.xlu0 %4160, %v4035
    %v4162 = vpop.permute.xlu0 %4161
    %4165 = vset.pattern.permute.xlu0 0
    %4166 = vperm.xlu0 %4165, %v4036
    %v4167 = vpop.permute.xlu0 %4166
    %4170 = vset.pattern.permute.xlu0 0
    %4171 = vperm.xlu0 %4170, %v4037
    %v4172 = vpop.permute.xlu0 %4171
    %4175 = vset.pattern.permute.xlu0 0
    %4176 = vperm.xlu0 %4175, %v4038
    %v4177 = vpop.permute.xlu0 %4176
    %4180 = vset.pattern.permute.xlu0 0
    %4181 = vperm.xlu0 %4180, %v4039
    %v4182 = vpop.permute.xlu0 %4181
    %4185 = vset.pattern.permute.xlu0 0
    %4186 = vperm.xlu0 %4185, %v4040
    %v4187 = vpop.permute.xlu0 %4186
    %4190 = vset.pattern.permute.xlu0 0
    %4191 = vperm.xlu0 %4190, %v4041
    %v4192 = vpop.permute.xlu0 %4191
    %4195 = vset.pattern.permute.xlu0 0
    %4196 = vperm.xlu0 %4195, %v4042
    %v4197 = vpop.permute.xlu0 %4196
    %4200 = vset.pattern.permute.xlu0 0
    %4201 = vperm.xlu0 %4200, %v4043
    %v4202 = vpop.permute.xlu0 %4201
    %4205 = vset.pattern.permute.xlu0 0
    %4206 = vperm.xlu0 %4205, %v4044
    %v4207 = vpop.permute.xlu0 %4206
    %4210 = vset.pattern.permute.xlu0 0
    %4211 = vperm.xlu0 %4210, %v4045
    %v4212 = vpop.permute.xlu0 %4211
    %4215 = vset.pattern.permute.xlu0 0
    %4216 = vperm.xlu0 %4215, %v4046
    %v4217 = vpop.permute.xlu0 %4216
    %4220 = vset.pattern.permute.xlu0 0
    %4221 = vperm.xlu0 %4220, %v4047
    %v4222 = vpop.permute.xlu0 %4221
    %4225 = vset.pattern.permute.xlu0 0
    %4226 = vperm.xlu0 %4225, %v4048
    %v4227 = vpop.permute.xlu0 %4226
    %4230 = vset.pattern.permute.xlu0 0
    %4231 = vperm.xlu0 %4230, %v4049
    %v4232 = vpop.permute.xlu0 %4231
    %4235 = vset.pattern.permute.xlu0 0
    %4236 = vperm.xlu0 %4235, %v4050
    %v4237 = vpop.permute.xlu0 %4236
    %4240 = vset.pattern.permute.xlu0 0
    %4241 = vperm.xlu0 %4240, %v4051
    %v4242 = vpop.permute.xlu0 %4241
    %v4244 = vmul.f32 %v4052, %v4087
    %v4245 = vmul.f32 %v4053, %v4092
    %v4246 = vmul.f32 %v4054, %v4097
    %v4247 = vmul.f32 %v4055, %v4102
    %v4248 = vmul.f32 %v4056, %v4107
    %v4249 = vmul.f32 %v4057, %v4112
    %v4250 = vmul.f32 %v4058, %v4117
    %v4251 = vmul.f32 %v4059, %v4122
    %v4252 = vmul.f32 %v4060, %v4127
    %v4253 = vmul.f32 %v4061, %v4132
    %v4254 = vmul.f32 %v4062, %v4137
    %v4255 = vmul.f32 %v4063, %v4142
    %v4256 = vmul.f32 %v4064, %v4147
    %v4257 = vmul.f32 %v4065, %v4152
    %v4258 = vmul.f32 %v4066, %v4157
    %v4259 = vmul.f32 %v4067, %v4162
    %v4260 = vmul.f32 %v4068, %v4167
    %v4261 = vmul.f32 %v4069, %v4172
    %v4262 = vmul.f32 %v4070, %v4177
    %v4263 = vmul.f32 %v4071, %v4182
    %v4264 = vmul.f32 %v4072, %v4187
    %v4265 = vmul.f32 %v4073, %v4192
    %v4266 = vmul.f32 %v4074, %v4197
    %v4267 = vmul.f32 %v4075, %v4202
    %v4268 = vmul.f32 %v4076, %v4207
    %v4269 = vmul.f32 %v4077, %v4212
    %v4270 = vmul.f32 %v4078, %v4217
    %v4271 = vmul.f32 %v4079, %v4222
    %v4272 = vmul.f32 %v4080, %v4227
    %v4273 = vmul.f32 %v4081, %v4232
    %v4274 = vmul.f32 %v4082, %v4237
    %v4275 = vmul.f32 %v4083, %v4242
    %vm4276 = vcmp.gt.f32.partialorder %v4244, 0.0
    %vm4277 = vcmp.gt.f32.partialorder %v4245, 0.0
    %vm4278 = vcmp.gt.f32.partialorder %v4246, 0.0
    %vm4279 = vcmp.gt.f32.partialorder %v4247, 0.0
    %vm4280 = vcmp.gt.f32.partialorder %v4248, 0.0
    %vm4281 = vcmp.gt.f32.partialorder %v4249, 0.0
    %vm4282 = vcmp.gt.f32.partialorder %v4250, 0.0
    %vm4283 = vcmp.gt.f32.partialorder %v4251, 0.0
    %vm4284 = vcmp.gt.f32.partialorder %v4252, 0.0
    %vm4285 = vcmp.gt.f32.partialorder %v4253, 0.0
    %vm4286 = vcmp.gt.f32.partialorder %v4254, 0.0
    %vm4287 = vcmp.gt.f32.partialorder %v4255, 0.0
    %vm4288 = vcmp.gt.f32.partialorder %v4256, 0.0
    %vm4289 = vcmp.gt.f32.partialorder %v4257, 0.0
    %vm4290 = vcmp.gt.f32.partialorder %v4258, 0.0
    %vm4291 = vcmp.gt.f32.partialorder %v4259, 0.0
    %vm4292 = vcmp.gt.f32.partialorder %v4260, 0.0
    %vm4293 = vcmp.gt.f32.partialorder %v4261, 0.0
    %vm4294 = vcmp.gt.f32.partialorder %v4262, 0.0
    %vm4295 = vcmp.gt.f32.partialorder %v4263, 0.0
    %vm4296 = vcmp.gt.f32.partialorder %v4264, 0.0
    %vm4297 = vcmp.gt.f32.partialorder %v4265, 0.0
    %vm4298 = vcmp.gt.f32.partialorder %v4266, 0.0
    %vm4299 = vcmp.gt.f32.partialorder %v4267, 0.0
    %vm4300 = vcmp.gt.f32.partialorder %v4268, 0.0
    %vm4301 = vcmp.gt.f32.partialorder %v4269, 0.0
    %vm4302 = vcmp.gt.f32.partialorder %v4270, 0.0
    %vm4303 = vcmp.gt.f32.partialorder %v4271, 0.0
    %vm4304 = vcmp.gt.f32.partialorder %v4272, 0.0
    %vm4305 = vcmp.gt.f32.partialorder %v4273, 0.0
    %vm4306 = vcmp.gt.f32.partialorder %v4274, 0.0
    %vm4307 = vcmp.gt.f32.partialorder %v4275, 0.0
    %v4308 = vmin.f32 %v4244, 0.0
    %v4309 = vmin.f32 %v4245, 0.0
    %v4310 = vmin.f32 %v4246, 0.0
    %v4311 = vmin.f32 %v4247, 0.0
    %v4312 = vmin.f32 %v4248, 0.0
    %v4313 = vmin.f32 %v4249, 0.0
    %v4314 = vmin.f32 %v4250, 0.0
    %v4315 = vmin.f32 %v4251, 0.0
    %v4316 = vmin.f32 %v4252, 0.0
    %v4317 = vmin.f32 %v4253, 0.0
    %v4318 = vmin.f32 %v4254, 0.0
    %v4319 = vmin.f32 %v4255, 0.0
    %v4320 = vmin.f32 %v4256, 0.0
    %v4321 = vmin.f32 %v4257, 0.0
    %v4322 = vmin.f32 %v4258, 0.0
    %v4323 = vmin.f32 %v4259, 0.0
    %v4324 = vmin.f32 %v4260, 0.0
    %v4325 = vmin.f32 %v4261, 0.0
    %v4326 = vmin.f32 %v4262, 0.0
    %v4327 = vmin.f32 %v4263, 0.0
    %v4328 = vmin.f32 %v4264, 0.0
    %v4329 = vmin.f32 %v4265, 0.0
    %v4330 = vmin.f32 %v4266, 0.0
    %v4331 = vmin.f32 %v4267, 0.0
    %v4332 = vmin.f32 %v4268, 0.0
    %v4333 = vmin.f32 %v4269, 0.0
    %v4334 = vmin.f32 %v4270, 0.0
    %v4335 = vmin.f32 %v4271, 0.0
    %v4336 = vmin.f32 %v4272, 0.0
    %v4337 = vmin.f32 %v4273, 0.0
    %v4338 = vmin.f32 %v4274, 0.0
    %v4339 = vmin.f32 %v4275, 0.0
    %v4340 = vmul.f32 %v4308, 1.442695
    %v4341 = vpow.pop %v4340
    %v4342 = vmul.f32 %v4309, 1.442695
    %v4343 = vpow.pop %v4342
    %v4344 = vmul.f32 %v4310, 1.442695
    %v4345 = vpow.pop %v4344
    %v4346 = vmul.f32 %v4311, 1.442695
    %v4347 = vpow.pop %v4346
    %v4348 = vmul.f32 %v4312, 1.442695
    %v4349 = vpow.pop %v4348
    %v4350 = vmul.f32 %v4313, 1.442695
    %v4351 = vpow.pop %v4350
    %v4352 = vmul.f32 %v4314, 1.442695
    %v4353 = vpow.pop %v4352
    %v4354 = vmul.f32 %v4315, 1.442695
    %v4355 = vpow.pop %v4354
    %v4356 = vmul.f32 %v4316, 1.442695
    %v4357 = vpow.pop %v4356
    %v4358 = vmul.f32 %v4317, 1.442695
    %v4359 = vpow.pop %v4358
    %v4360 = vmul.f32 %v4318, 1.442695
    %v4361 = vpow.pop %v4360
    %v4362 = vmul.f32 %v4319, 1.442695
    %v4363 = vpow.pop %v4362
    %v4364 = vmul.f32 %v4320, 1.442695
    %v4365 = vpow.pop %v4364
    %v4366 = vmul.f32 %v4321, 1.442695
    %v4367 = vpow.pop %v4366
    %v4368 = vmul.f32 %v4322, 1.442695
    %v4369 = vpow.pop %v4368
    %v4370 = vmul.f32 %v4323, 1.442695
    %v4371 = vpow.pop %v4370
    %v4372 = vmul.f32 %v4324, 1.442695
    %v4373 = vpow.pop %v4372
    %v4374 = vmul.f32 %v4325, 1.442695
    %v4375 = vpow.pop %v4374
    %v4376 = vmul.f32 %v4326, 1.442695
    %v4377 = vpow.pop %v4376
    %v4378 = vmul.f32 %v4327, 1.442695
    %v4379 = vpow.pop %v4378
    %v4380 = vmul.f32 %v4328, 1.442695
    %v4381 = vpow.pop %v4380
    %v4382 = vmul.f32 %v4329, 1.442695
    %v4383 = vpow.pop %v4382
    %v4384 = vmul.f32 %v4330, 1.442695
    %v4385 = vpow.pop %v4384
    %v4386 = vmul.f32 %v4331, 1.442695
    %v4387 = vpow.pop %v4386
    %v4388 = vmul.f32 %v4332, 1.442695
    %v4389 = vpow.pop %v4388
    %v4390 = vmul.f32 %v4333, 1.442695
    %v4391 = vpow.pop %v4390
    %v4392 = vmul.f32 %v4334, 1.442695
    %v4393 = vpow.pop %v4392
    %v4394 = vmul.f32 %v4335, 1.442695
    %v4395 = vpow.pop %v4394
    %v4396 = vmul.f32 %v4336, 1.442695
    %v4397 = vpow.pop %v4396
    %v4398 = vmul.f32 %v4337, 1.442695
    %v4399 = vpow.pop %v4398
    %v4400 = vmul.f32 %v4338, 1.442695
    %v4401 = vpow.pop %v4400
    %v4402 = vmul.f32 %v4339, 1.442695
    %v4403 = vpow.pop %v4402
    %v4404 = vsub.f32 %v4341, 1.0
    %v4405 = vsub.f32 %v4343, 1.0
    %v4406 = vsub.f32 %v4345, 1.0
    %v4407 = vsub.f32 %v4347, 1.0
    %v4408 = vsub.f32 %v4349, 1.0
    %v4409 = vsub.f32 %v4351, 1.0
    %v4410 = vsub.f32 %v4353, 1.0
    %v4411 = vsub.f32 %v4355, 1.0
    %v4412 = vsub.f32 %v4357, 1.0
    %v4413 = vsub.f32 %v4359, 1.0
    %v4414 = vsub.f32 %v4361, 1.0
    %v4415 = vsub.f32 %v4363, 1.0
    %v4416 = vsub.f32 %v4365, 1.0
    %v4417 = vsub.f32 %v4367, 1.0
    %v4418 = vsub.f32 %v4369, 1.0
    %v4419 = vsub.f32 %v4371, 1.0
    %v4420 = vsub.f32 %v4373, 1.0
    %v4421 = vsub.f32 %v4375, 1.0
    %v4422 = vsub.f32 %v4377, 1.0
    %v4423 = vsub.f32 %v4379, 1.0
    %v4424 = vsub.f32 %v4381, 1.0
    %v4425 = vsub.f32 %v4383, 1.0
    %v4426 = vsub.f32 %v4385, 1.0
    %v4427 = vsub.f32 %v4387, 1.0
    %v4428 = vsub.f32 %v4389, 1.0
    %v4429 = vsub.f32 %v4391, 1.0
    %v4430 = vsub.f32 %v4393, 1.0
    %v4431 = vsub.f32 %v4395, 1.0
    %v4432 = vsub.f32 %v4397, 1.0
    %v4433 = vsub.f32 %v4399, 1.0
    %v4434 = vsub.f32 %v4401, 1.0
    %v4435 = vsub.f32 %v4403, 1.0
    %v4436 = vsel %vm4276, %v4244, %v4404
    %v4437 = vsel %vm4277, %v4245, %v4405
    %v4438 = vsel %vm4278, %v4246, %v4406
    %v4439 = vsel %vm4279, %v4247, %v4407
    %v4440 = vsel %vm4280, %v4248, %v4408
    %v4441 = vsel %vm4281, %v4249, %v4409
    %v4442 = vsel %vm4282, %v4250, %v4410
    %v4443 = vsel %vm4283, %v4251, %v4411
    %v4444 = vsel %vm4284, %v4252, %v4412
    %v4445 = vsel %vm4285, %v4253, %v4413
    %v4446 = vsel %vm4286, %v4254, %v4414
    %v4447 = vsel %vm4287, %v4255, %v4415
    %v4448 = vsel %vm4288, %v4256, %v4416
    %v4449 = vsel %vm4289, %v4257, %v4417
    %v4450 = vsel %vm4290, %v4258, %v4418
    %v4451 = vsel %vm4291, %v4259, %v4419
    %v4452 = vsel %vm4292, %v4260, %v4420
    %v4453 = vsel %vm4293, %v4261, %v4421
    %v4454 = vsel %vm4294, %v4262, %v4422
    %v4455 = vsel %vm4295, %v4263, %v4423
    %v4456 = vsel %vm4296, %v4264, %v4424
    %v4457 = vsel %vm4297, %v4265, %v4425
    %v4458 = vsel %vm4298, %v4266, %v4426
    %v4459 = vsel %vm4299, %v4267, %v4427
    %v4460 = vsel %vm4300, %v4268, %v4428
    %v4461 = vsel %vm4301, %v4269, %v4429
    %v4462 = vsel %vm4302, %v4270, %v4430
    %v4463 = vsel %vm4303, %v4271, %v4431
    %v4464 = vsel %vm4304, %v4272, %v4432
    %v4465 = vsel %vm4305, %v4273, %v4433
    %v4466 = vsel %vm4306, %v4274, %v4434
    %v4467 = vsel %vm4307, %v4275, %v4435
    %4468 = vset.pattern.permute.xlu0 1
    %4469 = vperm.xlu0 %4468, %v4020
    %v4470 = vpop.permute.xlu0 %4469
    %4472 = vset.pattern.permute.xlu0 1
    %4473 = vperm.xlu0 %4472, %v4021
    %v4474 = vpop.permute.xlu0 %4473
    %4476 = vset.pattern.permute.xlu0 1
    %4477 = vperm.xlu0 %4476, %v4022
    %v4478 = vpop.permute.xlu0 %4477
    %4480 = vset.pattern.permute.xlu0 1
    %4481 = vperm.xlu0 %4480, %v4023
    %v4482 = vpop.permute.xlu0 %4481
    %4484 = vset.pattern.permute.xlu0 1
    %4485 = vperm.xlu0 %4484, %v4024
    %v4486 = vpop.permute.xlu0 %4485
    %4488 = vset.pattern.permute.xlu0 1
    %4489 = vperm.xlu0 %4488, %v4025
    %v4490 = vpop.permute.xlu0 %4489
    %4492 = vset.pattern.permute.xlu0 1
    %4493 = vperm.xlu0 %4492, %v4026
    %v4494 = vpop.permute.xlu0 %4493
    %4496 = vset.pattern.permute.xlu0 1
    %4497 = vperm.xlu0 %4496, %v4027
    %v4498 = vpop.permute.xlu0 %4497
    %4500 = vset.pattern.permute.xlu0 1
    %4501 = vperm.xlu0 %4500, %v4028
    %v4502 = vpop.permute.xlu0 %4501
    %4504 = vset.pattern.permute.xlu0 1
    %4505 = vperm.xlu0 %4504, %v4029
    %v4506 = vpop.permute.xlu0 %4505
    %4508 = vset.pattern.permute.xlu0 1
    %4509 = vperm.xlu0 %4508, %v4030
    %v4510 = vpop.permute.xlu0 %4509
    %4512 = vset.pattern.permute.xlu0 1
    %4513 = vperm.xlu0 %4512, %v4031
    %v4514 = vpop.permute.xlu0 %4513
    %4516 = vset.pattern.permute.xlu0 1
    %4517 = vperm.xlu0 %4516, %v4032
    %v4518 = vpop.permute.xlu0 %4517
    %4520 = vset.pattern.permute.xlu0 1
    %4521 = vperm.xlu0 %4520, %v4033
    %v4522 = vpop.permute.xlu0 %4521
    %4524 = vset.pattern.permute.xlu0 1
    %4525 = vperm.xlu0 %4524, %v4034
    %v4526 = vpop.permute.xlu0 %4525
    %4528 = vset.pattern.permute.xlu0 1
    %4529 = vperm.xlu0 %4528, %v4035
    %v4530 = vpop.permute.xlu0 %4529
    %4532 = vset.pattern.permute.xlu0 1
    %4533 = vperm.xlu0 %4532, %v4036
    %v4534 = vpop.permute.xlu0 %4533
    %4536 = vset.pattern.permute.xlu0 1
    %4537 = vperm.xlu0 %4536, %v4037
    %v4538 = vpop.permute.xlu0 %4537
    %4540 = vset.pattern.permute.xlu0 1
    %4541 = vperm.xlu0 %4540, %v4038
    %v4542 = vpop.permute.xlu0 %4541
    %4544 = vset.pattern.permute.xlu0 1
    %4545 = vperm.xlu0 %4544, %v4039
    %v4546 = vpop.permute.xlu0 %4545
    %4548 = vset.pattern.permute.xlu0 1
    %4549 = vperm.xlu0 %4548, %v4040
    %v4550 = vpop.permute.xlu0 %4549
    %4552 = vset.pattern.permute.xlu0 1
    %4553 = vperm.xlu0 %4552, %v4041
    %v4554 = vpop.permute.xlu0 %4553
    %4556 = vset.pattern.permute.xlu0 1
    %4557 = vperm.xlu0 %4556, %v4042
    %v4558 = vpop.permute.xlu0 %4557
    %4560 = vset.pattern.permute.xlu0 1
    %4561 = vperm.xlu0 %4560, %v4043
    %v4562 = vpop.permute.xlu0 %4561
    %4564 = vset.pattern.permute.xlu0 1
    %4565 = vperm.xlu0 %4564, %v4044
    %v4566 = vpop.permute.xlu0 %4565
    %4568 = vset.pattern.permute.xlu0 1
    %4569 = vperm.xlu0 %4568, %v4045
    %v4570 = vpop.permute.xlu0 %4569
    %4572 = vset.pattern.permute.xlu0 1
    %4573 = vperm.xlu0 %4572, %v4046
    %v4574 = vpop.permute.xlu0 %4573
    %4576 = vset.pattern.permute.xlu0 1
    %4577 = vperm.xlu0 %4576, %v4047
    %v4578 = vpop.permute.xlu0 %4577
    %4580 = vset.pattern.permute.xlu0 1
    %4581 = vperm.xlu0 %4580, %v4048
    %v4582 = vpop.permute.xlu0 %4581
    %4584 = vset.pattern.permute.xlu0 1
    %4585 = vperm.xlu0 %4584, %v4049
    %v4586 = vpop.permute.xlu0 %4585
    %4588 = vset.pattern.permute.xlu0 1
    %4589 = vperm.xlu0 %4588, %v4050
    %v4590 = vpop.permute.xlu0 %4589
    %4592 = vset.pattern.permute.xlu0 1
    %4593 = vperm.xlu0 %4592, %v4051
    %v4594 = vpop.permute.xlu0 %4593
    %v4596 = vmul.f32 %v4052, %v4470
    %v4597 = vmul.f32 %v4053, %v4474
    %v4598 = vmul.f32 %v4054, %v4478
    %v4599 = vmul.f32 %v4055, %v4482
    %v4600 = vmul.f32 %v4056, %v4486
    %v4601 = vmul.f32 %v4057, %v4490
    %v4602 = vmul.f32 %v4058, %v4494
    %v4603 = vmul.f32 %v4059, %v4498
    %v4604 = vmul.f32 %v4060, %v4502
    %v4605 = vmul.f32 %v4061, %v4506
    %v4606 = vmul.f32 %v4062, %v4510
    %v4607 = vmul.f32 %v4063, %v4514
    %v4608 = vmul.f32 %v4064, %v4518
    %v4609 = vmul.f32 %v4065, %v4522
    %v4610 = vmul.f32 %v4066, %v4526
    %v4611 = vmul.f32 %v4067, %v4530
    %v4612 = vmul.f32 %v4068, %v4534
    %v4613 = vmul.f32 %v4069, %v4538
    %v4614 = vmul.f32 %v4070, %v4542
    %v4615 = vmul.f32 %v4071, %v4546
    %v4616 = vmul.f32 %v4072, %v4550
    %v4617 = vmul.f32 %v4073, %v4554
    %v4618 = vmul.f32 %v4074, %v4558
    %v4619 = vmul.f32 %v4075, %v4562
    %v4620 = vmul.f32 %v4076, %v4566
    %v4621 = vmul.f32 %v4077, %v4570
    %v4622 = vmul.f32 %v4078, %v4574
    %v4623 = vmul.f32 %v4079, %v4578
    %v4624 = vmul.f32 %v4080, %v4582
    %v4625 = vmul.f32 %v4081, %v4586
    %v4626 = vmul.f32 %v4082, %v4590
    %v4627 = vmul.f32 %v4083, %v4594
    %vm4628 = vcmp.gt.f32.partialorder %v4596, 0.0
    %vm4629 = vcmp.gt.f32.partialorder %v4597, 0.0
    %vm4630 = vcmp.gt.f32.partialorder %v4598, 0.0
    %vm4631 = vcmp.gt.f32.partialorder %v4599, 0.0
    %vm4632 = vcmp.gt.f32.partialorder %v4600, 0.0
    %vm4633 = vcmp.gt.f32.partialorder %v4601, 0.0
    %vm4634 = vcmp.gt.f32.partialorder %v4602, 0.0
    %vm4635 = vcmp.gt.f32.partialorder %v4603, 0.0
    %vm4636 = vcmp.gt.f32.partialorder %v4604, 0.0
    %vm4637 = vcmp.gt.f32.partialorder %v4605, 0.0
    %vm4638 = vcmp.gt.f32.partialorder %v4606, 0.0
    %vm4639 = vcmp.gt.f32.partialorder %v4607, 0.0
    %vm4640 = vcmp.gt.f32.partialorder %v4608, 0.0
    %vm4641 = vcmp.gt.f32.partialorder %v4609, 0.0
    %vm4642 = vcmp.gt.f32.partialorder %v4610, 0.0
    %vm4643 = vcmp.gt.f32.partialorder %v4611, 0.0
    %vm4644 = vcmp.gt.f32.partialorder %v4612, 0.0
    %vm4645 = vcmp.gt.f32.partialorder %v4613, 0.0
    %vm4646 = vcmp.gt.f32.partialorder %v4614, 0.0
    %vm4647 = vcmp.gt.f32.partialorder %v4615, 0.0
    %vm4648 = vcmp.gt.f32.partialorder %v4616, 0.0
    %vm4649 = vcmp.gt.f32.partialorder %v4617, 0.0
    %vm4650 = vcmp.gt.f32.partialorder %v4618, 0.0
    %vm4651 = vcmp.gt.f32.partialorder %v4619, 0.0
    %vm4652 = vcmp.gt.f32.partialorder %v4620, 0.0
    %vm4653 = vcmp.gt.f32.partialorder %v4621, 0.0
    %vm4654 = vcmp.gt.f32.partialorder %v4622, 0.0
    %vm4655 = vcmp.gt.f32.partialorder %v4623, 0.0
    %vm4656 = vcmp.gt.f32.partialorder %v4624, 0.0
    %vm4657 = vcmp.gt.f32.partialorder %v4625, 0.0
    %vm4658 = vcmp.gt.f32.partialorder %v4626, 0.0
    %vm4659 = vcmp.gt.f32.partialorder %v4627, 0.0
    %v4660 = vmin.f32 %v4596, 0.0
    %v4661 = vmin.f32 %v4597, 0.0
    %v4662 = vmin.f32 %v4598, 0.0
    %v4663 = vmin.f32 %v4599, 0.0
    %v4664 = vmin.f32 %v4600, 0.0
    %v4665 = vmin.f32 %v4601, 0.0
    %v4666 = vmin.f32 %v4602, 0.0
    %v4667 = vmin.f32 %v4603, 0.0
    %v4668 = vmin.f32 %v4604, 0.0
    %v4669 = vmin.f32 %v4605, 0.0
    %v4670 = vmin.f32 %v4606, 0.0
    %v4671 = vmin.f32 %v4607, 0.0
    %v4672 = vmin.f32 %v4608, 0.0
    %v4673 = vmin.f32 %v4609, 0.0
    %v4674 = vmin.f32 %v4610, 0.0
    %v4675 = vmin.f32 %v4611, 0.0
    %v4676 = vmin.f32 %v4612, 0.0
    %v4677 = vmin.f32 %v4613, 0.0
    %v4678 = vmin.f32 %v4614, 0.0
    %v4679 = vmin.f32 %v4615, 0.0
    %v4680 = vmin.f32 %v4616, 0.0
    %v4681 = vmin.f32 %v4617, 0.0
    %v4682 = vmin.f32 %v4618, 0.0
    %v4683 = vmin.f32 %v4619, 0.0
    %v4684 = vmin.f32 %v4620, 0.0
    %v4685 = vmin.f32 %v4621, 0.0
    %v4686 = vmin.f32 %v4622, 0.0
    %v4687 = vmin.f32 %v4623, 0.0
    %v4688 = vmin.f32 %v4624, 0.0
    %v4689 = vmin.f32 %v4625, 0.0
    %v4690 = vmin.f32 %v4626, 0.0
    %v4691 = vmin.f32 %v4627, 0.0
    %v4692 = vmul.f32 %v4660, 1.442695
    %v4693 = vpow.pop %v4692
    %v4694 = vmul.f32 %v4661, 1.442695
    %v4695 = vpow.pop %v4694
    %v4696 = vmul.f32 %v4662, 1.442695
    %v4697 = vpow.pop %v4696
    %v4698 = vmul.f32 %v4663, 1.442695
    %v4699 = vpow.pop %v4698
    %v4700 = vmul.f32 %v4664, 1.442695
    %v4701 = vpow.pop %v4700
    %v4702 = vmul.f32 %v4665, 1.442695
    %v4703 = vpow.pop %v4702
    %v4704 = vmul.f32 %v4666, 1.442695
    %v4705 = vpow.pop %v4704
    %v4706 = vmul.f32 %v4667, 1.442695
    %v4707 = vpow.pop %v4706
    %v4708 = vmul.f32 %v4668, 1.442695
    %v4709 = vpow.pop %v4708
    %v4710 = vmul.f32 %v4669, 1.442695
    %v4711 = vpow.pop %v4710
    %v4712 = vmul.f32 %v4670, 1.442695
    %v4713 = vpow.pop %v4712
    %v4714 = vmul.f32 %v4671, 1.442695
    %v4715 = vpow.pop %v4714
    %v4716 = vmul.f32 %v4672, 1.442695
    %v4717 = vpow.pop %v4716
    %v4718 = vmul.f32 %v4673, 1.442695
    %v4719 = vpow.pop %v4718
    %v4720 = vmul.f32 %v4674, 1.442695
    %v4721 = vpow.pop %v4720
    %v4722 = vmul.f32 %v4675, 1.442695
    %v4723 = vpow.pop %v4722
    %v4724 = vmul.f32 %v4676, 1.442695
    %v4725 = vpow.pop %v4724
    %v4726 = vmul.f32 %v4677, 1.442695
    %v4727 = vpow.pop %v4726
    %v4728 = vmul.f32 %v4678, 1.442695
    %v4729 = vpow.pop %v4728
    %v4730 = vmul.f32 %v4679, 1.442695
    %v4731 = vpow.pop %v4730
    %v4732 = vmul.f32 %v4680, 1.442695
    %v4733 = vpow.pop %v4732
    %v4734 = vmul.f32 %v4681, 1.442695
    %v4735 = vpow.pop %v4734
    %v4736 = vmul.f32 %v4682, 1.442695
    %v4737 = vpow.pop %v4736
    %v4738 = vmul.f32 %v4683, 1.442695
    %v4739 = vpow.pop %v4738
    %v4740 = vmul.f32 %v4684, 1.442695
    %v4741 = vpow.pop %v4740
    %v4742 = vmul.f32 %v4685, 1.442695
    %v4743 = vpow.pop %v4742
    %v4744 = vmul.f32 %v4686, 1.442695
    %v4745 = vpow.pop %v4744
    %v4746 = vmul.f32 %v4687, 1.442695
    %v4747 = vpow.pop %v4746
    %v4748 = vmul.f32 %v4688, 1.442695
    %v4749 = vpow.pop %v4748
    %v4750 = vmul.f32 %v4689, 1.442695
    %v4751 = vpow.pop %v4750
    %v4752 = vmul.f32 %v4690, 1.442695
    %v4753 = vpow.pop %v4752
    %v4754 = vmul.f32 %v4691, 1.442695
    %v4755 = vpow.pop %v4754
    %v4756 = vsub.f32 %v4693, 1.0
    %v4757 = vsub.f32 %v4695, 1.0
    %v4758 = vsub.f32 %v4697, 1.0
    %v4759 = vsub.f32 %v4699, 1.0
    %v4760 = vsub.f32 %v4701, 1.0
    %v4761 = vsub.f32 %v4703, 1.0
    %v4762 = vsub.f32 %v4705, 1.0
    %v4763 = vsub.f32 %v4707, 1.0
    %v4764 = vsub.f32 %v4709, 1.0
    %v4765 = vsub.f32 %v4711, 1.0
    %v4766 = vsub.f32 %v4713, 1.0
    %v4767 = vsub.f32 %v4715, 1.0
    %v4768 = vsub.f32 %v4717, 1.0
    %v4769 = vsub.f32 %v4719, 1.0
    %v4770 = vsub.f32 %v4721, 1.0
    %v4771 = vsub.f32 %v4723, 1.0
    %v4772 = vsub.f32 %v4725, 1.0
    %v4773 = vsub.f32 %v4727, 1.0
    %v4774 = vsub.f32 %v4729, 1.0
    %v4775 = vsub.f32 %v4731, 1.0
    %v4776 = vsub.f32 %v4733, 1.0
    %v4777 = vsub.f32 %v4735, 1.0
    %v4778 = vsub.f32 %v4737, 1.0
    %v4779 = vsub.f32 %v4739, 1.0
    %v4780 = vsub.f32 %v4741, 1.0
    %v4781 = vsub.f32 %v4743, 1.0
    %v4782 = vsub.f32 %v4745, 1.0
    %v4783 = vsub.f32 %v4747, 1.0
    %v4784 = vsub.f32 %v4749, 1.0
    %v4785 = vsub.f32 %v4751, 1.0
    %v4786 = vsub.f32 %v4753, 1.0
    %v4787 = vsub.f32 %v4755, 1.0
    %v4788 = vsel %vm4628, %v4596, %v4756
    %v4789 = vsel %vm4629, %v4597, %v4757
    %v4790 = vsel %vm4630, %v4598, %v4758
    %v4791 = vsel %vm4631, %v4599, %v4759
    %v4792 = vsel %vm4632, %v4600, %v4760
    %v4793 = vsel %vm4633, %v4601, %v4761
    %v4794 = vsel %vm4634, %v4602, %v4762
    %v4795 = vsel %vm4635, %v4603, %v4763
    %v4796 = vsel %vm4636, %v4604, %v4764
    %v4797 = vsel %vm4637, %v4605, %v4765
    %v4798 = vsel %vm4638, %v4606, %v4766
    %v4799 = vsel %vm4639, %v4607, %v4767
    %v4800 = vsel %vm4640, %v4608, %v4768
    %v4801 = vsel %vm4641, %v4609, %v4769
    %v4802 = vsel %vm4642, %v4610, %v4770
    %v4803 = vsel %vm4643, %v4611, %v4771
    %v4804 = vsel %vm4644, %v4612, %v4772
    %v4805 = vsel %vm4645, %v4613, %v4773
    %v4806 = vsel %vm4646, %v4614, %v4774
    %v4807 = vsel %vm4647, %v4615, %v4775
    %v4808 = vsel %vm4648, %v4616, %v4776
    %v4809 = vsel %vm4649, %v4617, %v4777
    %v4810 = vsel %vm4650, %v4618, %v4778
    %v4811 = vsel %vm4651, %v4619, %v4779
    %v4812 = vsel %vm4652, %v4620, %v4780
    %v4813 = vsel %vm4653, %v4621, %v4781
    %v4814 = vsel %vm4654, %v4622, %v4782
    %v4815 = vsel %vm4655, %v4623, %v4783
    %v4816 = vsel %vm4656, %v4624, %v4784
    %v4817 = vsel %vm4657, %v4625, %v4785
    %v4818 = vsel %vm4658, %v4626, %v4786
    %v4819 = vsel %vm4659, %v4627, %v4787
    %v4820 = vsel %vm1995, %v4436, %v4788
    %v4821 = vsel %vm1995, %v4437, %v4789
    %v4822 = vsel %vm1995, %v4438, %v4790
    %v4823 = vsel %vm1995, %v4439, %v4791
    %v4824 = vsel %vm1995, %v4440, %v4792
    %v4825 = vsel %vm1995, %v4441, %v4793
    %v4826 = vsel %vm1995, %v4442, %v4794
    %v4827 = vsel %vm1995, %v4443, %v4795
    %v4828 = vsel %vm1995, %v4444, %v4796
    %v4829 = vsel %vm1995, %v4445, %v4797
    %v4830 = vsel %vm1995, %v4446, %v4798
    %v4831 = vsel %vm1995, %v4447, %v4799
    %v4832 = vsel %vm1995, %v4448, %v4800
    %v4833 = vsel %vm1995, %v4449, %v4801
    %v4834 = vsel %vm1995, %v4450, %v4802
    %v4835 = vsel %vm1995, %v4451, %v4803
    %v4836 = vsel %vm1995, %v4452, %v4804
    %v4837 = vsel %vm1995, %v4453, %v4805
    %v4838 = vsel %vm1995, %v4454, %v4806
    %v4839 = vsel %vm1995, %v4455, %v4807
    %v4840 = vsel %vm1995, %v4456, %v4808
    %v4841 = vsel %vm1995, %v4457, %v4809
    %v4842 = vsel %vm1995, %v4458, %v4810
    %v4843 = vsel %vm1995, %v4459, %v4811
    %v4844 = vsel %vm1995, %v4460, %v4812
    %v4845 = vsel %vm1995, %v4461, %v4813
    %v4846 = vsel %vm1995, %v4462, %v4814
    %v4847 = vsel %vm1995, %v4463, %v4815
    %v4848 = vsel %vm1995, %v4464, %v4816
    %v4849 = vsel %vm1995, %v4465, %v4817
    %v4850 = vsel %vm1995, %v4466, %v4818
    %v4851 = vsel %vm1995, %v4467, %v4819
    %vm4852 = vcmask 523264
    %4853 = vst.msk [vmem:[%s3] sm:$0xff] %vm4852, %v4820
    %4854 = vst.msk [vmem:[%s3 + $0x8] sm:$0xff] %vm4852, %v4821
    %4855 = vst.msk [vmem:[%s3 + $0x10] sm:$0xff] %vm4852, %v4822
    %4856 = vst.msk [vmem:[%s3 + $0x18] sm:$0xff] %vm4852, %v4823
    %4857 = vst.msk [vmem:[%s3 + $0x20] sm:$0xff] %vm4852, %v4824
    %4858 = vst.msk [vmem:[%s3 + $0x28] sm:$0xff] %vm4852, %v4825
    %4859 = vst.msk [vmem:[%s3 + $0x30] sm:$0xff] %vm4852, %v4826
    %4860 = vst.msk [vmem:[%s3 + $0x38] sm:$0xff] %vm4852, %v4827
    %4861 = vst.msk [vmem:[%s3 + $0x40] sm:$0xff] %vm4852, %v4828
    %4862 = vst.msk [vmem:[%s3 + $0x48] sm:$0xff] %vm4852, %v4829
    %4863 = vst.msk [vmem:[%s3 + $0x50] sm:$0xff] %vm4852, %v4830
    %4864 = vst.msk [vmem:[%s3 + $0x58] sm:$0xff] %vm4852, %v4831
    %4865 = vst.msk [vmem:[%s3 + $0x60] sm:$0xff] %vm4852, %v4832
    %4866 = vst.msk [vmem:[%s3 + $0x68] sm:$0xff] %vm4852, %v4833
    %4867 = vst.msk [vmem:[%s3 + $0x70] sm:$0xff] %vm4852, %v4834
    %4868 = vst.msk [vmem:[%s3 + $0x78] sm:$0xff] %vm4852, %v4835
    %4869 = vst.msk [vmem:[%s3 + $0x80] sm:$0xff] %vm4852, %v4836
    %4870 = vst.msk [vmem:[%s3 + $0x88] sm:$0xff] %vm4852, %v4837
    %4871 = vst.msk [vmem:[%s3 + $0x90] sm:$0xff] %vm4852, %v4838
    %4872 = vst.msk [vmem:[%s3 + $0x98] sm:$0xff] %vm4852, %v4839
    %4873 = vst.msk [vmem:[%s3 + $0xa0] sm:$0xff] %vm4852, %v4840
    %4874 = vst.msk [vmem:[%s3 + $0xa8] sm:$0xff] %vm4852, %v4841
    %4875 = vst.msk [vmem:[%s3 + $0xb0] sm:$0xff] %vm4852, %v4842
    %4876 = vst.msk [vmem:[%s3 + $0xb8] sm:$0xff] %vm4852, %v4843
    %4877 = vst.msk [vmem:[%s3 + $0xc0] sm:$0xff] %vm4852, %v4844
    %4878 = vst.msk [vmem:[%s3 + $0xc8] sm:$0xff] %vm4852, %v4845
    %4879 = vst.msk [vmem:[%s3 + $0xd0] sm:$0xff] %vm4852, %v4846
    %4880 = vst.msk [vmem:[%s3 + $0xd8] sm:$0xff] %vm4852, %v4847
    %4881 = vst.msk [vmem:[%s3 + $0xe0] sm:$0xff] %vm4852, %v4848
    %4882 = vst.msk [vmem:[%s3 + $0xe8] sm:$0xff] %vm4852, %v4849
    %4883 = vst.msk [vmem:[%s3 + $0xf0] sm:$0xff] %vm4852, %v4850
    %4884 = vst.msk [vmem:[%s3 + $0xf8] sm:$0xff] %vm4852, %v4851
  $region21: #{tpu_custom_call.1} parent=0 // pred_fallthru
    _
  // Predicated region
  $region22: #{tpu_custom_call.1} parent=0 // pred_check
    _
  $region23: #{tpu_custom_call.1} parent=0 // pred_check_branch
    %4886 = sbr.rel (0) target = $region25
  $region24: #{tpu_custom_call.1} parent=0 // pred_region
    _
  $region25: #{tpu_custom_call.1} parent=0 // pred_fallthru
    _
  // Predicated region
  $region26: #{tpu_custom_call.1} parent=0 // pred_check
    _
  $region27: #{tpu_custom_call.1} parent=0 // pred_check_branch
    %4888 = sbr.rel (0) target = $region29
  $region28: #{tpu_custom_call.1} parent=0 // pred_region
    _
  $region29: #{tpu_custom_call.1} parent=0 // pred_fallthru
    _

</llo_original>
